<compile_context>
chip_gen: v7x
topology: tpu7x:2x2x1
jax: 0.10.0
libtpu: 0.0.40
codegen_flags: <defaults>
</compile_context>

<pallas_src>
import functools

import jax
import jax.numpy as jnp
from jax.experimental import pallas as pl
from jax.experimental.pallas import tpu as pltpu


def _convlstm_seq_kernel(H, W, Cin, hid,
                         tf_ref,                                   # scalar prefetch (SMEM)
                         x_ref, we_ref, be_ref, wc_ref, bc_ref,    # inputs
                         wd_ref, bd_ref,
                         y_ref,                                    # output
                         pad_buf, slab_ref, c_ref, yprev_ref):     # VMEM scratch
    HW = H * W
    C2 = 2 * hid
    t = pl.program_id(1)

    # ---- sequence reset (matches reset_states(): h = c = 0) -----------------
    # pad_buf holds [enc | h_prev] with a 1-pixel zero border; zeroing it here
    # both sets h_{-1}=0 and establishes the border, which is never written
    # again for the rest of the sequence.
    @pl.when(t == 0)
    def _():
        pad_buf[...] = jnp.zeros_like(pad_buf)
        c_ref[...] = jnp.zeros_like(c_ref)
        yprev_ref[...] = jnp.zeros_like(yprev_ref)

    # ---- pick encoder input: teacher forcing vs. closed loop ----------------
    # t == 0 always uses ground truth (the PyTorch reference is undefined for
    # teacher_forcing_steps == 0, so we guard the first step).
    use_x = jnp.logical_or(t == 0, t < tf_ref[0])
    inp_chw = jnp.where(use_x, x_ref[0, 0], yprev_ref[...])          # (Cin, HW) f32
    inp_hwc = jnp.transpose(inp_chw)                                  # (HW, Cin)

    # ---- encoder: 1x1 conv == channel matmul (bf16 operands, f32 acc) -------
    enc = jnp.dot(inp_hwc.astype(jnp.bfloat16), we_ref[...],
                  preferred_element_type=jnp.float32) + be_ref[...]   # (HW, hid) f32

    # enc -> first channel half of the padded cell input (second half = h_{t-1}).
    pad_buf[pl.ds(1, H), pl.ds(1, W), pl.ds(0, hid)] = enc.reshape(H, W, hid)

    # ---- ConvLSTM cell: 3x3 conv (stride 1, zero pad 1) via im2col ----------
    # Build the (H, W, 9*2*hid) patch slab (bf16), then ONE big matmul.
    for dy in range(3):
        for dx in range(3):
            tap = dy * 3 + dx
            slab_ref[:, :, pl.ds(tap * C2, C2)] = (
                pad_buf[pl.ds(dy, H), pl.ds(dx, W), :].astype(jnp.bfloat16))
    patches = slab_ref[...].reshape(HW, 9 * C2)                       # (HW, 9*2*hid) bf16
    gates = jnp.dot(patches, wc_ref[...],
                    preferred_element_type=jnp.float32) + bc_ref[...]  # (HW, 4*hid) f32

    # ---- gates: split order (netin, i, f, o) matches th.split(..., dim=1) ----
    act_in = jnp.tanh(gates[:, :hid])                  # one (HW, hid) tanh
    act_sig = jax.nn.sigmoid(gates[:, hid:])           # one (HW, 3*hid) sigmoid
    i_g = act_sig[:, :hid]
    f_g = act_sig[:, hid:2 * hid]
    o_g = act_sig[:, 2 * hid:]

    c_new = f_g * c_ref[...] + i_g * act_in            # f32 state update
    h_new = o_g * jnp.tanh(c_new)
    c_ref[...] = c_new
    # h_t -> second channel half of pad_buf for the next step's conv.
    pad_buf[pl.ds(1, H), pl.ds(1, W), pl.ds(hid, hid)] = h_new.reshape(H, W, hid)

    # ---- decoder: 1x1 conv == channel matmul, lane-dense (Cin, HW) store ----
    y_hwc = jnp.dot(h_new.astype(jnp.bfloat16), wd_ref[...],
                    preferred_element_type=jnp.float32) + bd_ref[...]  # (HW, Cin) f32
    y_chw = jnp.transpose(y_hwc)                                       # (Cin, HW)
    y_ref[0, 0] = y_chw.astype(y_ref.dtype)
    yprev_ref[...] = y_chw                              # feedback for t >= tf_steps


@functools.lru_cache(maxsize=None)
def make_convlstm_kernel(B, T, H, W, Cin, hid):
    HW = H * W
    C2 = 2 * hid

    def _const(shape):  # full, resident block (weights / biases)
        return pl.BlockSpec(shape, lambda b, t, tf: (0, 0))

    io_spec = pl.BlockSpec((1, 1, Cin, HW), lambda b, t, tf: (b, t, 0, 0))

    grid_spec = pltpu.PrefetchScalarGridSpec(
        num_scalar_prefetch=1,                 # teacher_forcing_steps (SMEM)
        grid=(B, T),                           # T innermost: sequential recurrence
        in_specs=[
            io_spec,                           # x        (B, T, Cin, H*W)  f32
            _const((Cin, hid)),                # encoder W  bf16
            _const((1, hid)),                  # encoder b  f32
            _const((9 * C2, 4 * hid)),         # cell conv W (im2col layout) bf16
            _const((1, 4 * hid)),              # cell conv b f32
            _const((hid, Cin)),                # decoder W  bf16
            _const((1, Cin)),                  # decoder b  f32
        ],
        out_specs=io_spec,                     # y        (B, T, Cin, H*W)  f32
        scratch_shapes=[
            pltpu.VMEM((H + 2, W + 2, C2), jnp.float32),   # padded [enc | h] buffer
            pltpu.VMEM((H, W, 9 * C2), jnp.bfloat16),      # im2col patch slab
            pltpu.VMEM((HW, hid), jnp.float32),            # c state
            pltpu.VMEM((Cin, HW), jnp.float32),            # previous decoder output
        ],
    )
    kernel = functools.partial(_convlstm_seq_kernel, H, W, Cin, hid)
    call = pl.pallas_call(
        kernel,
        out_shape=jax.ShapeDtypeStruct((B, T, Cin, HW), jnp.float32),
        grid_spec=grid_spec,
        compiler_params=pltpu.CompilerParams(
            dimension_semantics=("parallel", "arbitrary")),
    )
    return jax.jit(call)


def init_params(key, Cin, hid):
    # Deterministic synthetic init (PyTorch-style uniform fan-in scaling).
    ks = jax.random.split(key, 6)
    std_e = 1.0 / (Cin ** 0.5)
    std_c = 1.0 / ((2 * hid * 9) ** 0.5)
    std_d = 1.0 / (hid ** 0.5)
    return dict(
        # encoder Conv2d(Cin, hid, k=1):  torch weight (hid, Cin, 1, 1) -> (Cin, hid)
        we=jax.random.uniform(ks[0], (Cin, hid), jnp.float32, -std_e, std_e),
        be=jax.random.uniform(ks[1], (1, hid), jnp.float32, -std_e, std_e),
        # cell Conv2d(2h, 4h, k=3):       torch weight (4h, 2h, 3, 3) -> (3, 3, 2h, 4h)
        wc=jax.random.uniform(ks[2], (3, 3, 2 * hid, 4 * hid), jnp.float32, -std_c, std_c),
        bc=jax.random.uniform(ks[3], (1, 4 * hid), jnp.float32, -std_c, std_c),
        # decoder Conv2d(hid, Cin, k=1):  torch weight (Cin, hid, 1, 1) -> (hid, Cin)
        wd=jax.random.uniform(ks[4], (hid, Cin), jnp.float32, -std_d, std_d),
        bd=jax.random.uniform(ks[5], (1, Cin), jnp.float32, -std_d, std_d),
    )


def convlstm_forward(x, params, teacher_forcing_steps=80):
    """x: (B, T, Cin, H, W) NCHW (PyTorch layout). Returns (B, T, Cin, H, W)."""
    B, T, Cin, H, W = x.shape
    hid = params["we"].shape[1]
    step = make_convlstm_kernel(B, T, H, W, Cin, hid)

    tf = jnp.asarray([teacher_forcing_steps], dtype=jnp.int32)
    x_flat = x.reshape(B, T, Cin, H * W)                       # free reshape, no transpose
    # (dy, dx, cin) row-major flatten == im2col slab channel order.
    wc_flat = params["wc"].reshape(9 * 2 * hid, 4 * hid)

    y = step(tf, x_flat,
             params["we"].astype(jnp.bfloat16), params["be"],
             wc_flat.astype(jnp.bfloat16), params["bc"],
             params["wd"].astype(jnp.bfloat16), params["bd"])
    return y.reshape(B, T, Cin, H, W)


if __name__ == "__main__":
    key = jax.random.PRNGKey(0)
    kp, kx = jax.random.split(key)

    B, T, Cin, H, W, hid = 2, 8, 4, 16, 16, 32
    params = init_params(kp, Cin, hid)
    x = jax.random.normal(kx, (B, T, Cin, H, W), jnp.float32)

    # Teacher-forced (tf=80 > T): every step uses ground truth.
    out = jax.block_until_ready(convlstm_forward(x, params, teacher_forcing_steps=80))
    assert out.shape == (B, T, Cin, H, W), out.shape
    assert bool(jnp.all(jnp.isfinite(out)))

    # Exercise the closed-loop (autoregressive feedback) branch as well.
    out2 = jax.block_until_ready(convlstm_forward(x, params, teacher_forcing_steps=3))
    assert out2.shape == (B, T, Cin, H, W), out2.shape
    assert bool(jnp.all(jnp.isfinite(out2)))

    print("KERNEL_OK")
</pallas_src>

<mosaic_0001>
module attributes {stable_mosaic.version = 11 : i64} {
  func.func @_convlstm_seq_kernel(%arg0: i32, %arg1: i32, %arg2: memref<1xi32, #tpu.memory_space<smem>>, %arg3: memref<1x1x4x256xf32, #tpu.memory_space<vmem>>, %arg4: memref<4x32xbf16, #tpu.memory_space<vmem>>, %arg5: memref<1x32xf32, #tpu.memory_space<vmem>>, %arg6: memref<576x128xbf16, #tpu.memory_space<vmem>>, %arg7: memref<1x128xf32, #tpu.memory_space<vmem>>, %arg8: memref<32x4xbf16, #tpu.memory_space<vmem>>, %arg9: memref<1x4xf32, #tpu.memory_space<vmem>>, %arg10: memref<1x1x4x256xf32, #tpu.memory_space<vmem>>, %arg11: memref<18x18x64xf32, #tpu.memory_space<vmem>>, %arg12: memref<16x16x576xbf16, #tpu.memory_space<vmem>>, %arg13: memref<256x32xf32, #tpu.memory_space<vmem>>, %arg14: memref<4x256xf32, #tpu.memory_space<vmem>>) attributes {dimension_semantics = [#tpu.dimension_semantics<parallel>, #tpu.dimension_semantics<arbitrary>], iteration_bounds = array<i64: 2, 8>, scalar_prefetch = 1 : i64, scratch_operands = 4 : i64, tpu.core_type = #tpu.core_type<tc>, window_params = [{transform_indices = @transform_0, window_bounds = array<i64: 1, 1, 4, 256>}, {pipeline_mode = #tpu.pipeline_mode<synchronous>, transform_indices = @transform_1, window_bounds = array<i64: 4, 32>}, {pipeline_mode = #tpu.pipeline_mode<synchronous>, transform_indices = @transform_2, window_bounds = array<i64: 1, 32>}, {pipeline_mode = #tpu.pipeline_mode<synchronous>, transform_indices = @transform_3, window_bounds = array<i64: 576, 128>}, {pipeline_mode = #tpu.pipeline_mode<synchronous>, transform_indices = @transform_4, window_bounds = array<i64: 1, 128>}, {pipeline_mode = #tpu.pipeline_mode<synchronous>, transform_indices = @transform_5, window_bounds = array<i64: 32, 4>}, {pipeline_mode = #tpu.pipeline_mode<synchronous>, transform_indices = @transform_6, window_bounds = array<i64: 1, 4>}, {transform_indices = @transform_7, window_bounds = array<i64: 1, 1, 4, 256>}]} {
    %c0_i32 = arith.constant 0 : i32
    %0 = arith.cmpi eq, %arg1, %c0_i32 : i32
    %1 = arith.extui %0 : i1 to i32
    %c0_i32_0 = arith.constant 0 : i32
    %2 = arith.cmpi ne, %1, %c0_i32_0 : i32
    scf.if %2 {
      %cst_85 = arith.constant 0.000000e+00 : f32
      %85 = vector.broadcast %cst_85 : f32 to vector<18x18x64xf32>
      %c0_86 = arith.constant 0 : index
      %c0_87 = arith.constant 0 : index
      %c0_88 = arith.constant 0 : index
      %86 = vector.load %arg11[%c0_86, %c0_87, %c0_88] : memref<18x18x64xf32, #tpu.memory_space<vmem>>, vector<18x18x64xf32>
      tpu.vector_store %arg11[%c0_86, %c0_87, %c0_88], %85 {strides = array<i32>} : memref<18x18x64xf32, #tpu.memory_space<vmem>>, vector<18x18x64xf32>,
      %cst_89 = arith.constant 0.000000e+00 : f32
      %87 = vector.broadcast %cst_89 : f32 to vector<256x32xf32>
      %c0_90 = arith.constant 0 : index
      %c0_91 = arith.constant 0 : index
      %88 = vector.load %arg13[%c0_90, %c0_91] : memref<256x32xf32, #tpu.memory_space<vmem>>, vector<256x32xf32>
      tpu.vector_store %arg13[%c0_90, %c0_91], %87 {strides = array<i32>} : memref<256x32xf32, #tpu.memory_space<vmem>>, vector<256x32xf32>,
      %cst_92 = arith.constant 0.000000e+00 : f32
      %89 = vector.broadcast %cst_92 : f32 to vector<4x256xf32>
      %c0_93 = arith.constant 0 : index
      %c0_94 = arith.constant 0 : index
      %90 = vector.load %arg14[%c0_93, %c0_94] : memref<4x256xf32, #tpu.memory_space<vmem>>, vector<4x256xf32>
      tpu.vector_store %arg14[%c0_93, %c0_94], %89 {strides = array<i32>} : memref<4x256xf32, #tpu.memory_space<vmem>>, vector<4x256xf32>,
    } else {
    }
    %c0_i32_1 = arith.constant 0 : i32
    %3 = arith.cmpi eq, %arg1, %c0_i32_1 : i32
    %c0 = arith.constant 0 : index
    %4 = memref.load %arg2[%c0] : memref<1xi32, #tpu.memory_space<smem>>
    %5 = arith.cmpi slt, %arg1, %4 : i32
    %6 = arith.ori %3, %5 : i1
    %c0_2 = arith.constant 0 : index
    %c0_3 = arith.constant 0 : index
    %c0_4 = arith.constant 0 : index
    %c0_5 = arith.constant 0 : index
    %7 = vector.load %arg3[%c0_2, %c0_3, %c0_4, %c0_5] : memref<1x1x4x256xf32, #tpu.memory_space<vmem>>, vector<1x1x4x256xf32>
    %8 = vector.shape_cast %7 : vector<1x1x4x256xf32> to vector<4x256xf32>
    %c0_6 = arith.constant 0 : index
    %c0_7 = arith.constant 0 : index
    %9 = vector.load %arg14[%c0_6, %c0_7] : memref<4x256xf32, #tpu.memory_space<vmem>>, vector<4x256xf32>
    %10 = arith.select %6, %8, %9 : vector<4x256xf32>
    %11 = tpu.transpose %10, [1, 0] : vector<4x256xf32> -> vector<256x4xf32>
    %12 = arith.truncf %11 : vector<256x4xf32> to vector<256x4xbf16>
    %c0_8 = arith.constant 0 : index
    %c0_9 = arith.constant 0 : index
    %13 = vector.load %arg4[%c0_8, %c0_9] : memref<4x32xbf16, #tpu.memory_space<vmem>>, vector<4x32xbf16>
    %cst = arith.constant dense<0.000000e+00> : vector<256x32xf32>
    %14 = tpu.matmul %12, %13, %cst {dimension_numbers = #tpu.dot_dimension_numbers<[1], [0], [0], [1], [0, 0, 1, 1], [], []>} : vector<256x4xbf16>, vector<4x32xbf16>, vector<256x32xf32> -> vector<256x32xf32>
    %c0_10 = arith.constant 0 : index
    %c0_11 = arith.constant 0 : index
    %15 = vector.load %arg5[%c0_10, %c0_11] : memref<1x32xf32, #tpu.memory_space<vmem>>, vector<1x32xf32>
    %16 = vector.broadcast %15 : vector<1x32xf32> to vector<256x32xf32>
    %17 = arith.addf %14, %16 : vector<256x32xf32>
    %18 = vector.shape_cast %17 : vector<256x32xf32> to vector<16x16x32xf32>
    %c1 = arith.constant 1 : index
    %c1_12 = arith.constant 1 : index
    %c0_13 = arith.constant 0 : index
    %19 = vector.load %arg11[%c1, %c1_12, %c0_13] : memref<18x18x64xf32, #tpu.memory_space<vmem>>, vector<16x16x32xf32>
    tpu.vector_store %arg11[%c1, %c1_12, %c0_13], %18 {strides = array<i32>} : memref<18x18x64xf32, #tpu.memory_space<vmem>>, vector<16x16x32xf32>,
    %c0_14 = arith.constant 0 : index
    %c0_15 = arith.constant 0 : index
    %c0_16 = arith.constant 0 : index
    %20 = vector.load %arg11[%c0_14, %c0_15, %c0_16] : memref<18x18x64xf32, #tpu.memory_space<vmem>>, vector<16x16x64xf32>
    %21 = arith.truncf %20 : vector<16x16x64xf32> to vector<16x16x64xbf16>
    %c0_17 = arith.constant 0 : index
    %c0_18 = arith.constant 0 : index
    %c0_19 = arith.constant 0 : index
    %22 = vector.load %arg12[%c0_17, %c0_18, %c0_19] : memref<16x16x576xbf16, #tpu.memory_space<vmem>>, vector<16x16x64xbf16>
    tpu.vector_store %arg12[%c0_17, %c0_18, %c0_19], %21 {strides = array<i32>} : memref<16x16x576xbf16, #tpu.memory_space<vmem>>, vector<16x16x64xbf16>,
    %c0_20 = arith.constant 0 : index
    %c1_21 = arith.constant 1 : index
    %c0_22 = arith.constant 0 : index
    %23 = vector.load %arg11[%c0_20, %c1_21, %c0_22] : memref<18x18x64xf32, #tpu.memory_space<vmem>>, vector<16x16x64xf32>
    %24 = arith.truncf %23 : vector<16x16x64xf32> to vector<16x16x64xbf16>
    %c0_23 = arith.constant 0 : index
    %c0_24 = arith.constant 0 : index
    %c64 = arith.constant 64 : index
    %25 = vector.load %arg12[%c0_23, %c0_24, %c64] : memref<16x16x576xbf16, #tpu.memory_space<vmem>>, vector<16x16x64xbf16>
    tpu.vector_store %arg12[%c0_23, %c0_24, %c64], %24 {strides = array<i32>} : memref<16x16x576xbf16, #tpu.memory_space<vmem>>, vector<16x16x64xbf16>,
    %c0_25 = arith.constant 0 : index
    %c2 = arith.constant 2 : index
    %c0_26 = arith.constant 0 : index
    %26 = vector.load %arg11[%c0_25, %c2, %c0_26] : memref<18x18x64xf32, #tpu.memory_space<vmem>>, vector<16x16x64xf32>
    %27 = arith.truncf %26 : vector<16x16x64xf32> to vector<16x16x64xbf16>
    %c0_27 = arith.constant 0 : index
    %c0_28 = arith.constant 0 : index
    %c128 = arith.constant 128 : index
    %28 = vector.load %arg12[%c0_27, %c0_28, %c128] : memref<16x16x576xbf16, #tpu.memory_space<vmem>>, vector<16x16x64xbf16>
    tpu.vector_store %arg12[%c0_27, %c0_28, %c128], %27 {strides = array<i32>} : memref<16x16x576xbf16, #tpu.memory_space<vmem>>, vector<16x16x64xbf16>,
    %c1_29 = arith.constant 1 : index
    %c0_30 = arith.constant 0 : index
    %c0_31 = arith.constant 0 : index
    %29 = vector.load %arg11[%c1_29, %c0_30, %c0_31] : memref<18x18x64xf32, #tpu.memory_space<vmem>>, vector<16x16x64xf32>
    %30 = arith.truncf %29 : vector<16x16x64xf32> to vector<16x16x64xbf16>
    %c0_32 = arith.constant 0 : index
    %c0_33 = arith.constant 0 : index
    %c192 = arith.constant 192 : index
    %31 = vector.load %arg12[%c0_32, %c0_33, %c192] : memref<16x16x576xbf16, #tpu.memory_space<vmem>>, vector<16x16x64xbf16>
    tpu.vector_store %arg12[%c0_32, %c0_33, %c192], %30 {strides = array<i32>} : memref<16x16x576xbf16, #tpu.memory_space<vmem>>, vector<16x16x64xbf16>,
    %c1_34 = arith.constant 1 : index
    %c1_35 = arith.constant 1 : index
    %c0_36 = arith.constant 0 : index
    %32 = vector.load %arg11[%c1_34, %c1_35, %c0_36] : memref<18x18x64xf32, #tpu.memory_space<vmem>>, vector<16x16x64xf32>
    %33 = arith.truncf %32 : vector<16x16x64xf32> to vector<16x16x64xbf16>
    %c0_37 = arith.constant 0 : index
    %c0_38 = arith.constant 0 : index
    %c256 = arith.constant 256 : index
    %34 = vector.load %arg12[%c0_37, %c0_38, %c256] : memref<16x16x576xbf16, #tpu.memory_space<vmem>>, vector<16x16x64xbf16>
    tpu.vector_store %arg12[%c0_37, %c0_38, %c256], %33 {strides = array<i32>} : memref<16x16x576xbf16, #tpu.memory_space<vmem>>, vector<16x16x64xbf16>,
    %c1_39 = arith.constant 1 : index
    %c2_40 = arith.constant 2 : index
    %c0_41 = arith.constant 0 : index
    %35 = vector.load %arg11[%c1_39, %c2_40, %c0_41] : memref<18x18x64xf32, #tpu.memory_space<vmem>>, vector<16x16x64xf32>
    %36 = arith.truncf %35 : vector<16x16x64xf32> to vector<16x16x64xbf16>
    %c0_42 = arith.constant 0 : index
    %c0_43 = arith.constant 0 : index
    %c320 = arith.constant 320 : index
    %37 = vector.load %arg12[%c0_42, %c0_43, %c320] : memref<16x16x576xbf16, #tpu.memory_space<vmem>>, vector<16x16x64xbf16>
    tpu.vector_store %arg12[%c0_42, %c0_43, %c320], %36 {strides = array<i32>} : memref<16x16x576xbf16, #tpu.memory_space<vmem>>, vector<16x16x64xbf16>,
    %c2_44 = arith.constant 2 : index
    %c0_45 = arith.constant 0 : index
    %c0_46 = arith.constant 0 : index
    %38 = vector.load %arg11[%c2_44, %c0_45, %c0_46] : memref<18x18x64xf32, #tpu.memory_space<vmem>>, vector<16x16x64xf32>
    %39 = arith.truncf %38 : vector<16x16x64xf32> to vector<16x16x64xbf16>
    %c0_47 = arith.constant 0 : index
    %c0_48 = arith.constant 0 : index
    %c384 = arith.constant 384 : index
    %40 = vector.load %arg12[%c0_47, %c0_48, %c384] : memref<16x16x576xbf16, #tpu.memory_space<vmem>>, vector<16x16x64xbf16>
    tpu.vector_store %arg12[%c0_47, %c0_48, %c384], %39 {strides = array<i32>} : memref<16x16x576xbf16, #tpu.memory_space<vmem>>, vector<16x16x64xbf16>,
    %c2_49 = arith.constant 2 : index
    %c1_50 = arith.constant 1 : index
    %c0_51 = arith.constant 0 : index
    %41 = vector.load %arg11[%c2_49, %c1_50, %c0_51] : memref<18x18x64xf32, #tpu.memory_space<vmem>>, vector<16x16x64xf32>
    %42 = arith.truncf %41 : vector<16x16x64xf32> to vector<16x16x64xbf16>
    %c0_52 = arith.constant 0 : index
    %c0_53 = arith.constant 0 : index
    %c448 = arith.constant 448 : index
    %43 = vector.load %arg12[%c0_52, %c0_53, %c448] : memref<16x16x576xbf16, #tpu.memory_space<vmem>>, vector<16x16x64xbf16>
    tpu.vector_store %arg12[%c0_52, %c0_53, %c448], %42 {strides = array<i32>} : memref<16x16x576xbf16, #tpu.memory_space<vmem>>, vector<16x16x64xbf16>,
    %c2_54 = arith.constant 2 : index
    %c2_55 = arith.constant 2 : index
    %c0_56 = arith.constant 0 : index
    %44 = vector.load %arg11[%c2_54, %c2_55, %c0_56] : memref<18x18x64xf32, #tpu.memory_space<vmem>>, vector<16x16x64xf32>
    %45 = arith.truncf %44 : vector<16x16x64xf32> to vector<16x16x64xbf16>
    %c0_57 = arith.constant 0 : index
    %c0_58 = arith.constant 0 : index
    %c512 = arith.constant 512 : index
    %46 = vector.load %arg12[%c0_57, %c0_58, %c512] : memref<16x16x576xbf16, #tpu.memory_space<vmem>>, vector<16x16x64xbf16>
    tpu.vector_store %arg12[%c0_57, %c0_58, %c512], %45 {strides = array<i32>} : memref<16x16x576xbf16, #tpu.memory_space<vmem>>, vector<16x16x64xbf16>,
    %c0_59 = arith.constant 0 : index
    %c0_60 = arith.constant 0 : index
    %c0_61 = arith.constant 0 : index
    %47 = vector.load %arg12[%c0_59, %c0_60, %c0_61] : memref<16x16x576xbf16, #tpu.memory_space<vmem>>, vector<16x16x576xbf16>
    %48 = vector.shape_cast %47 : vector<16x16x576xbf16> to vector<256x576xbf16>
    %c0_62 = arith.constant 0 : index
    %c0_63 = arith.constant 0 : index
    %49 = vector.load %arg6[%c0_62, %c0_63] : memref<576x128xbf16, #tpu.memory_space<vmem>>, vector<576x128xbf16>
    %cst_64 = arith.constant dense<0.000000e+00> : vector<256x128xf32>
    %50 = tpu.matmul %48, %49, %cst_64 {dimension_numbers = #tpu.dot_dimension_numbers<[1], [0], [0], [1], [0, 0, 1, 1], [], []>} : vector<256x576xbf16>, vector<576x128xbf16>, vector<256x128xf32> -> vector<256x128xf32>
    %c0_65 = arith.constant 0 : index
    %c0_66 = arith.constant 0 : index
    %51 = vector.load %arg7[%c0_65, %c0_66] : memref<1x128xf32, #tpu.memory_space<vmem>>, vector<1x128xf32>
    %52 = vector.broadcast %51 : vector<1x128xf32> to vector<256x128xf32>
    %53 = arith.addf %50, %52 : vector<256x128xf32>
    %54 = vector.extract_strided_slice %53 {offsets = [0, 0], sizes = [256, 32], strides = [1, 1]} : vector<256x128xf32> to vector<256x32xf32>
    %55 = math.tanh %54 : vector<256x32xf32>
    %56 = vector.extract_strided_slice %53 {offsets = [0, 32], sizes = [256, 96], strides = [1, 1]} : vector<256x128xf32> to vector<256x96xf32>
    %57 = arith.negf %56 : vector<256x96xf32>
    %58 = math.exp %57 : vector<256x96xf32>
    %cst_67 = arith.constant 1.000000e+00 : f32
    %59 = vector.broadcast %cst_67 : f32 to vector<256x96xf32>
    %60 = arith.addf %59, %58 : vector<256x96xf32>
    %61 = arith.divf %59, %60 : vector<256x96xf32>
    %62 = vector.extract_strided_slice %61 {offsets = [0, 0], sizes = [256, 32], strides = [1, 1]} : vector<256x96xf32> to vector<256x32xf32>
    %63 = vector.extract_strided_slice %61 {offsets = [0, 32], sizes = [256, 32], strides = [1, 1]} : vector<256x96xf32> to vector<256x32xf32>
    %64 = vector.extract_strided_slice %61 {offsets = [0, 64], sizes = [256, 32], strides = [1, 1]} : vector<256x96xf32> to vector<256x32xf32>
    %c0_68 = arith.constant 0 : index
    %c0_69 = arith.constant 0 : index
    %65 = vector.load %arg13[%c0_68, %c0_69] : memref<256x32xf32, #tpu.memory_space<vmem>>, vector<256x32xf32>
    %66 = arith.mulf %63, %65 : vector<256x32xf32>
    %67 = arith.mulf %62, %55 : vector<256x32xf32>
    %68 = arith.addf %66, %67 : vector<256x32xf32>
    %69 = math.tanh %68 : vector<256x32xf32>
    %70 = arith.mulf %64, %69 : vector<256x32xf32>
    %c0_70 = arith.constant 0 : index
    %c0_71 = arith.constant 0 : index
    %71 = vector.load %arg13[%c0_70, %c0_71] : memref<256x32xf32, #tpu.memory_space<vmem>>, vector<256x32xf32>
    tpu.vector_store %arg13[%c0_70, %c0_71], %68 {strides = array<i32>} : memref<256x32xf32, #tpu.memory_space<vmem>>, vector<256x32xf32>,
    %72 = vector.shape_cast %70 : vector<256x32xf32> to vector<16x16x32xf32>
    %c1_72 = arith.constant 1 : index
    %c1_73 = arith.constant 1 : index
    %c32 = arith.constant 32 : index
    %73 = vector.load %arg11[%c1_72, %c1_73, %c32] : memref<18x18x64xf32, #tpu.memory_space<vmem>>, vector<16x16x32xf32>
    tpu.vector_store %arg11[%c1_72, %c1_73, %c32], %72 {strides = array<i32>} : memref<18x18x64xf32, #tpu.memory_space<vmem>>, vector<16x16x32xf32>,
    %74 = arith.truncf %70 : vector<256x32xf32> to vector<256x32xbf16>
    %c0_74 = arith.constant 0 : index
    %c0_75 = arith.constant 0 : index
    %75 = vector.load %arg8[%c0_74, %c0_75] : memref<32x4xbf16, #tpu.memory_space<vmem>>, vector<32x4xbf16>
    %cst_76 = arith.constant dense<0.000000e+00> : vector<256x4xf32>
    %76 = tpu.matmul %74, %75, %cst_76 {dimension_numbers = #tpu.dot_dimension_numbers<[1], [0], [0], [1], [0, 0, 1, 1], [], []>} : vector<256x32xbf16>, vector<32x4xbf16>, vector<256x4xf32> -> vector<256x4xf32>
    %c0_77 = arith.constant 0 : index
    %c0_78 = arith.constant 0 : index
    %77 = vector.load %arg9[%c0_77, %c0_78] : memref<1x4xf32, #tpu.memory_space<vmem>>, vector<1x4xf32>
    %78 = vector.broadcast %77 : vector<1x4xf32> to vector<256x4xf32>
    %79 = arith.addf %76, %78 : vector<256x4xf32>
    %80 = tpu.transpose %79, [1, 0] : vector<256x4xf32> -> vector<4x256xf32>
    %c0_79 = arith.constant 0 : index
    %c0_80 = arith.constant 0 : index
    %c0_81 = arith.constant 0 : index
    %c0_82 = arith.constant 0 : index
    %81 = vector.load %arg10[%c0_79, %c0_80, %c0_81, %c0_82] : memref<1x1x4x256xf32, #tpu.memory_space<vmem>>, vector<1x1x4x256xf32>
    %82 = vector.shape_cast %81 : vector<1x1x4x256xf32> to vector<4x256xf32>
    %83 = vector.shape_cast %80 : vector<4x256xf32> to vector<1x1x4x256xf32>
    tpu.vector_store %arg10[%c0_79, %c0_80, %c0_81, %c0_82], %83 {strides = array<i32>} : memref<1x1x4x256xf32, #tpu.memory_space<vmem>>, vector<1x1x4x256xf32>,
    %c0_83 = arith.constant 0 : index
    %c0_84 = arith.constant 0 : index
    %84 = vector.load %arg14[%c0_83, %c0_84] : memref<4x256xf32, #tpu.memory_space<vmem>>, vector<4x256xf32>
    tpu.vector_store %arg14[%c0_83, %c0_84], %80 {strides = array<i32>} : memref<4x256xf32, #tpu.memory_space<vmem>>, vector<4x256xf32>,
    return
  }
  func.func @transform_0(%arg0: i32, %arg1: i32, %arg2: memref<1xi32, #tpu.memory_space<smem>>) -> (i32, i32, i32, i32) {
    %c0_i32 = arith.constant 0 : i32
    %c0_i32_0 = arith.constant 0 : i32
    %c0_i32_1 = arith.constant 0 : i32
    return %arg0, %arg1, %c0_i32, %c0_i32_0 : i32, i32, i32, i32
  }
  func.func @transform_1(%arg0: i32, %arg1: i32, %arg2: memref<1xi32, #tpu.memory_space<smem>>) -> (i32, i32) {
    %c0_i32 = arith.constant 0 : i32
    %c0_i32_0 = arith.constant 0 : i32
    %c0_i32_1 = arith.constant 0 : i32
    return %c0_i32, %c0_i32_0 : i32, i32
  }
  func.func @transform_2(%arg0: i32, %arg1: i32, %arg2: memref<1xi32, #tpu.memory_space<smem>>) -> (i32, i32) {
    %c0_i32 = arith.constant 0 : i32
    %c0_i32_0 = arith.constant 0 : i32
    %c0_i32_1 = arith.constant 0 : i32
    return %c0_i32, %c0_i32_0 : i32, i32
  }
  func.func @transform_3(%arg0: i32, %arg1: i32, %arg2: memref<1xi32, #tpu.memory_space<smem>>) -> (i32, i32) {
    %c0_i32 = arith.constant 0 : i32
    %c0_i32_0 = arith.constant 0 : i32
    %c0_i32_1 = arith.constant 0 : i32
    return %c0_i32, %c0_i32_0 : i32, i32
  }
  func.func @transform_4(%arg0: i32, %arg1: i32, %arg2: memref<1xi32, #tpu.memory_space<smem>>) -> (i32, i32) {
    %c0_i32 = arith.constant 0 : i32
    %c0_i32_0 = arith.constant 0 : i32
    %c0_i32_1 = arith.constant 0 : i32
    return %c0_i32, %c0_i32_0 : i32, i32
  }
  func.func @transform_5(%arg0: i32, %arg1: i32, %arg2: memref<1xi32, #tpu.memory_space<smem>>) -> (i32, i32) {
    %c0_i32 = arith.constant 0 : i32
    %c0_i32_0 = arith.constant 0 : i32
    %c0_i32_1 = arith.constant 0 : i32
    return %c0_i32, %c0_i32_0 : i32, i32
  }
  func.func @transform_6(%arg0: i32, %arg1: i32, %arg2: memref<1xi32, #tpu.memory_space<smem>>) -> (i32, i32) {
    %c0_i32 = arith.constant 0 : i32
    %c0_i32_0 = arith.constant 0 : i32
    %c0_i32_1 = arith.constant 0 : i32
    return %c0_i32, %c0_i32_0 : i32, i32
  }
  func.func @transform_7(%arg0: i32, %arg1: i32, %arg2: memref<1xi32, #tpu.memory_space<smem>>) -> (i32, i32, i32, i32) {
    %c0_i32 = arith.constant 0 : i32
    %c0_i32_0 = arith.constant 0 : i32
    %c0_i32_1 = arith.constant 0 : i32
    return %arg0, %arg1, %c0_i32, %c0_i32_0 : i32, i32, i32, i32
  }
}

</mosaic_0001>

<llo_original>
// kernel: tpu_custom_call.1
$region0: #{tpu_custom_call.1}
  #allocation0 [shape = 'u32[]', space=smem, size = 0x4, offset = 0x4, fixed_abs, tag = 'smem constant byte address 0x4 - core index']
  #allocation1 [shape = 'u32[144,128]{1,0:T(1,128)}', space=vmem, size = 0x12000, scoped, tag = 'internal scratch']
  #allocation2 [shape = 'f32[18,18,64]{2,1,0:T(8,128)}', space=vmem, size = 0x36000, scoped, tag = 'scratch operand']
  #allocation3 [shape = 'bf16[16,16,576]{2,1,0:T(16,128)(2,1)}', space=vmem, size = 0x50000, scoped, tag = 'scratch operand']
  #allocation4 [shape = 'f32[256,32]{1,0:T(8,128)}', space=vmem, size = 0x20000, scoped, tag = 'scratch operand']
  #allocation5 [shape = 'f32[4,256]{1,0:T(4,128)}', space=vmem, size = 0x1000, scoped, tag = 'scratch operand']
  #allocation6 [shape = 's32[1]{0}', space=sflag, size = 0x4, scoped, tag = 'scoped memory for tpu_custom_call.1']
  #allocation7 [shape = 's32[1]{0:T(128)S(6)}', space=smem, size = 0x200, scoped, tag = 'prefetched SMEM operand 0']
  %s0 = inlined_call_operand.<no memory space> [shape: s32[1], index: 0, kind: input, shape index: {}]
  %s1 = inlined_call_operand.hbm [shape: f32[2,8,4,256], index: 1, kind: input, shape index: {}]
  %s2 = inlined_call_operand.vmem [shape: bf16[4,32], index: 2, kind: input, shape index: {}]
  %s3 = inlined_call_operand.vmem [shape: f32[1,32], index: 3, kind: input, shape index: {}]
  %s4 = inlined_call_operand.hbm [shape: bf16[576,128], index: 4, kind: input, shape index: {}]
  %s5 = inlined_call_operand.vmem [shape: f32[1,128], index: 5, kind: input, shape index: {}]
  %s6 = inlined_call_operand.vmem [shape: bf16[32,4], index: 6, kind: input, shape index: {}]
  %s7 = inlined_call_operand.vmem [shape: f32[1,4], index: 7, kind: input, shape index: {}]
  %s8 = inlined_call_operand.hbm [shape: f32[2,8,4,256], index: 8, kind: output, shape index: {}]
  %s9 = sld [smem:[#allocation0]]
  $region73: #{tpu_custom_call.1} parent=0
    _
  %s11 = ssub.s32 1, %s9
  %s12 = scalar_select 0, %s11, %s9
  %13 = sst [smem:[#allocation7]] %s0
  $region1: #{tpu_custom_call.1} parent=0
    #allocation8 [shape = 'u8[8192]{0}', space=vmem, size = 0x2000, scoped, tag = 'input window, operand 1']
    #allocation9 [shape = 's32[2]{0}', space=sflag, size = 0x8, scoped, tag = 'scoped memory for tpu_custom_call.1']
    #allocation10 [shape = 's32[2]{0}', space=sflag, size = 0x8, scoped, tag = 'scoped memory for tpu_custom_call.1']
    #allocation11 [shape = 'u8[147456]{0}', space=vmem, size = 0x24000, scoped, tag = 'input window, operand 4, single buffered']
    #allocation12 [shape = 's32[1]{0}', space=sflag, size = 0x4, scoped, tag = 'scoped memory for tpu_custom_call.1']
    #allocation13 [shape = 'u8[8192]{0}', space=vmem, size = 0x2000, scoped, tag = 'output window, operand 0']
    %14 = vsyncpa [#allocation9], 0
    %s15 = scalar_lea.sflag [#allocation9], 1
    %16 = vsyncpa %s15, 0
    %17 = vsyncpa [#allocation12], 0
    %18 = vsyncpa [#allocation10], 0
    %s19 = scalar_lea.sflag [#allocation10], 1
    %20 = vsyncpa %s19, 0
    loop: start=0, step=1, limit=18
    $region2: #{tpu_custom_call.1} parent=1 // loop_pre_header
      _
    $region3: #{tpu_custom_call.1} parent=1 // loop_header
      %s22 = sphi 0, %s26
      %p23 = scmp.ge.s32.totalorder %s22, 18
      %s29 = sphi 0, %s41
      %s30 = sphi 0, %s37
      %s31 = sphi 0, %s29
      %s32 = sphi 0, %s30
      %s33 = sphi 0, %s31
      %s34 = sphi 0, %s32
      %s46 = sphi 0, %s48
      %s49 = sphi 0, %s46
      %s50 = sphi 0, %s49
      %s66 = sphi 0, %s50
      %s70 = sphi 0, %s70
      %s72 = sphi 0, %s70
      %s73 = sphi 0, %s72
      %s87 = sphi 0, %s73
      %s91 = sphi 0, %s91
      %s93 = sphi 0, %s91
      %s94 = sphi 0, %s93
      %s108 = sphi 0, %s94
      %s112 = sphi 0, %s112
      %s114 = sphi 0, %s112
      %s115 = sphi 0, %s114
      %s129 = sphi 0, %s115
      %s133 = sphi 0, %s133
      %s135 = sphi 0, %s133
      %s136 = sphi 0, %s135
      %s150 = sphi 0, %s136
      %s154 = sphi 0, %s154
      %s156 = sphi 0, %s154
      %s157 = sphi 0, %s156
      %s171 = sphi 0, %s157
      %s175 = sphi 0, %s175
      %s177 = sphi 0, %s175
      %s178 = sphi 0, %s177
      %s192 = sphi 0, %s178
      %s200 = sphi 0, %s202
      %s203 = sphi 0, %s200
      %s204 = sphi 0, %s203
      %s220 = sphi 0, %s204
    $region4: #{tpu_custom_call.1} parent=1 // loop_header_branch
      %25 = sbr.rel (%p23) target = $region8
    $region5: #{tpu_custom_call.1} parent=1 // loop_body
      %s27 = ssub.s32 %s22, 1
      %s28 = ssub.s32 %s22, 2
      %s35 = sadd.s32 1, %s30
      %p36 = scmp.ge.s32.totalorder %s35, 8
      %s37 = scalar_select %p36, 0, %s35
      %s38 = sadd.s32 1, %s29
      %s39 = scalar_select %p36, %s38, %s29
      %p40 = scmp.ge.s32.totalorder %s39, 2
      %s41 = scalar_select %p40, 0, %s39
      %s42 = ssub.s32 %s29, %s41
      %s43 = ssub.s32 %s30, %s37
      %s44 = sor.u32 %s42, %s43
      %p45 = scmp.eq.s32.totalorder %s44, 0
      %s47 = sadd.s32 %s46, 1
      %s48 = scalar_select %p45, %s46, %s47
      %p51 = pneg %p45
      %p52 = scmp.eq.s32.totalorder %s22, 15
      %p53 = por %p51, %p52
      %p54 = scmp.ne.s32.totalorder %s46, %s49
      %p55 = scmp.eq.s32.totalorder %s22, 0
      %p56 = por %p54, %p55
      %p57 = scmp.ne.s32.totalorder %s46, %s49
      %p58 = scmp.eq.s32.totalorder %s27, 15
      %p59 = por %p57, %p58
      %p60 = scmp.ne.s32.totalorder %s49, %s50
      %p61 = scmp.eq.s32.totalorder %s27, 0
      %p62 = por %p60, %p61
      %p63 = scmp.ne.s32.totalorder %s49, %s50
      %p64 = scmp.eq.s32.totalorder %s28, 15
      %p65 = por %p63, %p64
      %p67 = scmp.ne.s32.totalorder %s50, %s66
      %p68 = scmp.eq.s32.totalorder %s28, 0
      %p69 = por %p67, %p68
      %s71 = sadd.s32 %s70, 1
      %p74 = scmp.eq.s32.totalorder %s22, 15
      %p75 = scmp.ne.s32.totalorder %s70, %s72
      %p76 = scmp.eq.s32.totalorder %s22, 0
      %p77 = por %p75, %p76
      %p78 = scmp.ne.s32.totalorder %s70, %s72
      %p79 = scmp.eq.s32.totalorder %s27, 15
      %p80 = por %p78, %p79
      %p81 = scmp.ne.s32.totalorder %s72, %s73
      %p82 = scmp.eq.s32.totalorder %s27, 0
      %p83 = por %p81, %p82
      %p84 = scmp.ne.s32.totalorder %s72, %s73
      %p85 = scmp.eq.s32.totalorder %s28, 15
      %p86 = por %p84, %p85
      %p88 = scmp.ne.s32.totalorder %s73, %s87
      %p89 = scmp.eq.s32.totalorder %s28, 0
      %p90 = por %p88, %p89
      %s92 = sadd.s32 %s91, 1
      %p95 = scmp.eq.s32.totalorder %s22, 15
      %p96 = scmp.ne.s32.totalorder %s91, %s93
      %p97 = scmp.eq.s32.totalorder %s22, 0
      %p98 = por %p96, %p97
      %p99 = scmp.ne.s32.totalorder %s91, %s93
      %p100 = scmp.eq.s32.totalorder %s27, 15
      %p101 = por %p99, %p100
      %p102 = scmp.ne.s32.totalorder %s93, %s94
      %p103 = scmp.eq.s32.totalorder %s27, 0
      %p104 = por %p102, %p103
      %p105 = scmp.ne.s32.totalorder %s93, %s94
      %p106 = scmp.eq.s32.totalorder %s28, 15
      %p107 = por %p105, %p106
      %p109 = scmp.ne.s32.totalorder %s94, %s108
      %p110 = scmp.eq.s32.totalorder %s28, 0
      %p111 = por %p109, %p110
      %s113 = sadd.s32 %s112, 1
      %p116 = scmp.eq.s32.totalorder %s22, 15
      %p117 = scmp.ne.s32.totalorder %s112, %s114
      %p118 = scmp.eq.s32.totalorder %s22, 0
      %p119 = por %p117, %p118
      %p120 = scmp.ne.s32.totalorder %s112, %s114
      %p121 = scmp.eq.s32.totalorder %s27, 15
      %p122 = por %p120, %p121
      %p123 = scmp.ne.s32.totalorder %s114, %s115
      %p124 = scmp.eq.s32.totalorder %s27, 0
      %p125 = por %p123, %p124
      %p126 = scmp.ne.s32.totalorder %s114, %s115
      %p127 = scmp.eq.s32.totalorder %s28, 15
      %p128 = por %p126, %p127
      %p130 = scmp.ne.s32.totalorder %s115, %s129
      %p131 = scmp.eq.s32.totalorder %s28, 0
      %p132 = por %p130, %p131
      %s134 = sadd.s32 %s133, 1
      %p137 = scmp.eq.s32.totalorder %s22, 15
      %p138 = scmp.ne.s32.totalorder %s133, %s135
      %p139 = scmp.eq.s32.totalorder %s22, 0
      %p140 = por %p138, %p139
      %p141 = scmp.ne.s32.totalorder %s133, %s135
      %p142 = scmp.eq.s32.totalorder %s27, 15
      %p143 = por %p141, %p142
      %p144 = scmp.ne.s32.totalorder %s135, %s136
      %p145 = scmp.eq.s32.totalorder %s27, 0
      %p146 = por %p144, %p145
      %p147 = scmp.ne.s32.totalorder %s135, %s136
      %p148 = scmp.eq.s32.totalorder %s28, 15
      %p149 = por %p147, %p148
      %p151 = scmp.ne.s32.totalorder %s136, %s150
      %p152 = scmp.eq.s32.totalorder %s28, 0
      %p153 = por %p151, %p152
      %s155 = sadd.s32 %s154, 1
      %p158 = scmp.eq.s32.totalorder %s22, 15
      %p159 = scmp.ne.s32.totalorder %s154, %s156
      %p160 = scmp.eq.s32.totalorder %s22, 0
      %p161 = por %p159, %p160
      %p162 = scmp.ne.s32.totalorder %s154, %s156
      %p163 = scmp.eq.s32.totalorder %s27, 15
      %p164 = por %p162, %p163
      %p165 = scmp.ne.s32.totalorder %s156, %s157
      %p166 = scmp.eq.s32.totalorder %s27, 0
      %p167 = por %p165, %p166
      %p168 = scmp.ne.s32.totalorder %s156, %s157
      %p169 = scmp.eq.s32.totalorder %s28, 15
      %p170 = por %p168, %p169
      %p172 = scmp.ne.s32.totalorder %s157, %s171
      %p173 = scmp.eq.s32.totalorder %s28, 0
      %p174 = por %p172, %p173
      %s176 = sadd.s32 %s175, 1
      %p179 = scmp.eq.s32.totalorder %s22, 15
      %p180 = scmp.ne.s32.totalorder %s175, %s177
      %p181 = scmp.eq.s32.totalorder %s22, 0
      %p182 = por %p180, %p181
      %p183 = scmp.ne.s32.totalorder %s175, %s177
      %p184 = scmp.eq.s32.totalorder %s27, 15
      %p185 = por %p183, %p184
      %p186 = scmp.ne.s32.totalorder %s177, %s178
      %p187 = scmp.eq.s32.totalorder %s27, 0
      %p188 = por %p186, %p187
      %p189 = scmp.ne.s32.totalorder %s177, %s178
      %p190 = scmp.eq.s32.totalorder %s28, 15
      %p191 = por %p189, %p190
      %p193 = scmp.ne.s32.totalorder %s178, %s192
      %p194 = scmp.eq.s32.totalorder %s28, 0
      %p195 = por %p193, %p194
      %s196 = ssub.s32 %s29, %s41
      %s197 = ssub.s32 %s30, %s37
      %s198 = sor.u32 %s196, %s197
      %p199 = scmp.eq.s32.totalorder %s198, 0
      %s201 = sadd.s32 %s200, 1
      %s202 = scalar_select %p199, %s200, %s201
      %p205 = pneg %p199
      %p206 = scmp.eq.s32.totalorder %s22, 15
      %p207 = por %p205, %p206
      %p208 = scmp.ne.s32.totalorder %s200, %s203
      %p209 = scmp.eq.s32.totalorder %s22, 0
      %p210 = por %p208, %p209
      %p211 = scmp.ne.s32.totalorder %s200, %s203
      %p212 = scmp.eq.s32.totalorder %s27, 15
      %p213 = por %p211, %p212
      %p214 = scmp.ne.s32.totalorder %s203, %s204
      %p215 = scmp.eq.s32.totalorder %s27, 0
      %p216 = por %p214, %p215
      %p217 = scmp.ne.s32.totalorder %s203, %s204
      %p218 = scmp.eq.s32.totalorder %s28, 15
      %p219 = por %p217, %p218
      %p221 = scmp.ne.s32.totalorder %s204, %s220
      %p222 = scmp.eq.s32.totalorder %s28, 0
      %p223 = por %p221, %p222
      %p224 = scmp.le.s32.totalorder 1, %s22
      %p225 = scmp.lt.s32.totalorder %s22, 17
      %p226 = pnand %p224, %p225
      %p227 = pneg %p226
      // Predicated region
      $region9: #{tpu_custom_call.1} parent=5 // pred_check
        _
      $region10: #{tpu_custom_call.1} parent=5 // pred_check_branch
        %229 = sbr.rel (%p226) target = $region12
      $region11: #{tpu_custom_call.1} parent=5 // pred_region
        %s230 = ssub.s32 %s22, 1
        // Predicated region
        $region13: #{tpu_custom_call.1} parent=11 // pred_check
          %p231 = pneg %p83
        $region14: #{tpu_custom_call.1} parent=11 // pred_check_branch
          %233 = sbr.rel (%p231) target = $region16
        $region15: #{tpu_custom_call.1} parent=11 // pred_region
          _
        $region16: #{tpu_custom_call.1} parent=11 // pred_fallthru
          _
        // Predicated region
        $region17: #{tpu_custom_call.1} parent=11 // pred_check
          %p234 = pneg %p104
        $region18: #{tpu_custom_call.1} parent=11 // pred_check_branch
          %236 = sbr.rel (%p234) target = $region20
        $region19: #{tpu_custom_call.1} parent=11 // pred_region
          _
        $region20: #{tpu_custom_call.1} parent=11 // pred_fallthru
          _
        // Predicated region
        $region21: #{tpu_custom_call.1} parent=11 // pred_check
          %p237 = pneg %p125
        $region22: #{tpu_custom_call.1} parent=11 // pred_check_branch
          %239 = sbr.rel (%p237) target = $region24
        $region23: #{tpu_custom_call.1} parent=11 // pred_region
          %s241 = ssub.s32 4608, 4608
          %242 = vsyncadd [#allocation12], %s241
          %s243 = sshll.u32 [#allocation11], 4
          %s244 = int_to_ptr.vmem [resolvable:$true] %s243
          %249 = dma.hbm_to_vmem [thread:$0]  %s4, 4608, %s244, [#allocation12], 64, 64, 4
        $region24: #{tpu_custom_call.1} parent=11 // pred_fallthru
          _
        // Predicated region
        $region25: #{tpu_custom_call.1} parent=11 // pred_check
          %p250 = pneg %p146
        $region26: #{tpu_custom_call.1} parent=11 // pred_check_branch
          %252 = sbr.rel (%p250) target = $region28
        $region27: #{tpu_custom_call.1} parent=11 // pred_region
          _
        $region28: #{tpu_custom_call.1} parent=11 // pred_fallthru
          _
        // Predicated region
        $region29: #{tpu_custom_call.1} parent=11 // pred_check
          %p253 = pneg %p167
        $region30: #{tpu_custom_call.1} parent=11 // pred_check_branch
          %255 = sbr.rel (%p253) target = $region32
        $region31: #{tpu_custom_call.1} parent=11 // pred_region
          _
        $region32: #{tpu_custom_call.1} parent=11 // pred_fallthru
          _
        // Predicated region
        $region33: #{tpu_custom_call.1} parent=11 // pred_check
          %p256 = pneg %p188
        $region34: #{tpu_custom_call.1} parent=11 // pred_check_branch
          %258 = sbr.rel (%p256) target = $region36
        $region35: #{tpu_custom_call.1} parent=11 // pred_region
          _
        $region36: #{tpu_custom_call.1} parent=11 // pred_fallthru
          _
      $region12: #{tpu_custom_call.1} parent=5 // pred_fallthru
        _
      %p259 = scmp.lt.s32.totalorder %s22, 16
      // Predicated region
      $region37: #{tpu_custom_call.1} parent=5 // pred_check
        %p260 = pneg %p259
      $region38: #{tpu_custom_call.1} parent=5 // pred_check_branch
        %262 = sbr.rel (%p260) target = $region40
      $region39: #{tpu_custom_call.1} parent=5 // pred_region
        // Predicated region
        $region41: #{tpu_custom_call.1} parent=39 // pred_check
          %p263 = pneg %p56
        $region42: #{tpu_custom_call.1} parent=39 // pred_check_branch
          %265 = sbr.rel (%p263) target = $region44
        $region43: #{tpu_custom_call.1} parent=39 // pred_region
          %s266 = sand.u32 %s46, 1
          %s267 = scalar_lea.sflag [#allocation9], %s266
          %s268 = sand.u32 %s46, 1
          %s269 = smul.addr %s268, 8
          %s270 = scalar_lea.vmem [#allocation8], %s269
          %s272 = ssub.s32 128, 128
          %273 = vsyncadd %s267, %s272
          %s274 = smul.addr %s30, 2
          %s275 = smul.addr %s29, 16
          %s276 = sadd.s32 %s274, %s275
          %s277 = smul.addr %s276, 64
          %s278 = scalar_lea.hbm %s1, %s277
          %s280 = sshll.u32 %s270, 4
          %s281 = int_to_ptr.vmem [resolvable:$true] %s280
          %283 = dma.hbm_to_vmem [thread:$0]  %s278, 128, %s281, %s267
        $region44: #{tpu_custom_call.1} parent=39 // pred_fallthru
          _
      $region40: #{tpu_custom_call.1} parent=5 // pred_fallthru
        _
      %p284 = scmp.le.s32.totalorder 1, %s22
      %p285 = scmp.lt.s32.totalorder %s22, 17
      %p286 = pnand %p284, %p285
      %p287 = pneg %p286
      // Predicated region
      $region45: #{tpu_custom_call.1} parent=5 // pred_check
        _
      $region46: #{tpu_custom_call.1} parent=5 // pred_check_branch
        %289 = sbr.rel (%p286) target = $region48
      $region47: #{tpu_custom_call.1} parent=5 // pred_region
        %s290 = ssub.s32 %s22, 1
        %s291 = sand.u32 %s49, 1
        %s292 = scalar_lea.sflag [#allocation9], %s291
        %s293 = sand.u32 %s49, 1
        %s294 = smul.addr %s293, 8
        %s295 = scalar_lea.vmem [#allocation8], %s294
        // Predicated region
        $region49: #{tpu_custom_call.1} parent=47 // pred_check
          %p296 = pneg %p62
        $region50: #{tpu_custom_call.1} parent=47 // pred_check_branch
          %298 = sbr.rel (%p296) target = $region52
        $region51: #{tpu_custom_call.1} parent=47 // pred_region
          %299 = dma.done %s292, 128
        $region52: #{tpu_custom_call.1} parent=47 // pred_fallthru
          _
        // Predicated region
        $region53: #{tpu_custom_call.1} parent=47 // pred_check
          %p300 = pneg %p125
        $region54: #{tpu_custom_call.1} parent=47 // pred_check_branch
          %302 = sbr.rel (%p300) target = $region56
        $region55: #{tpu_custom_call.1} parent=47 // pred_region
          %303 = dma.done [#allocation12], 4608
        $region56: #{tpu_custom_call.1} parent=47 // pred_fallthru
          _
        %s304 = sand.u32 %s49, 1
        %s305 = scalar_lea.sflag [#allocation9], %s304
        %s306 = sand.u32 %s49, 1
        %s307 = smul.addr %s306, 8
        %s308 = scalar_lea.vmem [#allocation8], %s307
        %p309 = pneg %p62
        %p310 = pneg %p59
        %p311 = pneg %p83
        %p312 = pneg %p80
        %p313 = pneg %p104
        %p314 = pneg %p101
        %p315 = pneg %p125
        %p316 = pneg %p122
        %p317 = pneg %p146
        %p318 = pneg %p143
        %p319 = pneg %p167
        %p320 = pneg %p164
        %p321 = pneg %p188
        %p322 = pneg %p185
        %p323 = pneg %p216
        %p324 = pneg %p213
        %s325 = sand.u32 %s203, 1
        %s326 = scalar_lea.sflag [#allocation10], %s325
        %s327 = sand.u32 %s203, 1
        %s328 = smul.addr %s327, 8
        %s329 = scalar_lea.vmem [#allocation13], %s328
        %p331 = scmp.eq.s32.totalorder %s32, 0
        // Predicated region
        $region57: #{tpu_custom_call.1} parent=47 // pred_check
          %p332 = pneg %p331
        $region58: #{tpu_custom_call.1} parent=47 // pred_check_branch
          %334 = sbr.rel (%p332) target = $region60
        $region59: #{tpu_custom_call.1} parent=47 // pred_region
          %vm335 = vcmask 523264
          %336 = vst.msk [vmem:[#allocation2] sm:$0xff] %vm335, 0.0
          %337 = vst.msk [vmem:[#allocation2 + $0x8] sm:$0xff] %vm335, 0.0
          %vm338 = vcmask 517120
          %339 = vst.msk [vmem:[#allocation2 + $0x10] sm:$0x3] %vm338, 0.0
          %340 = vst.msk [vmem:[#allocation2 + $0x18] sm:$0xff] %vm335, 0.0
          %341 = vst.msk [vmem:[#allocation2 + $0x20] sm:$0xff] %vm335, 0.0
          %342 = vst.msk [vmem:[#allocation2 + $0x28] sm:$0x3] %vm338, 0.0
          %343 = vst.msk [vmem:[#allocation2 + $0x30] sm:$0xff] %vm335, 0.0
          %344 = vst.msk [vmem:[#allocation2 + $0x38] sm:$0xff] %vm335, 0.0
          %345 = vst.msk [vmem:[#allocation2 + $0x40] sm:$0x3] %vm338, 0.0
          %346 = vst.msk [vmem:[#allocation2 + $0x48] sm:$0xff] %vm335, 0.0
          %347 = vst.msk [vmem:[#allocation2 + $0x50] sm:$0xff] %vm335, 0.0
          %348 = vst.msk [vmem:[#allocation2 + $0x58] sm:$0x3] %vm338, 0.0
          %349 = vst.msk [vmem:[#allocation2 + $0x60] sm:$0xff] %vm335, 0.0
          %350 = vst.msk [vmem:[#allocation2 + $0x68] sm:$0xff] %vm335, 0.0
          %351 = vst.msk [vmem:[#allocation2 + $0x70] sm:$0x3] %vm338, 0.0
          %352 = vst.msk [vmem:[#allocation2 + $0x78] sm:$0xff] %vm335, 0.0
          %353 = vst.msk [vmem:[#allocation2 + $0x80] sm:$0xff] %vm335, 0.0
          %354 = vst.msk [vmem:[#allocation2 + $0x88] sm:$0x3] %vm338, 0.0
          %355 = vst.msk [vmem:[#allocation2 + $0x90] sm:$0xff] %vm335, 0.0
          %356 = vst.msk [vmem:[#allocation2 + $0x98] sm:$0xff] %vm335, 0.0
          %357 = vst.msk [vmem:[#allocation2 + $0xa0] sm:$0x3] %vm338, 0.0
          %358 = vst.msk [vmem:[#allocation2 + $0xa8] sm:$0xff] %vm335, 0.0
          %359 = vst.msk [vmem:[#allocation2 + $0xb0] sm:$0xff] %vm335, 0.0
          %360 = vst.msk [vmem:[#allocation2 + $0xb8] sm:$0x3] %vm338, 0.0
          %361 = vst.msk [vmem:[#allocation2 + $0xc0] sm:$0xff] %vm335, 0.0
          %362 = vst.msk [vmem:[#allocation2 + $0xc8] sm:$0xff] %vm335, 0.0
          %363 = vst.msk [vmem:[#allocation2 + $0xd0] sm:$0x3] %vm338, 0.0
          %364 = vst.msk [vmem:[#allocation2 + $0xd8] sm:$0xff] %vm335, 0.0
          %365 = vst.msk [vmem:[#allocation2 + $0xe0] sm:$0xff] %vm335, 0.0
          %366 = vst.msk [vmem:[#allocation2 + $0xe8] sm:$0x3] %vm338, 0.0
          %367 = vst.msk [vmem:[#allocation2 + $0xf0] sm:$0xff] %vm335, 0.0
          %368 = vst.msk [vmem:[#allocation2 + $0xf8] sm:$0xff] %vm335, 0.0
          %369 = vst.msk [vmem:[#allocation2 + $0x100] sm:$0x3] %vm338, 0.0
          %370 = vst.msk [vmem:[#allocation2 + $0x108] sm:$0xff] %vm335, 0.0
          %371 = vst.msk [vmem:[#allocation2 + $0x110] sm:$0xff] %vm335, 0.0
          %372 = vst.msk [vmem:[#allocation2 + $0x118] sm:$0x3] %vm338, 0.0
          %373 = vst.msk [vmem:[#allocation2 + $0x120] sm:$0xff] %vm335, 0.0
          %374 = vst.msk [vmem:[#allocation2 + $0x128] sm:$0xff] %vm335, 0.0
          %375 = vst.msk [vmem:[#allocation2 + $0x130] sm:$0x3] %vm338, 0.0
          %376 = vst.msk [vmem:[#allocation2 + $0x138] sm:$0xff] %vm335, 0.0
          %377 = vst.msk [vmem:[#allocation2 + $0x140] sm:$0xff] %vm335, 0.0
          %378 = vst.msk [vmem:[#allocation2 + $0x148] sm:$0x3] %vm338, 0.0
          %379 = vst.msk [vmem:[#allocation2 + $0x150] sm:$0xff] %vm335, 0.0
          %380 = vst.msk [vmem:[#allocation2 + $0x158] sm:$0xff] %vm335, 0.0
          %381 = vst.msk [vmem:[#allocation2 + $0x160] sm:$0x3] %vm338, 0.0
          %382 = vst.msk [vmem:[#allocation2 + $0x168] sm:$0xff] %vm335, 0.0
          %383 = vst.msk [vmem:[#allocation2 + $0x170] sm:$0xff] %vm335, 0.0
          %384 = vst.msk [vmem:[#allocation2 + $0x178] sm:$0x3] %vm338, 0.0
          %385 = vst.msk [vmem:[#allocation2 + $0x180] sm:$0xff] %vm335, 0.0
          %386 = vst.msk [vmem:[#allocation2 + $0x188] sm:$0xff] %vm335, 0.0
          %387 = vst.msk [vmem:[#allocation2 + $0x190] sm:$0x3] %vm338, 0.0
          %388 = vst.msk [vmem:[#allocation2 + $0x198] sm:$0xff] %vm335, 0.0
          %389 = vst.msk [vmem:[#allocation2 + $0x1a0] sm:$0xff] %vm335, 0.0
          %390 = vst.msk [vmem:[#allocation2 + $0x1a8] sm:$0x3] %vm338, 0.0
          %vm391 = vcmask 261120
          %392 = vst.msk [vmem:[#allocation4] sm:$0xff] %vm391, 0.0
          %393 = vst.msk [vmem:[#allocation4 + $0x8] sm:$0xff] %vm391, 0.0
          %394 = vst.msk [vmem:[#allocation4 + $0x10] sm:$0xff] %vm391, 0.0
          %395 = vst.msk [vmem:[#allocation4 + $0x18] sm:$0xff] %vm391, 0.0
          %396 = vst.msk [vmem:[#allocation4 + $0x20] sm:$0xff] %vm391, 0.0
          %397 = vst.msk [vmem:[#allocation4 + $0x28] sm:$0xff] %vm391, 0.0
          %398 = vst.msk [vmem:[#allocation4 + $0x30] sm:$0xff] %vm391, 0.0
          %399 = vst.msk [vmem:[#allocation4 + $0x38] sm:$0xff] %vm391, 0.0
          %400 = vst.msk [vmem:[#allocation4 + $0x40] sm:$0xff] %vm391, 0.0
          %401 = vst.msk [vmem:[#allocation4 + $0x48] sm:$0xff] %vm391, 0.0
          %402 = vst.msk [vmem:[#allocation4 + $0x50] sm:$0xff] %vm391, 0.0
          %403 = vst.msk [vmem:[#allocation4 + $0x58] sm:$0xff] %vm391, 0.0
          %404 = vst.msk [vmem:[#allocation4 + $0x60] sm:$0xff] %vm391, 0.0
          %405 = vst.msk [vmem:[#allocation4 + $0x68] sm:$0xff] %vm391, 0.0
          %406 = vst.msk [vmem:[#allocation4 + $0x70] sm:$0xff] %vm391, 0.0
          %407 = vst.msk [vmem:[#allocation4 + $0x78] sm:$0xff] %vm391, 0.0
          %408 = vst.msk [vmem:[#allocation4 + $0x80] sm:$0xff] %vm391, 0.0
          %409 = vst.msk [vmem:[#allocation4 + $0x88] sm:$0xff] %vm391, 0.0
          %410 = vst.msk [vmem:[#allocation4 + $0x90] sm:$0xff] %vm391, 0.0
          %411 = vst.msk [vmem:[#allocation4 + $0x98] sm:$0xff] %vm391, 0.0
          %412 = vst.msk [vmem:[#allocation4 + $0xa0] sm:$0xff] %vm391, 0.0
          %413 = vst.msk [vmem:[#allocation4 + $0xa8] sm:$0xff] %vm391, 0.0
          %414 = vst.msk [vmem:[#allocation4 + $0xb0] sm:$0xff] %vm391, 0.0
          %415 = vst.msk [vmem:[#allocation4 + $0xb8] sm:$0xff] %vm391, 0.0
          %416 = vst.msk [vmem:[#allocation4 + $0xc0] sm:$0xff] %vm391, 0.0
          %417 = vst.msk [vmem:[#allocation4 + $0xc8] sm:$0xff] %vm391, 0.0
          %418 = vst.msk [vmem:[#allocation4 + $0xd0] sm:$0xff] %vm391, 0.0
          %419 = vst.msk [vmem:[#allocation4 + $0xd8] sm:$0xff] %vm391, 0.0
          %420 = vst.msk [vmem:[#allocation4 + $0xe0] sm:$0xff] %vm391, 0.0
          %421 = vst.msk [vmem:[#allocation4 + $0xe8] sm:$0xff] %vm391, 0.0
          %422 = vst.msk [vmem:[#allocation4 + $0xf0] sm:$0xff] %vm391, 0.0
          %423 = vst.msk [vmem:[#allocation4 + $0xf8] sm:$0xff] %vm391, 0.0
          %424 = vst [vmem:[#allocation5] sm:$0xff] 0.0
        $region60: #{tpu_custom_call.1} parent=47 // pred_fallthru
          _
        %s425 = sld [smem:[#allocation7]]
        %p426 = scmp.lt.s32.totalorder %s32, %s425
        %p427 = por %p331, %p426
        %v428 = vld [vmem:[%s295] sm:$0xff]
        %v429 = vld [vmem:[#allocation5] sm:$0xff]
        %s430 = scalar_select %p427, 1, 0
        %v431 = vstv %s430
        %vm432 = vcmp.eq.s32.totalorder %v431, 1
        %v433 = vsel %vm432, %v428, %v429
        %v435 = vcombine.high %v433, %v433
        %437 = vxpose.xlu0.b32.start [1/16] %v433, 128
        %438 = vxpose.xlu0.b32.cont [2/16] 0.0, 128
        %439 = vxpose.xlu0.b32.cont [3/16] 0.0, 128
        %440 = vxpose.xlu0.b32.cont [4/16] 0.0, 128
        %441 = vxpose.xlu0.b32.cont [5/16] 0.0, 128
        %442 = vxpose.xlu0.b32.cont [6/16] 0.0, 128
        %443 = vxpose.xlu0.b32.cont [7/16] 0.0, 128
        %444 = vxpose.xlu0.b32.cont [8/16] 0.0, 128
        %445 = vxpose.xlu0.b32.cont [9/16] 0.0, 128
        %446 = vxpose.xlu0.b32.cont [10/16] 0.0, 128
        %447 = vxpose.xlu0.b32.cont [11/16] 0.0, 128
        %448 = vxpose.xlu0.b32.cont [12/16] 0.0, 128
        %449 = vxpose.xlu0.b32.cont [13/16] 0.0, 128
        %450 = vxpose.xlu0.b32.cont [14/16] 0.0, 128
        %451 = vxpose.xlu0.b32.cont [15/16] 0.0, 128
        %452 = vxpose.xlu0.b32.end [16/16] 0.0, 128
        %v453 = vpop.trf.xlu0
        %v454 = vpop.trf.xlu0
        %v455 = vpop.trf.xlu0
        %v456 = vpop.trf.xlu0
        %v457 = vpop.trf.xlu0
        %v458 = vpop.trf.xlu0
        %v459 = vpop.trf.xlu0
        %v460 = vpop.trf.xlu0
        %v461 = vpop.trf.xlu0
        %v462 = vpop.trf.xlu0
        %v463 = vpop.trf.xlu0
        %v464 = vpop.trf.xlu0
        %v465 = vpop.trf.xlu0
        %v466 = vpop.trf.xlu0
        %v467 = vpop.trf.xlu0
        %v468 = vpop.trf.xlu0
        %469 = vxpose.xlu0.b32.start [1/16] %v435, 128
        %470 = vxpose.xlu0.b32.cont [2/16] 0.0, 128
        %471 = vxpose.xlu0.b32.cont [3/16] 0.0, 128
        %472 = vxpose.xlu0.b32.cont [4/16] 0.0, 128
        %473 = vxpose.xlu0.b32.cont [5/16] 0.0, 128
        %474 = vxpose.xlu0.b32.cont [6/16] 0.0, 128
        %475 = vxpose.xlu0.b32.cont [7/16] 0.0, 128
        %476 = vxpose.xlu0.b32.cont [8/16] 0.0, 128
        %477 = vxpose.xlu0.b32.cont [9/16] 0.0, 128
        %478 = vxpose.xlu0.b32.cont [10/16] 0.0, 128
        %479 = vxpose.xlu0.b32.cont [11/16] 0.0, 128
        %480 = vxpose.xlu0.b32.cont [12/16] 0.0, 128
        %481 = vxpose.xlu0.b32.cont [13/16] 0.0, 128
        %482 = vxpose.xlu0.b32.cont [14/16] 0.0, 128
        %483 = vxpose.xlu0.b32.cont [15/16] 0.0, 128
        %484 = vxpose.xlu0.b32.end [16/16] 0.0, 128
        %v485 = vpop.trf.xlu0
        %v486 = vpop.trf.xlu0
        %v487 = vpop.trf.xlu0
        %v488 = vpop.trf.xlu0
        %v489 = vpop.trf.xlu0
        %v490 = vpop.trf.xlu0
        %v491 = vpop.trf.xlu0
        %v492 = vpop.trf.xlu0
        %v493 = vpop.trf.xlu0
        %v494 = vpop.trf.xlu0
        %v495 = vpop.trf.xlu0
        %v496 = vpop.trf.xlu0
        %v497 = vpop.trf.xlu0
        %v498 = vpop.trf.xlu0
        %v499 = vpop.trf.xlu0
        %v500 = vpop.trf.xlu0
        %v501 = vpack.c.bf16 %v454, %v453
        %v502 = vpack.c.bf16 %v456, %v455
        %v503 = vpack.c.bf16 %v458, %v457
        %v504 = vpack.c.bf16 %v460, %v459
        %v505 = vpack.c.bf16 %v462, %v461
        %v506 = vpack.c.bf16 %v464, %v463
        %v507 = vpack.c.bf16 %v466, %v465
        %v508 = vpack.c.bf16 %v468, %v467
        %v509 = vpack.c.bf16 %v486, %v485
        %v510 = vpack.c.bf16 %v488, %v487
        %v511 = vpack.c.bf16 %v490, %v489
        %v512 = vpack.c.bf16 %v492, %v491
        %v513 = vpack.c.bf16 %v494, %v493
        %v514 = vpack.c.bf16 %v496, %v495
        %v515 = vpack.c.bf16 %v498, %v497
        %v516 = vpack.c.bf16 %v500, %v499
        %v517 = vld [vmem:[%s2] sm:$0x3]
        %v518 = vld [vmem:[%s3] sm:$0x1]
        %v520 = vlaneseq
        %v521 = vshrl.u32 %v520, 7
        %v522 = vsub.s32 0, %v521
        %v523 = vrot.slane %v518, %v522
        %vm525 = vcmask 31744
        %v527 = vsel %vm525, %v501, 0
        %v530 = vsel %vm525, %v502, 0
        %v533 = vsel %vm525, %v503, 0
        %v536 = vsel %vm525, %v504, 0
        %v539 = vsel %vm525, %v505, 0
        %v542 = vsel %vm525, %v506, 0
        %v545 = vsel %vm525, %v507, 0
        %v548 = vsel %vm525, %v508, 0
        %v551 = vsel %vm525, %v509, 0
        %v554 = vsel %vm525, %v510, 0
        %v557 = vsel %vm525, %v511, 0
        %v560 = vsel %vm525, %v512, 0
        %v563 = vsel %vm525, %v513, 0
        %v566 = vsel %vm525, %v514, 0
        %v569 = vsel %vm525, %v515, 0
        %v572 = vsel %vm525, %v516, 0
        %vm574 = vcmask 1041408
        %v576 = vsel %vm574, %v517, 0
        %578 = vmatprep.subr.bf16.mxu0 0
        %579 = vmatpush1.bf16.msra.mxu0 %v576
        %580 = vmatprep.subr.bf16.mxu0 0
        %581 = vmatpush1.bf16.msra.mxu0 0
        %582 = vmatprep.subr.bf16.mxu0 0
        %583 = vmatpush1.bf16.msra.mxu0 0
        %584 = vmatprep.subr.bf16.mxu0 0
        %585 = vmatpush1.bf16.msra.mxu0 0
        %586 = vmatprep.subr.bf16.mxu0 0
        %587 = vmatpush1.bf16.msra.mxu0 0
        %588 = vmatprep.subr.bf16.mxu0 0
        %589 = vmatpush1.bf16.msra.mxu0 0
        %590 = vmatprep.subr.bf16.mxu0 0
        %591 = vmatpush1.bf16.msra.mxu0 0
        %592 = vmatprep.subr.bf16.mxu0 0
        %593 = vmatpush1.bf16.msra.mxu0 0
        %594 = vmatprep.subr.bf16.mxu0 0
        %595 = vmatpush1.bf16.msra.mxu0 0
        %596 = vmatprep.subr.bf16.mxu0 0
        %597 = vmatpush1.bf16.msra.mxu0 0
        %598 = vmatprep.subr.bf16.mxu0 0
        %599 = vmatpush1.bf16.msra.mxu0 0
        %600 = vmatprep.subr.bf16.mxu0 0
        %601 = vmatpush1.bf16.msra.mxu0 0
        %602 = vmatprep.subr.bf16.mxu0 0
        %603 = vmatpush1.bf16.msra.mxu0 0
        %604 = vmatprep.subr.bf16.mxu0 0
        %605 = vmatpush1.bf16.msra.mxu0 0
        %606 = vmatprep.subr.bf16.mxu0 0
        %607 = vmatpush1.bf16.msra.mxu0 0
        %608 = vmatprep.subr.bf16.mxu0 0
        %609 = vmatpush1.bf16.msra.mxu0 0
        %610 = vmatprep.mubr.bf16.mxu0 0
        %611 = vmatmul.mubr.bf16.gmra.mrb[0].mxu0 %v527
        %v612 = vpop.f32.mrb[0].mxu0
        %v613 = vadd.f32 %v523, %v612
        %v614 = vpop.f32.mrb[0].mxu0
        %v615 = vpop.f32.mrb[0].mxu0
        %v616 = vadd.f32 %v523, %v615
        %v617 = vpop.f32.mrb[0].mxu0
        %618 = vmatprep.mubr.bf16.mxu0 0
        %619 = vmatmul.mubr.bf16.gmra.mrb[0].mxu0 %v530
        %v620 = vpop.f32.mrb[0].mxu0
        %v621 = vadd.f32 %v523, %v620
        %v622 = vpop.f32.mrb[0].mxu0
        %v623 = vpop.f32.mrb[0].mxu0
        %v624 = vadd.f32 %v523, %v623
        %v625 = vpop.f32.mrb[0].mxu0
        %626 = vmatprep.mubr.bf16.mxu0 0
        %627 = vmatmul.mubr.bf16.gmra.mrb[0].mxu0 %v533
        %v628 = vpop.f32.mrb[0].mxu0
        %v629 = vadd.f32 %v523, %v628
        %v630 = vpop.f32.mrb[0].mxu0
        %v631 = vpop.f32.mrb[0].mxu0
        %v632 = vadd.f32 %v523, %v631
        %v633 = vpop.f32.mrb[0].mxu0
        %634 = vmatprep.mubr.bf16.mxu0 0
        %635 = vmatmul.mubr.bf16.gmra.mrb[0].mxu0 %v536
        %v636 = vpop.f32.mrb[0].mxu0
        %v637 = vadd.f32 %v523, %v636
        %v638 = vpop.f32.mrb[0].mxu0
        %v639 = vpop.f32.mrb[0].mxu0
        %v640 = vadd.f32 %v523, %v639
        %v641 = vpop.f32.mrb[0].mxu0
        %642 = vmatprep.mubr.bf16.mxu0 0
        %643 = vmatmul.mubr.bf16.gmra.mrb[0].mxu0 %v539
        %v644 = vpop.f32.mrb[0].mxu0
        %v645 = vadd.f32 %v523, %v644
        %v646 = vpop.f32.mrb[0].mxu0
        %v647 = vpop.f32.mrb[0].mxu0
        %v648 = vadd.f32 %v523, %v647
        %v649 = vpop.f32.mrb[0].mxu0
        %650 = vmatprep.mubr.bf16.mxu0 0
        %651 = vmatmul.mubr.bf16.gmra.mrb[0].mxu0 %v542
        %v652 = vpop.f32.mrb[0].mxu0
        %v653 = vadd.f32 %v523, %v652
        %v654 = vpop.f32.mrb[0].mxu0
        %v655 = vpop.f32.mrb[0].mxu0
        %v656 = vadd.f32 %v523, %v655
        %v657 = vpop.f32.mrb[0].mxu0
        %658 = vmatprep.mubr.bf16.mxu0 0
        %659 = vmatmul.mubr.bf16.gmra.mrb[0].mxu0 %v545
        %v660 = vpop.f32.mrb[0].mxu0
        %v661 = vadd.f32 %v523, %v660
        %v662 = vpop.f32.mrb[0].mxu0
        %v663 = vpop.f32.mrb[0].mxu0
        %v664 = vadd.f32 %v523, %v663
        %v665 = vpop.f32.mrb[0].mxu0
        %666 = vmatprep.mubr.bf16.mxu0 0
        %667 = vmatmul.mubr.bf16.gmra.mrb[0].mxu0 %v548
        %v668 = vpop.f32.mrb[0].mxu0
        %v669 = vadd.f32 %v523, %v668
        %v670 = vpop.f32.mrb[0].mxu0
        %v671 = vpop.f32.mrb[0].mxu0
        %v672 = vadd.f32 %v523, %v671
        %v673 = vpop.f32.mrb[0].mxu0
        %674 = vmatprep.mubr.bf16.mxu0 0
        %675 = vmatmul.mubr.bf16.gmra.mrb[0].mxu0 %v551
        %v676 = vpop.f32.mrb[0].mxu0
        %v677 = vadd.f32 %v523, %v676
        %v678 = vpop.f32.mrb[0].mxu0
        %v679 = vpop.f32.mrb[0].mxu0
        %v680 = vadd.f32 %v523, %v679
        %v681 = vpop.f32.mrb[0].mxu0
        %682 = vmatprep.mubr.bf16.mxu0 0
        %683 = vmatmul.mubr.bf16.gmra.mrb[0].mxu0 %v554
        %v684 = vpop.f32.mrb[0].mxu0
        %v685 = vadd.f32 %v523, %v684
        %v686 = vpop.f32.mrb[0].mxu0
        %v687 = vpop.f32.mrb[0].mxu0
        %v688 = vadd.f32 %v523, %v687
        %v689 = vpop.f32.mrb[0].mxu0
        %690 = vmatprep.mubr.bf16.mxu0 0
        %691 = vmatmul.mubr.bf16.gmra.mrb[0].mxu0 %v557
        %v692 = vpop.f32.mrb[0].mxu0
        %v693 = vadd.f32 %v523, %v692
        %v694 = vpop.f32.mrb[0].mxu0
        %v695 = vpop.f32.mrb[0].mxu0
        %v696 = vadd.f32 %v523, %v695
        %v697 = vpop.f32.mrb[0].mxu0
        %698 = vmatprep.mubr.bf16.mxu0 0
        %699 = vmatmul.mubr.bf16.gmra.mrb[0].mxu0 %v560
        %v700 = vpop.f32.mrb[0].mxu0
        %v701 = vadd.f32 %v523, %v700
        %v702 = vpop.f32.mrb[0].mxu0
        %v703 = vpop.f32.mrb[0].mxu0
        %v704 = vadd.f32 %v523, %v703
        %v705 = vpop.f32.mrb[0].mxu0
        %706 = vmatprep.mubr.bf16.mxu0 0
        %707 = vmatmul.mubr.bf16.gmra.mrb[0].mxu0 %v563
        %v708 = vpop.f32.mrb[0].mxu0
        %v709 = vadd.f32 %v523, %v708
        %v710 = vpop.f32.mrb[0].mxu0
        %v711 = vpop.f32.mrb[0].mxu0
        %v712 = vadd.f32 %v523, %v711
        %v713 = vpop.f32.mrb[0].mxu0
        %714 = vmatprep.mubr.bf16.mxu0 0
        %715 = vmatmul.mubr.bf16.gmra.mrb[0].mxu0 %v566
        %v716 = vpop.f32.mrb[0].mxu0
        %v717 = vadd.f32 %v523, %v716
        %v718 = vpop.f32.mrb[0].mxu0
        %v719 = vpop.f32.mrb[0].mxu0
        %v720 = vadd.f32 %v523, %v719
        %v721 = vpop.f32.mrb[0].mxu0
        %722 = vmatprep.mubr.bf16.mxu0 0
        %723 = vmatmul.mubr.bf16.gmra.mrb[0].mxu0 %v569
        %v724 = vpop.f32.mrb[0].mxu0
        %v725 = vadd.f32 %v523, %v724
        %v726 = vpop.f32.mrb[0].mxu0
        %v727 = vpop.f32.mrb[0].mxu0
        %v728 = vadd.f32 %v523, %v727
        %v729 = vpop.f32.mrb[0].mxu0
        %730 = vmatprep.mubr.bf16.mxu0 0
        %731 = vmatmul.mubr.bf16.gmra.mrb[0].mxu0 %v572
        %v732 = vpop.f32.mrb[0].mxu0
        %v733 = vadd.f32 %v523, %v732
        %v734 = vpop.f32.mrb[0].mxu0
        %v735 = vpop.f32.mrb[0].mxu0
        %v736 = vadd.f32 %v523, %v735
        %v737 = vpop.f32.mrb[0].mxu0
        %738 = vdwg.mxu0
        %s739 = scalar_lea.vmem [#allocation2], 24
        %vm740 = vcmask 261120
        %741 = vst.msk [vmem:[%s739 + $0x1] sm:$0xff] %vm740, %v613
        %742 = vst.msk [vmem:[%s739 + $0x9] sm:$0xff] %vm740, %v616
        %743 = vst.msk [vmem:[%s739 + $0x19] sm:$0xff] %vm740, %v621
        %744 = vst.msk [vmem:[%s739 + $0x21] sm:$0xff] %vm740, %v624
        %745 = vst.msk [vmem:[%s739 + $0x31] sm:$0xff] %vm740, %v629
        %746 = vst.msk [vmem:[%s739 + $0x39] sm:$0xff] %vm740, %v632
        %747 = vst.msk [vmem:[%s739 + $0x49] sm:$0xff] %vm740, %v637
        %748 = vst.msk [vmem:[%s739 + $0x51] sm:$0xff] %vm740, %v640
        %749 = vst.msk [vmem:[%s739 + $0x61] sm:$0xff] %vm740, %v645
        %750 = vst.msk [vmem:[%s739 + $0x69] sm:$0xff] %vm740, %v648
        %751 = vst.msk [vmem:[%s739 + $0x79] sm:$0xff] %vm740, %v653
        %752 = vst.msk [vmem:[%s739 + $0x81] sm:$0xff] %vm740, %v656
        %753 = vst.msk [vmem:[%s739 + $0x91] sm:$0xff] %vm740, %v661
        %754 = vst.msk [vmem:[%s739 + $0x99] sm:$0xff] %vm740, %v664
        %755 = vst.msk [vmem:[%s739 + $0xa9] sm:$0xff] %vm740, %v669
        %756 = vst.msk [vmem:[%s739 + $0xb1] sm:$0xff] %vm740, %v672
        %757 = vst.msk [vmem:[%s739 + $0xc1] sm:$0xff] %vm740, %v677
        %758 = vst.msk [vmem:[%s739 + $0xc9] sm:$0xff] %vm740, %v680
        %759 = vst.msk [vmem:[%s739 + $0xd9] sm:$0xff] %vm740, %v685
        %760 = vst.msk [vmem:[%s739 + $0xe1] sm:$0xff] %vm740, %v688
        %761 = vst.msk [vmem:[%s739 + $0xf1] sm:$0xff] %vm740, %v693
        %762 = vst.msk [vmem:[%s739 + $0xf9] sm:$0xff] %vm740, %v696
        %763 = vst.msk [vmem:[%s739 + $0x109] sm:$0xff] %vm740, %v701
        %764 = vst.msk [vmem:[%s739 + $0x111] sm:$0xff] %vm740, %v704
        %765 = vst.msk [vmem:[%s739 + $0x121] sm:$0xff] %vm740, %v709
        %766 = vst.msk [vmem:[%s739 + $0x129] sm:$0xff] %vm740, %v712
        %767 = vst.msk [vmem:[%s739 + $0x139] sm:$0xff] %vm740, %v717
        %768 = vst.msk [vmem:[%s739 + $0x141] sm:$0xff] %vm740, %v720
        %769 = vst.msk [vmem:[%s739 + $0x151] sm:$0xff] %vm740, %v725
        %770 = vst.msk [vmem:[%s739 + $0x159] sm:$0xff] %vm740, %v728
        %771 = vst.msk [vmem:[%s739 + $0x169] sm:$0xff] %vm740, %v733
        %772 = vst.msk [vmem:[%s739 + $0x171] sm:$0xff] %vm740, %v736
        %v773 = vld [vmem:[#allocation2] sm:$0xff]
        %v774 = vld [vmem:[#allocation2 + $0x8] sm:$0xff]
        %v775 = vld [vmem:[#allocation2 + $0x18] sm:$0xff]
        %v776 = vld [vmem:[#allocation2 + $0x20] sm:$0xff]
        %v777 = vld [vmem:[#allocation2 + $0x30] sm:$0xff]
        %v778 = vld [vmem:[#allocation2 + $0x38] sm:$0xff]
        %v779 = vld [vmem:[#allocation2 + $0x48] sm:$0xff]
        %v780 = vld [vmem:[#allocation2 + $0x50] sm:$0xff]
        %v781 = vld [vmem:[#allocation2 + $0x60] sm:$0xff]
        %v782 = vld [vmem:[#allocation2 + $0x68] sm:$0xff]
        %v783 = vld [vmem:[#allocation2 + $0x78] sm:$0xff]
        %v784 = vld [vmem:[#allocation2 + $0x80] sm:$0xff]
        %v785 = vld [vmem:[#allocation2 + $0x90] sm:$0xff]
        %v786 = vld [vmem:[#allocation2 + $0x98] sm:$0xff]
        %v787 = vld [vmem:[#allocation2 + $0xa8] sm:$0xff]
        %v788 = vld [vmem:[#allocation2 + $0xb0] sm:$0xff]
        %v789 = vld [vmem:[#allocation2 + $0xc0] sm:$0xff]
        %v790 = vld [vmem:[#allocation2 + $0xc8] sm:$0xff]
        %v791 = vld [vmem:[#allocation2 + $0xd8] sm:$0xff]
        %v792 = vld [vmem:[#allocation2 + $0xe0] sm:$0xff]
        %v793 = vld [vmem:[#allocation2 + $0xf0] sm:$0xff]
        %v794 = vld [vmem:[#allocation2 + $0xf8] sm:$0xff]
        %v795 = vld [vmem:[#allocation2 + $0x108] sm:$0xff]
        %v796 = vld [vmem:[#allocation2 + $0x110] sm:$0xff]
        %v797 = vld [vmem:[#allocation2 + $0x120] sm:$0xff]
        %v798 = vld [vmem:[#allocation2 + $0x128] sm:$0xff]
        %v799 = vld [vmem:[#allocation2 + $0x138] sm:$0xff]
        %v800 = vld [vmem:[#allocation2 + $0x140] sm:$0xff]
        %v801 = vld [vmem:[#allocation2 + $0x150] sm:$0xff]
        %v802 = vld [vmem:[#allocation2 + $0x158] sm:$0xff]
        %v803 = vld [vmem:[#allocation2 + $0x168] sm:$0xff]
        %v804 = vld [vmem:[#allocation2 + $0x170] sm:$0xff]
        %v805 = vpack.c.bf16 %v774, %v773
        %v806 = vpack.c.bf16 %v776, %v775
        %v807 = vpack.c.bf16 %v778, %v777
        %v808 = vpack.c.bf16 %v780, %v779
        %v809 = vpack.c.bf16 %v782, %v781
        %v810 = vpack.c.bf16 %v784, %v783
        %v811 = vpack.c.bf16 %v786, %v785
        %v812 = vpack.c.bf16 %v788, %v787
        %v813 = vpack.c.bf16 %v790, %v789
        %v814 = vpack.c.bf16 %v792, %v791
        %v815 = vpack.c.bf16 %v794, %v793
        %v816 = vpack.c.bf16 %v796, %v795
        %v817 = vpack.c.bf16 %v798, %v797
        %v818 = vpack.c.bf16 %v800, %v799
        %v819 = vpack.c.bf16 %v802, %v801
        %v820 = vpack.c.bf16 %v804, %v803
        %vm821 = vcmask 523264
        %822 = vst.msk [vmem:[#allocation3] sm:$0xff] %vm821, %v805
        %823 = vst.msk [vmem:[#allocation3 + $0x28] sm:$0xff] %vm821, %v806
        %824 = vst.msk [vmem:[#allocation3 + $0x50] sm:$0xff] %vm821, %v807
        %825 = vst.msk [vmem:[#allocation3 + $0x78] sm:$0xff] %vm821, %v808
        %826 = vst.msk [vmem:[#allocation3 + $0xa0] sm:$0xff] %vm821, %v809
        %827 = vst.msk [vmem:[#allocation3 + $0xc8] sm:$0xff] %vm821, %v810
        %828 = vst.msk [vmem:[#allocation3 + $0xf0] sm:$0xff] %vm821, %v811
        %829 = vst.msk [vmem:[#allocation3 + $0x118] sm:$0xff] %vm821, %v812
        %830 = vst.msk [vmem:[#allocation3 + $0x140] sm:$0xff] %vm821, %v813
        %831 = vst.msk [vmem:[#allocation3 + $0x168] sm:$0xff] %vm821, %v814
        %832 = vst.msk [vmem:[#allocation3 + $0x190] sm:$0xff] %vm821, %v815
        %833 = vst.msk [vmem:[#allocation3 + $0x1b8] sm:$0xff] %vm821, %v816
        %834 = vst.msk [vmem:[#allocation3 + $0x1e0] sm:$0xff] %vm821, %v817
        %835 = vst.msk [vmem:[#allocation3 + $0x208] sm:$0xff] %vm821, %v818
        %836 = vst.msk [vmem:[#allocation3 + $0x230] sm:$0xff] %vm821, %v819
        %837 = vst.msk [vmem:[#allocation3 + $0x258] sm:$0xff] %vm821, %v820
        %v838 = vld [vmem:[#allocation2 + $0x1] sm:$0xff]
        %v839 = vld [vmem:[#allocation2 + $0x9] sm:$0xff]
        %v840 = vld [vmem:[#allocation2 + $0x19] sm:$0xff]
        %v841 = vld [vmem:[#allocation2 + $0x21] sm:$0xff]
        %v842 = vld [vmem:[#allocation2 + $0x31] sm:$0xff]
        %v843 = vld [vmem:[#allocation2 + $0x39] sm:$0xff]
        %v844 = vld [vmem:[#allocation2 + $0x49] sm:$0xff]
        %v845 = vld [vmem:[#allocation2 + $0x51] sm:$0xff]
        %v846 = vld [vmem:[#allocation2 + $0x61] sm:$0xff]
        %v847 = vld [vmem:[#allocation2 + $0x69] sm:$0xff]
        %v848 = vld [vmem:[#allocation2 + $0x79] sm:$0xff]
        %v849 = vld [vmem:[#allocation2 + $0x81] sm:$0xff]
        %v850 = vld [vmem:[#allocation2 + $0x91] sm:$0xff]
        %v851 = vld [vmem:[#allocation2 + $0x99] sm:$0xff]
        %v852 = vld [vmem:[#allocation2 + $0xa9] sm:$0xff]
        %v853 = vld [vmem:[#allocation2 + $0xb1] sm:$0xff]
        %v854 = vld [vmem:[#allocation2 + $0xc1] sm:$0xff]
        %v855 = vld [vmem:[#allocation2 + $0xc9] sm:$0xff]
        %v856 = vld [vmem:[#allocation2 + $0xd9] sm:$0xff]
        %v857 = vld [vmem:[#allocation2 + $0xe1] sm:$0xff]
        %v858 = vld [vmem:[#allocation2 + $0xf1] sm:$0xff]
        %v859 = vld [vmem:[#allocation2 + $0xf9] sm:$0xff]
        %v860 = vld [vmem:[#allocation2 + $0x109] sm:$0xff]
        %v861 = vld [vmem:[#allocation2 + $0x111] sm:$0xff]
        %v862 = vld [vmem:[#allocation2 + $0x121] sm:$0xff]
        %v863 = vld [vmem:[#allocation2 + $0x129] sm:$0xff]
        %v864 = vld [vmem:[#allocation2 + $0x139] sm:$0xff]
        %v865 = vld [vmem:[#allocation2 + $0x141] sm:$0xff]
        %v866 = vld [vmem:[#allocation2 + $0x151] sm:$0xff]
        %v867 = vld [vmem:[#allocation2 + $0x159] sm:$0xff]
        %v868 = vld [vmem:[#allocation2 + $0x169] sm:$0xff]
        %v869 = vld [vmem:[#allocation2 + $0x171] sm:$0xff]
        %v870 = vpack.c.bf16 %v839, %v838
        %v871 = vpack.c.bf16 %v841, %v840
        %v872 = vpack.c.bf16 %v843, %v842
        %v873 = vpack.c.bf16 %v845, %v844
        %v874 = vpack.c.bf16 %v847, %v846
        %v875 = vpack.c.bf16 %v849, %v848
        %v876 = vpack.c.bf16 %v851, %v850
        %v877 = vpack.c.bf16 %v853, %v852
        %v878 = vpack.c.bf16 %v855, %v854
        %v879 = vpack.c.bf16 %v857, %v856
        %v880 = vpack.c.bf16 %v859, %v858
        %v881 = vpack.c.bf16 %v861, %v860
        %v882 = vpack.c.bf16 %v863, %v862
        %v883 = vpack.c.bf16 %v865, %v864
        %v884 = vpack.c.bf16 %v867, %v866
        %v885 = vpack.c.bf16 %v869, %v868
        %902 = vrot.lane.b32.xlu0 %v870, 64
        %v903 = vpop.permute.xlu0 %902
        %904 = vrot.lane.b32.xlu0 %v871, 64
        %v905 = vpop.permute.xlu0 %904
        %906 = vrot.lane.b32.xlu0 %v872, 64
        %v907 = vpop.permute.xlu0 %906
        %908 = vrot.lane.b32.xlu0 %v873, 64
        %v909 = vpop.permute.xlu0 %908
        %910 = vrot.lane.b32.xlu0 %v874, 64
        %v911 = vpop.permute.xlu0 %910
        %912 = vrot.lane.b32.xlu0 %v875, 64
        %v913 = vpop.permute.xlu0 %912
        %914 = vrot.lane.b32.xlu0 %v876, 64
        %v915 = vpop.permute.xlu0 %914
        %916 = vrot.lane.b32.xlu0 %v877, 64
        %v917 = vpop.permute.xlu0 %916
        %918 = vrot.lane.b32.xlu0 %v878, 64
        %v919 = vpop.permute.xlu0 %918
        %920 = vrot.lane.b32.xlu0 %v879, 64
        %v921 = vpop.permute.xlu0 %920
        %922 = vrot.lane.b32.xlu0 %v880, 64
        %v923 = vpop.permute.xlu0 %922
        %924 = vrot.lane.b32.xlu0 %v881, 64
        %v925 = vpop.permute.xlu0 %924
        %926 = vrot.lane.b32.xlu0 %v882, 64
        %v927 = vpop.permute.xlu0 %926
        %928 = vrot.lane.b32.xlu0 %v883, 64
        %v929 = vpop.permute.xlu0 %928
        %930 = vrot.lane.b32.xlu0 %v884, 64
        %v931 = vpop.permute.xlu0 %930
        %932 = vrot.lane.b32.xlu0 %v885, 64
        %v933 = vpop.permute.xlu0 %932
        %vm950 = vcmask 1048064
        %951 = vst.msk [vmem:[#allocation3] sm:$0xff] %vm950, %v903
        %952 = vst.msk [vmem:[#allocation3 + $0x28] sm:$0xff] %vm950, %v905
        %953 = vst.msk [vmem:[#allocation3 + $0x50] sm:$0xff] %vm950, %v907
        %954 = vst.msk [vmem:[#allocation3 + $0x78] sm:$0xff] %vm950, %v909
        %955 = vst.msk [vmem:[#allocation3 + $0xa0] sm:$0xff] %vm950, %v911
        %956 = vst.msk [vmem:[#allocation3 + $0xc8] sm:$0xff] %vm950, %v913
        %957 = vst.msk [vmem:[#allocation3 + $0xf0] sm:$0xff] %vm950, %v915
        %958 = vst.msk [vmem:[#allocation3 + $0x118] sm:$0xff] %vm950, %v917
        %959 = vst.msk [vmem:[#allocation3 + $0x140] sm:$0xff] %vm950, %v919
        %960 = vst.msk [vmem:[#allocation3 + $0x168] sm:$0xff] %vm950, %v921
        %961 = vst.msk [vmem:[#allocation3 + $0x190] sm:$0xff] %vm950, %v923
        %962 = vst.msk [vmem:[#allocation3 + $0x1b8] sm:$0xff] %vm950, %v925
        %963 = vst.msk [vmem:[#allocation3 + $0x1e0] sm:$0xff] %vm950, %v927
        %964 = vst.msk [vmem:[#allocation3 + $0x208] sm:$0xff] %vm950, %v929
        %965 = vst.msk [vmem:[#allocation3 + $0x230] sm:$0xff] %vm950, %v931
        %966 = vst.msk [vmem:[#allocation3 + $0x258] sm:$0xff] %vm950, %v933
        %v967 = vld [vmem:[#allocation2 + $0x2] sm:$0xff]
        %v968 = vld [vmem:[#allocation2 + $0xa] sm:$0xff]
        %v969 = vld [vmem:[#allocation2 + $0x1a] sm:$0xff]
        %v970 = vld [vmem:[#allocation2 + $0x22] sm:$0xff]
        %v971 = vld [vmem:[#allocation2 + $0x32] sm:$0xff]
        %v972 = vld [vmem:[#allocation2 + $0x3a] sm:$0xff]
        %v973 = vld [vmem:[#allocation2 + $0x4a] sm:$0xff]
        %v974 = vld [vmem:[#allocation2 + $0x52] sm:$0xff]
        %v975 = vld [vmem:[#allocation2 + $0x62] sm:$0xff]
        %v976 = vld [vmem:[#allocation2 + $0x6a] sm:$0xff]
        %v977 = vld [vmem:[#allocation2 + $0x7a] sm:$0xff]
        %v978 = vld [vmem:[#allocation2 + $0x82] sm:$0xff]
        %v979 = vld [vmem:[#allocation2 + $0x92] sm:$0xff]
        %v980 = vld [vmem:[#allocation2 + $0x9a] sm:$0xff]
        %v981 = vld [vmem:[#allocation2 + $0xaa] sm:$0xff]
        %v982 = vld [vmem:[#allocation2 + $0xb2] sm:$0xff]
        %v983 = vld [vmem:[#allocation2 + $0xc2] sm:$0xff]
        %v984 = vld [vmem:[#allocation2 + $0xca] sm:$0xff]
        %v985 = vld [vmem:[#allocation2 + $0xda] sm:$0xff]
        %v986 = vld [vmem:[#allocation2 + $0xe2] sm:$0xff]
        %v987 = vld [vmem:[#allocation2 + $0xf2] sm:$0xff]
        %v988 = vld [vmem:[#allocation2 + $0xfa] sm:$0xff]
        %v989 = vld [vmem:[#allocation2 + $0x10a] sm:$0xff]
        %v990 = vld [vmem:[#allocation2 + $0x112] sm:$0xff]
        %v991 = vld [vmem:[#allocation2 + $0x122] sm:$0xff]
        %v992 = vld [vmem:[#allocation2 + $0x12a] sm:$0xff]
        %v993 = vld [vmem:[#allocation2 + $0x13a] sm:$0xff]
        %v994 = vld [vmem:[#allocation2 + $0x142] sm:$0xff]
        %v995 = vld [vmem:[#allocation2 + $0x152] sm:$0xff]
        %v996 = vld [vmem:[#allocation2 + $0x15a] sm:$0xff]
        %v997 = vld [vmem:[#allocation2 + $0x16a] sm:$0xff]
        %v998 = vld [vmem:[#allocation2 + $0x172] sm:$0xff]
        %v999 = vpack.c.bf16 %v968, %v967
        %v1000 = vpack.c.bf16 %v970, %v969
        %v1001 = vpack.c.bf16 %v972, %v971
        %v1002 = vpack.c.bf16 %v974, %v973
        %v1003 = vpack.c.bf16 %v976, %v975
        %v1004 = vpack.c.bf16 %v978, %v977
        %v1005 = vpack.c.bf16 %v980, %v979
        %v1006 = vpack.c.bf16 %v982, %v981
        %v1007 = vpack.c.bf16 %v984, %v983
        %v1008 = vpack.c.bf16 %v986, %v985
        %v1009 = vpack.c.bf16 %v988, %v987
        %v1010 = vpack.c.bf16 %v990, %v989
        %v1011 = vpack.c.bf16 %v992, %v991
        %v1012 = vpack.c.bf16 %v994, %v993
        %v1013 = vpack.c.bf16 %v996, %v995
        %v1014 = vpack.c.bf16 %v998, %v997
        %1015 = vst.msk [vmem:[#allocation3 + $0x8] sm:$0xff] %vm821, %v999
        %1016 = vst.msk [vmem:[#allocation3 + $0x30] sm:$0xff] %vm821, %v1000
        %1017 = vst.msk [vmem:[#allocation3 + $0x58] sm:$0xff] %vm821, %v1001
        %1018 = vst.msk [vmem:[#allocation3 + $0x80] sm:$0xff] %vm821, %v1002
        %1019 = vst.msk [vmem:[#allocation3 + $0xa8] sm:$0xff] %vm821, %v1003
        %1020 = vst.msk [vmem:[#allocation3 + $0xd0] sm:$0xff] %vm821, %v1004
        %1021 = vst.msk [vmem:[#allocation3 + $0xf8] sm:$0xff] %vm821, %v1005
        %1022 = vst.msk [vmem:[#allocation3 + $0x120] sm:$0xff] %vm821, %v1006
        %1023 = vst.msk [vmem:[#allocation3 + $0x148] sm:$0xff] %vm821, %v1007
        %1024 = vst.msk [vmem:[#allocation3 + $0x170] sm:$0xff] %vm821, %v1008
        %1025 = vst.msk [vmem:[#allocation3 + $0x198] sm:$0xff] %vm821, %v1009
        %1026 = vst.msk [vmem:[#allocation3 + $0x1c0] sm:$0xff] %vm821, %v1010
        %1027 = vst.msk [vmem:[#allocation3 + $0x1e8] sm:$0xff] %vm821, %v1011
        %1028 = vst.msk [vmem:[#allocation3 + $0x210] sm:$0xff] %vm821, %v1012
        %1029 = vst.msk [vmem:[#allocation3 + $0x238] sm:$0xff] %vm821, %v1013
        %1030 = vst.msk [vmem:[#allocation3 + $0x260] sm:$0xff] %vm821, %v1014
        %v1031 = vld [vmem:[%s739] sm:$0xff]
        %v1032 = vld [vmem:[%s739 + $0x8] sm:$0xff]
        %v1033 = vld [vmem:[%s739 + $0x18] sm:$0xff]
        %v1034 = vld [vmem:[%s739 + $0x20] sm:$0xff]
        %v1035 = vld [vmem:[%s739 + $0x30] sm:$0xff]
        %v1036 = vld [vmem:[%s739 + $0x38] sm:$0xff]
        %v1037 = vld [vmem:[%s739 + $0x48] sm:$0xff]
        %v1038 = vld [vmem:[%s739 + $0x50] sm:$0xff]
        %v1039 = vld [vmem:[%s739 + $0x60] sm:$0xff]
        %v1040 = vld [vmem:[%s739 + $0x68] sm:$0xff]
        %v1041 = vld [vmem:[%s739 + $0x78] sm:$0xff]
        %v1042 = vld [vmem:[%s739 + $0x80] sm:$0xff]
        %v1043 = vld [vmem:[%s739 + $0x90] sm:$0xff]
        %v1044 = vld [vmem:[%s739 + $0x98] sm:$0xff]
        %v1045 = vld [vmem:[%s739 + $0xa8] sm:$0xff]
        %v1046 = vld [vmem:[%s739 + $0xb0] sm:$0xff]
        %v1047 = vld [vmem:[%s739 + $0xc0] sm:$0xff]
        %v1048 = vld [vmem:[%s739 + $0xc8] sm:$0xff]
        %v1049 = vld [vmem:[%s739 + $0xd8] sm:$0xff]
        %v1050 = vld [vmem:[%s739 + $0xe0] sm:$0xff]
        %v1051 = vld [vmem:[%s739 + $0xf0] sm:$0xff]
        %v1052 = vld [vmem:[%s739 + $0xf8] sm:$0xff]
        %v1053 = vld [vmem:[%s739 + $0x108] sm:$0xff]
        %v1054 = vld [vmem:[%s739 + $0x110] sm:$0xff]
        %v1055 = vld [vmem:[%s739 + $0x120] sm:$0xff]
        %v1056 = vld [vmem:[%s739 + $0x128] sm:$0xff]
        %v1057 = vld [vmem:[%s739 + $0x138] sm:$0xff]
        %v1058 = vld [vmem:[%s739 + $0x140] sm:$0xff]
        %v1059 = vld [vmem:[%s739 + $0x150] sm:$0xff]
        %v1060 = vld [vmem:[%s739 + $0x158] sm:$0xff]
        %v1061 = vld [vmem:[%s739 + $0x168] sm:$0xff]
        %v1062 = vld [vmem:[%s739 + $0x170] sm:$0xff]
        %v1063 = vpack.c.bf16 %v1032, %v1031
        %v1064 = vpack.c.bf16 %v1034, %v1033
        %v1065 = vpack.c.bf16 %v1036, %v1035
        %v1066 = vpack.c.bf16 %v1038, %v1037
        %v1067 = vpack.c.bf16 %v1040, %v1039
        %v1068 = vpack.c.bf16 %v1042, %v1041
        %v1069 = vpack.c.bf16 %v1044, %v1043
        %v1070 = vpack.c.bf16 %v1046, %v1045
        %v1071 = vpack.c.bf16 %v1048, %v1047
        %v1072 = vpack.c.bf16 %v1050, %v1049
        %v1073 = vpack.c.bf16 %v1052, %v1051
        %v1074 = vpack.c.bf16 %v1054, %v1053
        %v1075 = vpack.c.bf16 %v1056, %v1055
        %v1076 = vpack.c.bf16 %v1058, %v1057
        %v1077 = vpack.c.bf16 %v1060, %v1059
        %v1078 = vpack.c.bf16 %v1062, %v1061
        %1095 = vrot.lane.b32.xlu0 %v1063, 64
        %v1096 = vpop.permute.xlu0 %1095
        %1097 = vrot.lane.b32.xlu0 %v1064, 64
        %v1098 = vpop.permute.xlu0 %1097
        %1099 = vrot.lane.b32.xlu0 %v1065, 64
        %v1100 = vpop.permute.xlu0 %1099
        %1101 = vrot.lane.b32.xlu0 %v1066, 64
        %v1102 = vpop.permute.xlu0 %1101
        %1103 = vrot.lane.b32.xlu0 %v1067, 64
        %v1104 = vpop.permute.xlu0 %1103
        %1105 = vrot.lane.b32.xlu0 %v1068, 64
        %v1106 = vpop.permute.xlu0 %1105
        %1107 = vrot.lane.b32.xlu0 %v1069, 64
        %v1108 = vpop.permute.xlu0 %1107
        %1109 = vrot.lane.b32.xlu0 %v1070, 64
        %v1110 = vpop.permute.xlu0 %1109
        %1111 = vrot.lane.b32.xlu0 %v1071, 64
        %v1112 = vpop.permute.xlu0 %1111
        %1113 = vrot.lane.b32.xlu0 %v1072, 64
        %v1114 = vpop.permute.xlu0 %1113
        %1115 = vrot.lane.b32.xlu0 %v1073, 64
        %v1116 = vpop.permute.xlu0 %1115
        %1117 = vrot.lane.b32.xlu0 %v1074, 64
        %v1118 = vpop.permute.xlu0 %1117
        %1119 = vrot.lane.b32.xlu0 %v1075, 64
        %v1120 = vpop.permute.xlu0 %1119
        %1121 = vrot.lane.b32.xlu0 %v1076, 64
        %v1122 = vpop.permute.xlu0 %1121
        %1123 = vrot.lane.b32.xlu0 %v1077, 64
        %v1124 = vpop.permute.xlu0 %1123
        %1125 = vrot.lane.b32.xlu0 %v1078, 64
        %v1126 = vpop.permute.xlu0 %1125
        %1143 = vst.msk [vmem:[#allocation3 + $0x8] sm:$0xff] %vm950, %v1096
        %1144 = vst.msk [vmem:[#allocation3 + $0x30] sm:$0xff] %vm950, %v1098
        %1145 = vst.msk [vmem:[#allocation3 + $0x58] sm:$0xff] %vm950, %v1100
        %1146 = vst.msk [vmem:[#allocation3 + $0x80] sm:$0xff] %vm950, %v1102
        %1147 = vst.msk [vmem:[#allocation3 + $0xa8] sm:$0xff] %vm950, %v1104
        %1148 = vst.msk [vmem:[#allocation3 + $0xd0] sm:$0xff] %vm950, %v1106
        %1149 = vst.msk [vmem:[#allocation3 + $0xf8] sm:$0xff] %vm950, %v1108
        %1150 = vst.msk [vmem:[#allocation3 + $0x120] sm:$0xff] %vm950, %v1110
        %1151 = vst.msk [vmem:[#allocation3 + $0x148] sm:$0xff] %vm950, %v1112
        %1152 = vst.msk [vmem:[#allocation3 + $0x170] sm:$0xff] %vm950, %v1114
        %1153 = vst.msk [vmem:[#allocation3 + $0x198] sm:$0xff] %vm950, %v1116
        %1154 = vst.msk [vmem:[#allocation3 + $0x1c0] sm:$0xff] %vm950, %v1118
        %1155 = vst.msk [vmem:[#allocation3 + $0x1e8] sm:$0xff] %vm950, %v1120
        %1156 = vst.msk [vmem:[#allocation3 + $0x210] sm:$0xff] %vm950, %v1122
        %1157 = vst.msk [vmem:[#allocation3 + $0x238] sm:$0xff] %vm950, %v1124
        %1158 = vst.msk [vmem:[#allocation3 + $0x260] sm:$0xff] %vm950, %v1126
        %v1159 = vld [vmem:[%s739 + $0x1] sm:$0xff]
        %v1160 = vld [vmem:[%s739 + $0x9] sm:$0xff]
        %v1161 = vld [vmem:[%s739 + $0x19] sm:$0xff]
        %v1162 = vld [vmem:[%s739 + $0x21] sm:$0xff]
        %v1163 = vld [vmem:[%s739 + $0x31] sm:$0xff]
        %v1164 = vld [vmem:[%s739 + $0x39] sm:$0xff]
        %v1165 = vld [vmem:[%s739 + $0x49] sm:$0xff]
        %v1166 = vld [vmem:[%s739 + $0x51] sm:$0xff]
        %v1167 = vld [vmem:[%s739 + $0x61] sm:$0xff]
        %v1168 = vld [vmem:[%s739 + $0x69] sm:$0xff]
        %v1169 = vld [vmem:[%s739 + $0x79] sm:$0xff]
        %v1170 = vld [vmem:[%s739 + $0x81] sm:$0xff]
        %v1171 = vld [vmem:[%s739 + $0x91] sm:$0xff]
        %v1172 = vld [vmem:[%s739 + $0x99] sm:$0xff]
        %v1173 = vld [vmem:[%s739 + $0xa9] sm:$0xff]
        %v1174 = vld [vmem:[%s739 + $0xb1] sm:$0xff]
        %v1175 = vld [vmem:[%s739 + $0xc1] sm:$0xff]
        %v1176 = vld [vmem:[%s739 + $0xc9] sm:$0xff]
        %v1177 = vld [vmem:[%s739 + $0xd9] sm:$0xff]
        %v1178 = vld [vmem:[%s739 + $0xe1] sm:$0xff]
        %v1179 = vld [vmem:[%s739 + $0xf1] sm:$0xff]
        %v1180 = vld [vmem:[%s739 + $0xf9] sm:$0xff]
        %v1181 = vld [vmem:[%s739 + $0x109] sm:$0xff]
        %v1182 = vld [vmem:[%s739 + $0x111] sm:$0xff]
        %v1183 = vld [vmem:[%s739 + $0x121] sm:$0xff]
        %v1184 = vld [vmem:[%s739 + $0x129] sm:$0xff]
        %v1185 = vld [vmem:[%s739 + $0x139] sm:$0xff]
        %v1186 = vld [vmem:[%s739 + $0x141] sm:$0xff]
        %v1187 = vld [vmem:[%s739 + $0x151] sm:$0xff]
        %v1188 = vld [vmem:[%s739 + $0x159] sm:$0xff]
        %v1189 = vld [vmem:[%s739 + $0x169] sm:$0xff]
        %v1190 = vld [vmem:[%s739 + $0x171] sm:$0xff]
        %v1191 = vpack.c.bf16 %v1160, %v1159
        %v1192 = vpack.c.bf16 %v1162, %v1161
        %v1193 = vpack.c.bf16 %v1164, %v1163
        %v1194 = vpack.c.bf16 %v1166, %v1165
        %v1195 = vpack.c.bf16 %v1168, %v1167
        %v1196 = vpack.c.bf16 %v1170, %v1169
        %v1197 = vpack.c.bf16 %v1172, %v1171
        %v1198 = vpack.c.bf16 %v1174, %v1173
        %v1199 = vpack.c.bf16 %v1176, %v1175
        %v1200 = vpack.c.bf16 %v1178, %v1177
        %v1201 = vpack.c.bf16 %v1180, %v1179
        %v1202 = vpack.c.bf16 %v1182, %v1181
        %v1203 = vpack.c.bf16 %v1184, %v1183
        %v1204 = vpack.c.bf16 %v1186, %v1185
        %v1205 = vpack.c.bf16 %v1188, %v1187
        %v1206 = vpack.c.bf16 %v1190, %v1189
        %1207 = vst.msk [vmem:[#allocation3 + $0x10] sm:$0xff] %vm821, %v1191
        %1208 = vst.msk [vmem:[#allocation3 + $0x38] sm:$0xff] %vm821, %v1192
        %1209 = vst.msk [vmem:[#allocation3 + $0x60] sm:$0xff] %vm821, %v1193
        %1210 = vst.msk [vmem:[#allocation3 + $0x88] sm:$0xff] %vm821, %v1194
        %1211 = vst.msk [vmem:[#allocation3 + $0xb0] sm:$0xff] %vm821, %v1195
        %1212 = vst.msk [vmem:[#allocation3 + $0xd8] sm:$0xff] %vm821, %v1196
        %1213 = vst.msk [vmem:[#allocation3 + $0x100] sm:$0xff] %vm821, %v1197
        %1214 = vst.msk [vmem:[#allocation3 + $0x128] sm:$0xff] %vm821, %v1198
        %1215 = vst.msk [vmem:[#allocation3 + $0x150] sm:$0xff] %vm821, %v1199
        %1216 = vst.msk [vmem:[#allocation3 + $0x178] sm:$0xff] %vm821, %v1200
        %1217 = vst.msk [vmem:[#allocation3 + $0x1a0] sm:$0xff] %vm821, %v1201
        %1218 = vst.msk [vmem:[#allocation3 + $0x1c8] sm:$0xff] %vm821, %v1202
        %1219 = vst.msk [vmem:[#allocation3 + $0x1f0] sm:$0xff] %vm821, %v1203
        %1220 = vst.msk [vmem:[#allocation3 + $0x218] sm:$0xff] %vm821, %v1204
        %1221 = vst.msk [vmem:[#allocation3 + $0x240] sm:$0xff] %vm821, %v1205
        %1222 = vst.msk [vmem:[#allocation3 + $0x268] sm:$0xff] %vm821, %v1206
        %v1223 = vld [vmem:[%s739 + $0x2] sm:$0xff]
        %v1224 = vld [vmem:[%s739 + $0xa] sm:$0xff]
        %v1225 = vld [vmem:[%s739 + $0x1a] sm:$0xff]
        %v1226 = vld [vmem:[%s739 + $0x22] sm:$0xff]
        %v1227 = vld [vmem:[%s739 + $0x32] sm:$0xff]
        %v1228 = vld [vmem:[%s739 + $0x3a] sm:$0xff]
        %v1229 = vld [vmem:[%s739 + $0x4a] sm:$0xff]
        %v1230 = vld [vmem:[%s739 + $0x52] sm:$0xff]
        %v1231 = vld [vmem:[%s739 + $0x62] sm:$0xff]
        %v1232 = vld [vmem:[%s739 + $0x6a] sm:$0xff]
        %v1233 = vld [vmem:[%s739 + $0x7a] sm:$0xff]
        %v1234 = vld [vmem:[%s739 + $0x82] sm:$0xff]
        %v1235 = vld [vmem:[%s739 + $0x92] sm:$0xff]
        %v1236 = vld [vmem:[%s739 + $0x9a] sm:$0xff]
        %v1237 = vld [vmem:[%s739 + $0xaa] sm:$0xff]
        %v1238 = vld [vmem:[%s739 + $0xb2] sm:$0xff]
        %v1239 = vld [vmem:[%s739 + $0xc2] sm:$0xff]
        %v1240 = vld [vmem:[%s739 + $0xca] sm:$0xff]
        %v1241 = vld [vmem:[%s739 + $0xda] sm:$0xff]
        %v1242 = vld [vmem:[%s739 + $0xe2] sm:$0xff]
        %v1243 = vld [vmem:[%s739 + $0xf2] sm:$0xff]
        %v1244 = vld [vmem:[%s739 + $0xfa] sm:$0xff]
        %v1245 = vld [vmem:[%s739 + $0x10a] sm:$0xff]
        %v1246 = vld [vmem:[%s739 + $0x112] sm:$0xff]
        %v1247 = vld [vmem:[%s739 + $0x122] sm:$0xff]
        %v1248 = vld [vmem:[%s739 + $0x12a] sm:$0xff]
        %v1249 = vld [vmem:[%s739 + $0x13a] sm:$0xff]
        %v1250 = vld [vmem:[%s739 + $0x142] sm:$0xff]
        %v1251 = vld [vmem:[%s739 + $0x152] sm:$0xff]
        %v1252 = vld [vmem:[%s739 + $0x15a] sm:$0xff]
        %v1253 = vld [vmem:[%s739 + $0x16a] sm:$0xff]
        %v1254 = vld [vmem:[%s739 + $0x172] sm:$0xff]
        %v1255 = vpack.c.bf16 %v1224, %v1223
        %v1256 = vpack.c.bf16 %v1226, %v1225
        %v1257 = vpack.c.bf16 %v1228, %v1227
        %v1258 = vpack.c.bf16 %v1230, %v1229
        %v1259 = vpack.c.bf16 %v1232, %v1231
        %v1260 = vpack.c.bf16 %v1234, %v1233
        %v1261 = vpack.c.bf16 %v1236, %v1235
        %v1262 = vpack.c.bf16 %v1238, %v1237
        %v1263 = vpack.c.bf16 %v1240, %v1239
        %v1264 = vpack.c.bf16 %v1242, %v1241
        %v1265 = vpack.c.bf16 %v1244, %v1243
        %v1266 = vpack.c.bf16 %v1246, %v1245
        %v1267 = vpack.c.bf16 %v1248, %v1247
        %v1268 = vpack.c.bf16 %v1250, %v1249
        %v1269 = vpack.c.bf16 %v1252, %v1251
        %v1270 = vpack.c.bf16 %v1254, %v1253
        %1287 = vrot.lane.b32.xlu0 %v1255, 64
        %v1288 = vpop.permute.xlu0 %1287
        %1289 = vrot.lane.b32.xlu0 %v1256, 64
        %v1290 = vpop.permute.xlu0 %1289
        %1291 = vrot.lane.b32.xlu0 %v1257, 64
        %v1292 = vpop.permute.xlu0 %1291
        %1293 = vrot.lane.b32.xlu0 %v1258, 64
        %v1294 = vpop.permute.xlu0 %1293
        %1295 = vrot.lane.b32.xlu0 %v1259, 64
        %v1296 = vpop.permute.xlu0 %1295
        %1297 = vrot.lane.b32.xlu0 %v1260, 64
        %v1298 = vpop.permute.xlu0 %1297
        %1299 = vrot.lane.b32.xlu0 %v1261, 64
        %v1300 = vpop.permute.xlu0 %1299
        %1301 = vrot.lane.b32.xlu0 %v1262, 64
        %v1302 = vpop.permute.xlu0 %1301
        %1303 = vrot.lane.b32.xlu0 %v1263, 64
        %v1304 = vpop.permute.xlu0 %1303
        %1305 = vrot.lane.b32.xlu0 %v1264, 64
        %v1306 = vpop.permute.xlu0 %1305
        %1307 = vrot.lane.b32.xlu0 %v1265, 64
        %v1308 = vpop.permute.xlu0 %1307
        %1309 = vrot.lane.b32.xlu0 %v1266, 64
        %v1310 = vpop.permute.xlu0 %1309
        %1311 = vrot.lane.b32.xlu0 %v1267, 64
        %v1312 = vpop.permute.xlu0 %1311
        %1313 = vrot.lane.b32.xlu0 %v1268, 64
        %v1314 = vpop.permute.xlu0 %1313
        %1315 = vrot.lane.b32.xlu0 %v1269, 64
        %v1316 = vpop.permute.xlu0 %1315
        %1317 = vrot.lane.b32.xlu0 %v1270, 64
        %v1318 = vpop.permute.xlu0 %1317
        %1335 = vst.msk [vmem:[#allocation3 + $0x10] sm:$0xff] %vm950, %v1288
        %1336 = vst.msk [vmem:[#allocation3 + $0x38] sm:$0xff] %vm950, %v1290
        %1337 = vst.msk [vmem:[#allocation3 + $0x60] sm:$0xff] %vm950, %v1292
        %1338 = vst.msk [vmem:[#allocation3 + $0x88] sm:$0xff] %vm950, %v1294
        %1339 = vst.msk [vmem:[#allocation3 + $0xb0] sm:$0xff] %vm950, %v1296
        %1340 = vst.msk [vmem:[#allocation3 + $0xd8] sm:$0xff] %vm950, %v1298
        %1341 = vst.msk [vmem:[#allocation3 + $0x100] sm:$0xff] %vm950, %v1300
        %1342 = vst.msk [vmem:[#allocation3 + $0x128] sm:$0xff] %vm950, %v1302
        %1343 = vst.msk [vmem:[#allocation3 + $0x150] sm:$0xff] %vm950, %v1304
        %1344 = vst.msk [vmem:[#allocation3 + $0x178] sm:$0xff] %vm950, %v1306
        %1345 = vst.msk [vmem:[#allocation3 + $0x1a0] sm:$0xff] %vm950, %v1308
        %1346 = vst.msk [vmem:[#allocation3 + $0x1c8] sm:$0xff] %vm950, %v1310
        %1347 = vst.msk [vmem:[#allocation3 + $0x1f0] sm:$0xff] %vm950, %v1312
        %1348 = vst.msk [vmem:[#allocation3 + $0x218] sm:$0xff] %vm950, %v1314
        %1349 = vst.msk [vmem:[#allocation3 + $0x240] sm:$0xff] %vm950, %v1316
        %1350 = vst.msk [vmem:[#allocation3 + $0x268] sm:$0xff] %vm950, %v1318
        %s1351 = scalar_lea.vmem [#allocation2], 48
        %v1352 = vld [vmem:[%s1351] sm:$0xff]
        %v1353 = vld [vmem:[%s1351 + $0x8] sm:$0xff]
        %v1354 = vld [vmem:[%s1351 + $0x18] sm:$0xff]
        %v1355 = vld [vmem:[%s1351 + $0x20] sm:$0xff]
        %v1356 = vld [vmem:[%s1351 + $0x30] sm:$0xff]
        %v1357 = vld [vmem:[%s1351 + $0x38] sm:$0xff]
        %v1358 = vld [vmem:[%s1351 + $0x48] sm:$0xff]
        %v1359 = vld [vmem:[%s1351 + $0x50] sm:$0xff]
        %v1360 = vld [vmem:[%s1351 + $0x60] sm:$0xff]
        %v1361 = vld [vmem:[%s1351 + $0x68] sm:$0xff]
        %v1362 = vld [vmem:[%s1351 + $0x78] sm:$0xff]
        %v1363 = vld [vmem:[%s1351 + $0x80] sm:$0xff]
        %v1364 = vld [vmem:[%s1351 + $0x90] sm:$0xff]
        %v1365 = vld [vmem:[%s1351 + $0x98] sm:$0xff]
        %v1366 = vld [vmem:[%s1351 + $0xa8] sm:$0xff]
        %v1367 = vld [vmem:[%s1351 + $0xb0] sm:$0xff]
        %v1368 = vld [vmem:[%s1351 + $0xc0] sm:$0xff]
        %v1369 = vld [vmem:[%s1351 + $0xc8] sm:$0xff]
        %v1370 = vld [vmem:[%s1351 + $0xd8] sm:$0xff]
        %v1371 = vld [vmem:[%s1351 + $0xe0] sm:$0xff]
        %v1372 = vld [vmem:[%s1351 + $0xf0] sm:$0xff]
        %v1373 = vld [vmem:[%s1351 + $0xf8] sm:$0xff]
        %v1374 = vld [vmem:[%s1351 + $0x108] sm:$0xff]
        %v1375 = vld [vmem:[%s1351 + $0x110] sm:$0xff]
        %v1376 = vld [vmem:[%s1351 + $0x120] sm:$0xff]
        %v1377 = vld [vmem:[%s1351 + $0x128] sm:$0xff]
        %v1378 = vld [vmem:[%s1351 + $0x138] sm:$0xff]
        %v1379 = vld [vmem:[%s1351 + $0x140] sm:$0xff]
        %v1380 = vld [vmem:[%s1351 + $0x150] sm:$0xff]
        %v1381 = vld [vmem:[%s1351 + $0x158] sm:$0xff]
        %v1382 = vld [vmem:[%s1351 + $0x168] sm:$0xff]
        %v1383 = vld [vmem:[%s1351 + $0x170] sm:$0xff]
        %v1384 = vpack.c.bf16 %v1353, %v1352
        %v1385 = vpack.c.bf16 %v1355, %v1354
        %v1386 = vpack.c.bf16 %v1357, %v1356
        %v1387 = vpack.c.bf16 %v1359, %v1358
        %v1388 = vpack.c.bf16 %v1361, %v1360
        %v1389 = vpack.c.bf16 %v1363, %v1362
        %v1390 = vpack.c.bf16 %v1365, %v1364
        %v1391 = vpack.c.bf16 %v1367, %v1366
        %v1392 = vpack.c.bf16 %v1369, %v1368
        %v1393 = vpack.c.bf16 %v1371, %v1370
        %v1394 = vpack.c.bf16 %v1373, %v1372
        %v1395 = vpack.c.bf16 %v1375, %v1374
        %v1396 = vpack.c.bf16 %v1377, %v1376
        %v1397 = vpack.c.bf16 %v1379, %v1378
        %v1398 = vpack.c.bf16 %v1381, %v1380
        %v1399 = vpack.c.bf16 %v1383, %v1382
        %1400 = vst.msk [vmem:[#allocation3 + $0x18] sm:$0xff] %vm821, %v1384
        %1401 = vst.msk [vmem:[#allocation3 + $0x40] sm:$0xff] %vm821, %v1385
        %1402 = vst.msk [vmem:[#allocation3 + $0x68] sm:$0xff] %vm821, %v1386
        %1403 = vst.msk [vmem:[#allocation3 + $0x90] sm:$0xff] %vm821, %v1387
        %1404 = vst.msk [vmem:[#allocation3 + $0xb8] sm:$0xff] %vm821, %v1388
        %1405 = vst.msk [vmem:[#allocation3 + $0xe0] sm:$0xff] %vm821, %v1389
        %1406 = vst.msk [vmem:[#allocation3 + $0x108] sm:$0xff] %vm821, %v1390
        %1407 = vst.msk [vmem:[#allocation3 + $0x130] sm:$0xff] %vm821, %v1391
        %1408 = vst.msk [vmem:[#allocation3 + $0x158] sm:$0xff] %vm821, %v1392
        %1409 = vst.msk [vmem:[#allocation3 + $0x180] sm:$0xff] %vm821, %v1393
        %1410 = vst.msk [vmem:[#allocation3 + $0x1a8] sm:$0xff] %vm821, %v1394
        %1411 = vst.msk [vmem:[#allocation3 + $0x1d0] sm:$0xff] %vm821, %v1395
        %1412 = vst.msk [vmem:[#allocation3 + $0x1f8] sm:$0xff] %vm821, %v1396
        %1413 = vst.msk [vmem:[#allocation3 + $0x220] sm:$0xff] %vm821, %v1397
        %1414 = vst.msk [vmem:[#allocation3 + $0x248] sm:$0xff] %vm821, %v1398
        %1415 = vst.msk [vmem:[#allocation3 + $0x270] sm:$0xff] %vm821, %v1399
        %v1416 = vld [vmem:[%s1351 + $0x1] sm:$0xff]
        %v1417 = vld [vmem:[%s1351 + $0x9] sm:$0xff]
        %v1418 = vld [vmem:[%s1351 + $0x19] sm:$0xff]
        %v1419 = vld [vmem:[%s1351 + $0x21] sm:$0xff]
        %v1420 = vld [vmem:[%s1351 + $0x31] sm:$0xff]
        %v1421 = vld [vmem:[%s1351 + $0x39] sm:$0xff]
        %v1422 = vld [vmem:[%s1351 + $0x49] sm:$0xff]
        %v1423 = vld [vmem:[%s1351 + $0x51] sm:$0xff]
        %v1424 = vld [vmem:[%s1351 + $0x61] sm:$0xff]
        %v1425 = vld [vmem:[%s1351 + $0x69] sm:$0xff]
        %v1426 = vld [vmem:[%s1351 + $0x79] sm:$0xff]
        %v1427 = vld [vmem:[%s1351 + $0x81] sm:$0xff]
        %v1428 = vld [vmem:[%s1351 + $0x91] sm:$0xff]
        %v1429 = vld [vmem:[%s1351 + $0x99] sm:$0xff]
        %v1430 = vld [vmem:[%s1351 + $0xa9] sm:$0xff]
        %v1431 = vld [vmem:[%s1351 + $0xb1] sm:$0xff]
        %v1432 = vld [vmem:[%s1351 + $0xc1] sm:$0xff]
        %v1433 = vld [vmem:[%s1351 + $0xc9] sm:$0xff]
        %v1434 = vld [vmem:[%s1351 + $0xd9] sm:$0xff]
        %v1435 = vld [vmem:[%s1351 + $0xe1] sm:$0xff]
        %v1436 = vld [vmem:[%s1351 + $0xf1] sm:$0xff]
        %v1437 = vld [vmem:[%s1351 + $0xf9] sm:$0xff]
        %v1438 = vld [vmem:[%s1351 + $0x109] sm:$0xff]
        %v1439 = vld [vmem:[%s1351 + $0x111] sm:$0xff]
        %v1440 = vld [vmem:[%s1351 + $0x121] sm:$0xff]
        %v1441 = vld [vmem:[%s1351 + $0x129] sm:$0xff]
        %v1442 = vld [vmem:[%s1351 + $0x139] sm:$0xff]
        %v1443 = vld [vmem:[%s1351 + $0x141] sm:$0xff]
        %v1444 = vld [vmem:[%s1351 + $0x151] sm:$0xff]
        %v1445 = vld [vmem:[%s1351 + $0x159] sm:$0xff]
        %v1446 = vld [vmem:[%s1351 + $0x169] sm:$0xff]
        %v1447 = vld [vmem:[%s1351 + $0x171] sm:$0xff]
        %v1448 = vpack.c.bf16 %v1417, %v1416
        %v1449 = vpack.c.bf16 %v1419, %v1418
        %v1450 = vpack.c.bf16 %v1421, %v1420
        %v1451 = vpack.c.bf16 %v1423, %v1422
        %v1452 = vpack.c.bf16 %v1425, %v1424
        %v1453 = vpack.c.bf16 %v1427, %v1426
        %v1454 = vpack.c.bf16 %v1429, %v1428
        %v1455 = vpack.c.bf16 %v1431, %v1430
        %v1456 = vpack.c.bf16 %v1433, %v1432
        %v1457 = vpack.c.bf16 %v1435, %v1434
        %v1458 = vpack.c.bf16 %v1437, %v1436
        %v1459 = vpack.c.bf16 %v1439, %v1438
        %v1460 = vpack.c.bf16 %v1441, %v1440
        %v1461 = vpack.c.bf16 %v1443, %v1442
        %v1462 = vpack.c.bf16 %v1445, %v1444
        %v1463 = vpack.c.bf16 %v1447, %v1446
        %1480 = vrot.lane.b32.xlu0 %v1448, 64
        %v1481 = vpop.permute.xlu0 %1480
        %1482 = vrot.lane.b32.xlu0 %v1449, 64
        %v1483 = vpop.permute.xlu0 %1482
        %1484 = vrot.lane.b32.xlu0 %v1450, 64
        %v1485 = vpop.permute.xlu0 %1484
        %1486 = vrot.lane.b32.xlu0 %v1451, 64
        %v1487 = vpop.permute.xlu0 %1486
        %1488 = vrot.lane.b32.xlu0 %v1452, 64
        %v1489 = vpop.permute.xlu0 %1488
        %1490 = vrot.lane.b32.xlu0 %v1453, 64
        %v1491 = vpop.permute.xlu0 %1490
        %1492 = vrot.lane.b32.xlu0 %v1454, 64
        %v1493 = vpop.permute.xlu0 %1492
        %1494 = vrot.lane.b32.xlu0 %v1455, 64
        %v1495 = vpop.permute.xlu0 %1494
        %1496 = vrot.lane.b32.xlu0 %v1456, 64
        %v1497 = vpop.permute.xlu0 %1496
        %1498 = vrot.lane.b32.xlu0 %v1457, 64
        %v1499 = vpop.permute.xlu0 %1498
        %1500 = vrot.lane.b32.xlu0 %v1458, 64
        %v1501 = vpop.permute.xlu0 %1500
        %1502 = vrot.lane.b32.xlu0 %v1459, 64
        %v1503 = vpop.permute.xlu0 %1502
        %1504 = vrot.lane.b32.xlu0 %v1460, 64
        %v1505 = vpop.permute.xlu0 %1504
        %1506 = vrot.lane.b32.xlu0 %v1461, 64
        %v1507 = vpop.permute.xlu0 %1506
        %1508 = vrot.lane.b32.xlu0 %v1462, 64
        %v1509 = vpop.permute.xlu0 %1508
        %1510 = vrot.lane.b32.xlu0 %v1463, 64
        %v1511 = vpop.permute.xlu0 %1510
        %1528 = vst.msk [vmem:[#allocation3 + $0x18] sm:$0xff] %vm950, %v1481
        %1529 = vst.msk [vmem:[#allocation3 + $0x40] sm:$0xff] %vm950, %v1483
        %1530 = vst.msk [vmem:[#allocation3 + $0x68] sm:$0xff] %vm950, %v1485
        %1531 = vst.msk [vmem:[#allocation3 + $0x90] sm:$0xff] %vm950, %v1487
        %1532 = vst.msk [vmem:[#allocation3 + $0xb8] sm:$0xff] %vm950, %v1489
        %1533 = vst.msk [vmem:[#allocation3 + $0xe0] sm:$0xff] %vm950, %v1491
        %1534 = vst.msk [vmem:[#allocation3 + $0x108] sm:$0xff] %vm950, %v1493
        %1535 = vst.msk [vmem:[#allocation3 + $0x130] sm:$0xff] %vm950, %v1495
        %1536 = vst.msk [vmem:[#allocation3 + $0x158] sm:$0xff] %vm950, %v1497
        %1537 = vst.msk [vmem:[#allocation3 + $0x180] sm:$0xff] %vm950, %v1499
        %1538 = vst.msk [vmem:[#allocation3 + $0x1a8] sm:$0xff] %vm950, %v1501
        %1539 = vst.msk [vmem:[#allocation3 + $0x1d0] sm:$0xff] %vm950, %v1503
        %1540 = vst.msk [vmem:[#allocation3 + $0x1f8] sm:$0xff] %vm950, %v1505
        %1541 = vst.msk [vmem:[#allocation3 + $0x220] sm:$0xff] %vm950, %v1507
        %1542 = vst.msk [vmem:[#allocation3 + $0x248] sm:$0xff] %vm950, %v1509
        %1543 = vst.msk [vmem:[#allocation3 + $0x270] sm:$0xff] %vm950, %v1511
        %v1544 = vld [vmem:[%s1351 + $0x2] sm:$0xff]
        %v1545 = vld [vmem:[%s1351 + $0xa] sm:$0xff]
        %v1546 = vld [vmem:[%s1351 + $0x1a] sm:$0xff]
        %v1547 = vld [vmem:[%s1351 + $0x22] sm:$0xff]
        %v1548 = vld [vmem:[%s1351 + $0x32] sm:$0xff]
        %v1549 = vld [vmem:[%s1351 + $0x3a] sm:$0xff]
        %v1550 = vld [vmem:[%s1351 + $0x4a] sm:$0xff]
        %v1551 = vld [vmem:[%s1351 + $0x52] sm:$0xff]
        %v1552 = vld [vmem:[%s1351 + $0x62] sm:$0xff]
        %v1553 = vld [vmem:[%s1351 + $0x6a] sm:$0xff]
        %v1554 = vld [vmem:[%s1351 + $0x7a] sm:$0xff]
        %v1555 = vld [vmem:[%s1351 + $0x82] sm:$0xff]
        %v1556 = vld [vmem:[%s1351 + $0x92] sm:$0xff]
        %v1557 = vld [vmem:[%s1351 + $0x9a] sm:$0xff]
        %v1558 = vld [vmem:[%s1351 + $0xaa] sm:$0xff]
        %v1559 = vld [vmem:[%s1351 + $0xb2] sm:$0xff]
        %v1560 = vld [vmem:[%s1351 + $0xc2] sm:$0xff]
        %v1561 = vld [vmem:[%s1351 + $0xca] sm:$0xff]
        %v1562 = vld [vmem:[%s1351 + $0xda] sm:$0xff]
        %v1563 = vld [vmem:[%s1351 + $0xe2] sm:$0xff]
        %v1564 = vld [vmem:[%s1351 + $0xf2] sm:$0xff]
        %v1565 = vld [vmem:[%s1351 + $0xfa] sm:$0xff]
        %v1566 = vld [vmem:[%s1351 + $0x10a] sm:$0xff]
        %v1567 = vld [vmem:[%s1351 + $0x112] sm:$0xff]
        %v1568 = vld [vmem:[%s1351 + $0x122] sm:$0xff]
        %v1569 = vld [vmem:[%s1351 + $0x12a] sm:$0xff]
        %v1570 = vld [vmem:[%s1351 + $0x13a] sm:$0xff]
        %v1571 = vld [vmem:[%s1351 + $0x142] sm:$0xff]
        %v1572 = vld [vmem:[%s1351 + $0x152] sm:$0xff]
        %v1573 = vld [vmem:[%s1351 + $0x15a] sm:$0xff]
        %v1574 = vld [vmem:[%s1351 + $0x16a] sm:$0xff]
        %v1575 = vld [vmem:[%s1351 + $0x172] sm:$0xff]
        %v1576 = vpack.c.bf16 %v1545, %v1544
        %v1577 = vpack.c.bf16 %v1547, %v1546
        %v1578 = vpack.c.bf16 %v1549, %v1548
        %v1579 = vpack.c.bf16 %v1551, %v1550
        %v1580 = vpack.c.bf16 %v1553, %v1552
        %v1581 = vpack.c.bf16 %v1555, %v1554
        %v1582 = vpack.c.bf16 %v1557, %v1556
        %v1583 = vpack.c.bf16 %v1559, %v1558
        %v1584 = vpack.c.bf16 %v1561, %v1560
        %v1585 = vpack.c.bf16 %v1563, %v1562
        %v1586 = vpack.c.bf16 %v1565, %v1564
        %v1587 = vpack.c.bf16 %v1567, %v1566
        %v1588 = vpack.c.bf16 %v1569, %v1568
        %v1589 = vpack.c.bf16 %v1571, %v1570
        %v1590 = vpack.c.bf16 %v1573, %v1572
        %v1591 = vpack.c.bf16 %v1575, %v1574
        %1592 = vst.msk [vmem:[#allocation3 + $0x20] sm:$0xff] %vm821, %v1576
        %1593 = vst.msk [vmem:[#allocation3 + $0x48] sm:$0xff] %vm821, %v1577
        %1594 = vst.msk [vmem:[#allocation3 + $0x70] sm:$0xff] %vm821, %v1578
        %1595 = vst.msk [vmem:[#allocation3 + $0x98] sm:$0xff] %vm821, %v1579
        %1596 = vst.msk [vmem:[#allocation3 + $0xc0] sm:$0xff] %vm821, %v1580
        %1597 = vst.msk [vmem:[#allocation3 + $0xe8] sm:$0xff] %vm821, %v1581
        %1598 = vst.msk [vmem:[#allocation3 + $0x110] sm:$0xff] %vm821, %v1582
        %1599 = vst.msk [vmem:[#allocation3 + $0x138] sm:$0xff] %vm821, %v1583
        %1600 = vst.msk [vmem:[#allocation3 + $0x160] sm:$0xff] %vm821, %v1584
        %1601 = vst.msk [vmem:[#allocation3 + $0x188] sm:$0xff] %vm821, %v1585
        %1602 = vst.msk [vmem:[#allocation3 + $0x1b0] sm:$0xff] %vm821, %v1586
        %1603 = vst.msk [vmem:[#allocation3 + $0x1d8] sm:$0xff] %vm821, %v1587
        %1604 = vst.msk [vmem:[#allocation3 + $0x200] sm:$0xff] %vm821, %v1588
        %1605 = vst.msk [vmem:[#allocation3 + $0x228] sm:$0xff] %vm821, %v1589
        %1606 = vst.msk [vmem:[#allocation3 + $0x250] sm:$0xff] %vm821, %v1590
        %1607 = vst.msk [vmem:[#allocation3 + $0x278] sm:$0xff] %vm821, %v1591
        %v1608 = vld [vmem:[#allocation3] sm:$0xff]
        %v1609 = vld [vmem:[#allocation3 + $0x8] sm:$0xff]
        %v1610 = vld [vmem:[#allocation3 + $0x10] sm:$0xff]
        %v1611 = vld [vmem:[#allocation3 + $0x18] sm:$0xff]
        %v1612 = vld [vmem:[#allocation3 + $0x20] sm:$0xff]
        %v1613 = vld [vmem:[#allocation3 + $0x28] sm:$0xff]
        %v1614 = vld [vmem:[#allocation3 + $0x30] sm:$0xff]
        %v1615 = vld [vmem:[#allocation3 + $0x38] sm:$0xff]
        %v1616 = vld [vmem:[#allocation3 + $0x40] sm:$0xff]
        %v1617 = vld [vmem:[#allocation3 + $0x48] sm:$0xff]
        %v1618 = vld [vmem:[#allocation3 + $0x50] sm:$0xff]
        %v1619 = vld [vmem:[#allocation3 + $0x58] sm:$0xff]
        %v1620 = vld [vmem:[#allocation3 + $0x60] sm:$0xff]
        %v1621 = vld [vmem:[#allocation3 + $0x68] sm:$0xff]
        %v1622 = vld [vmem:[#allocation3 + $0x70] sm:$0xff]
        %v1623 = vld [vmem:[#allocation3 + $0x78] sm:$0xff]
        %v1624 = vld [vmem:[#allocation3 + $0x80] sm:$0xff]
        %v1625 = vld [vmem:[#allocation3 + $0x88] sm:$0xff]
        %v1626 = vld [vmem:[#allocation3 + $0x90] sm:$0xff]
        %v1627 = vld [vmem:[#allocation3 + $0x98] sm:$0xff]
        %v1628 = vld [vmem:[#allocation3 + $0xa0] sm:$0xff]
        %v1629 = vld [vmem:[#allocation3 + $0xa8] sm:$0xff]
        %v1630 = vld [vmem:[#allocation3 + $0xb0] sm:$0xff]
        %v1631 = vld [vmem:[#allocation3 + $0xb8] sm:$0xff]
        %v1632 = vld [vmem:[#allocation3 + $0xc0] sm:$0xff]
        %v1633 = vld [vmem:[#allocation3 + $0xc8] sm:$0xff]
        %v1634 = vld [vmem:[#allocation3 + $0xd0] sm:$0xff]
        %v1635 = vld [vmem:[#allocation3 + $0xd8] sm:$0xff]
        %v1636 = vld [vmem:[#allocation3 + $0xe0] sm:$0xff]
        %v1637 = vld [vmem:[#allocation3 + $0xe8] sm:$0xff]
        %v1638 = vld [vmem:[#allocation3 + $0xf0] sm:$0xff]
        %v1639 = vld [vmem:[#allocation3 + $0xf8] sm:$0xff]
        %v1640 = vld [vmem:[#allocation3 + $0x100] sm:$0xff]
        %v1641 = vld [vmem:[#allocation3 + $0x108] sm:$0xff]
        %v1642 = vld [vmem:[#allocation3 + $0x110] sm:$0xff]
        %v1643 = vld [vmem:[#allocation3 + $0x118] sm:$0xff]
        %v1644 = vld [vmem:[#allocation3 + $0x120] sm:$0xff]
        %v1645 = vld [vmem:[#allocation3 + $0x128] sm:$0xff]
        %v1646 = vld [vmem:[#allocation3 + $0x130] sm:$0xff]
        %v1647 = vld [vmem:[#allocation3 + $0x138] sm:$0xff]
        %v1648 = vld [vmem:[#allocation3 + $0x140] sm:$0xff]
        %v1649 = vld [vmem:[#allocation3 + $0x148] sm:$0xff]
        %v1650 = vld [vmem:[#allocation3 + $0x150] sm:$0xff]
        %v1651 = vld [vmem:[#allocation3 + $0x158] sm:$0xff]
        %v1652 = vld [vmem:[#allocation3 + $0x160] sm:$0xff]
        %v1653 = vld [vmem:[#allocation3 + $0x168] sm:$0xff]
        %v1654 = vld [vmem:[#allocation3 + $0x170] sm:$0xff]
        %v1655 = vld [vmem:[#allocation3 + $0x178] sm:$0xff]
        %v1656 = vld [vmem:[#allocation3 + $0x180] sm:$0xff]
        %v1657 = vld [vmem:[#allocation3 + $0x188] sm:$0xff]
        %v1658 = vld [vmem:[#allocation3 + $0x190] sm:$0xff]
        %v1659 = vld [vmem:[#allocation3 + $0x198] sm:$0xff]
        %v1660 = vld [vmem:[#allocation3 + $0x1a0] sm:$0xff]
        %v1661 = vld [vmem:[#allocation3 + $0x1a8] sm:$0xff]
        %v1662 = vld [vmem:[#allocation3 + $0x1b0] sm:$0xff]
        %v1663 = vld [vmem:[#allocation3 + $0x1b8] sm:$0xff]
        %v1664 = vld [vmem:[#allocation3 + $0x1c0] sm:$0xff]
        %v1665 = vld [vmem:[#allocation3 + $0x1c8] sm:$0xff]
        %v1666 = vld [vmem:[#allocation3 + $0x1d0] sm:$0xff]
        %v1667 = vld [vmem:[#allocation3 + $0x1d8] sm:$0xff]
        %v1668 = vld [vmem:[#allocation3 + $0x1e0] sm:$0xff]
        %v1669 = vld [vmem:[#allocation3 + $0x1e8] sm:$0xff]
        %v1670 = vld [vmem:[#allocation3 + $0x1f0] sm:$0xff]
        %v1671 = vld [vmem:[#allocation3 + $0x1f8] sm:$0xff]
        %v1672 = vld [vmem:[#allocation3 + $0x200] sm:$0xff]
        %v1673 = vld [vmem:[#allocation3 + $0x208] sm:$0xff]
        %v1674 = vld [vmem:[#allocation3 + $0x210] sm:$0xff]
        %v1675 = vld [vmem:[#allocation3 + $0x218] sm:$0xff]
        %v1676 = vld [vmem:[#allocation3 + $0x220] sm:$0xff]
        %v1677 = vld [vmem:[#allocation3 + $0x228] sm:$0xff]
        %v1678 = vld [vmem:[#allocation3 + $0x230] sm:$0xff]
        %v1679 = vld [vmem:[#allocation3 + $0x238] sm:$0xff]
        %v1680 = vld [vmem:[#allocation3 + $0x240] sm:$0xff]
        %v1681 = vld [vmem:[#allocation3 + $0x248] sm:$0xff]
        %v1682 = vld [vmem:[#allocation3 + $0x250] sm:$0xff]
        %v1683 = vld [vmem:[#allocation3 + $0x258] sm:$0xff]
        %v1684 = vld [vmem:[#allocation3 + $0x260] sm:$0xff]
        %v1685 = vld [vmem:[#allocation3 + $0x268] sm:$0xff]
        %v1686 = vld [vmem:[#allocation3 + $0x270] sm:$0xff]
        %v1687 = vld [vmem:[#allocation3 + $0x278] sm:$0xff]
        %v1688 = vld [vmem:[#allocation11] sm:$0xf]
        %v1689 = vld [vmem:[#allocation11 + $0x4] sm:$0xf]
        %v1690 = vld [vmem:[#allocation11 + $0x8] sm:$0xf]
        %v1691 = vld [vmem:[#allocation11 + $0xc] sm:$0xf]
        %v1692 = vld [vmem:[#allocation11 + $0x10] sm:$0xf]
        %v1693 = vld [vmem:[#allocation11 + $0x14] sm:$0xf]
        %v1694 = vld [vmem:[#allocation11 + $0x18] sm:$0xf]
        %v1695 = vld [vmem:[#allocation11 + $0x1c] sm:$0xf]
        %v1696 = vld [vmem:[#allocation11 + $0x20] sm:$0xf]
        %v1697 = vld [vmem:[#allocation11 + $0x24] sm:$0xf]
        %v1698 = vld [vmem:[#allocation11 + $0x28] sm:$0xf]
        %v1699 = vld [vmem:[#allocation11 + $0x2c] sm:$0xf]
        %v1700 = vld [vmem:[#allocation11 + $0x30] sm:$0xf]
        %v1701 = vld [vmem:[#allocation11 + $0x34] sm:$0xf]
        %v1702 = vld [vmem:[#allocation11 + $0x38] sm:$0xf]
        %v1703 = vld [vmem:[#allocation11 + $0x3c] sm:$0xf]
        %v1704 = vld [vmem:[#allocation11 + $0x40] sm:$0xf]
        %v1705 = vld [vmem:[#allocation11 + $0x44] sm:$0xf]
        %v1706 = vld [vmem:[#allocation11 + $0x48] sm:$0xf]
        %v1707 = vld [vmem:[#allocation11 + $0x4c] sm:$0xf]
        %v1708 = vld [vmem:[#allocation11 + $0x50] sm:$0xf]
        %v1709 = vld [vmem:[#allocation11 + $0x54] sm:$0xf]
        %v1710 = vld [vmem:[#allocation11 + $0x58] sm:$0xf]
        %v1711 = vld [vmem:[#allocation11 + $0x5c] sm:$0xf]
        %v1712 = vld [vmem:[#allocation11 + $0x60] sm:$0xf]
        %v1713 = vld [vmem:[#allocation11 + $0x64] sm:$0xf]
        %v1714 = vld [vmem:[#allocation11 + $0x68] sm:$0xf]
        %v1715 = vld [vmem:[#allocation11 + $0x6c] sm:$0xf]
        %v1716 = vld [vmem:[#allocation11 + $0x70] sm:$0xf]
        %v1717 = vld [vmem:[#allocation11 + $0x74] sm:$0xf]
        %v1718 = vld [vmem:[#allocation11 + $0x78] sm:$0xf]
        %v1719 = vld [vmem:[#allocation11 + $0x7c] sm:$0xf]
        %v1720 = vld [vmem:[#allocation11 + $0x80] sm:$0xf]
        %v1721 = vld [vmem:[#allocation11 + $0x84] sm:$0xf]
        %v1722 = vld [vmem:[#allocation11 + $0x88] sm:$0xf]
        %v1723 = vld [vmem:[#allocation11 + $0x8c] sm:$0xf]
        %v1724 = vld [vmem:[#allocation11 + $0x90] sm:$0xf]
        %v1725 = vld [vmem:[#allocation11 + $0x94] sm:$0xf]
        %v1726 = vld [vmem:[#allocation11 + $0x98] sm:$0xf]
        %v1727 = vld [vmem:[#allocation11 + $0x9c] sm:$0xf]
        %v1728 = vld [vmem:[#allocation11 + $0xa0] sm:$0xf]
        %v1729 = vld [vmem:[#allocation11 + $0xa4] sm:$0xf]
        %v1730 = vld [vmem:[#allocation11 + $0xa8] sm:$0xf]
        %v1731 = vld [vmem:[#allocation11 + $0xac] sm:$0xf]
        %v1732 = vld [vmem:[#allocation11 + $0xb0] sm:$0xf]
        %v1733 = vld [vmem:[#allocation11 + $0xb4] sm:$0xf]
        %v1734 = vld [vmem:[#allocation11 + $0xb8] sm:$0xf]
        %v1735 = vld [vmem:[#allocation11 + $0xbc] sm:$0xf]
        %v1736 = vld [vmem:[#allocation11 + $0xc0] sm:$0xf]
        %v1737 = vld [vmem:[#allocation11 + $0xc4] sm:$0xf]
        %v1738 = vld [vmem:[#allocation11 + $0xc8] sm:$0xf]
        %v1739 = vld [vmem:[#allocation11 + $0xcc] sm:$0xf]
        %v1740 = vld [vmem:[#allocation11 + $0xd0] sm:$0xf]
        %v1741 = vld [vmem:[#allocation11 + $0xd4] sm:$0xf]
        %v1742 = vld [vmem:[#allocation11 + $0xd8] sm:$0xf]
        %v1743 = vld [vmem:[#allocation11 + $0xdc] sm:$0xf]
        %v1744 = vld [vmem:[#allocation11 + $0xe0] sm:$0xf]
        %v1745 = vld [vmem:[#allocation11 + $0xe4] sm:$0xf]
        %v1746 = vld [vmem:[#allocation11 + $0xe8] sm:$0xf]
        %v1747 = vld [vmem:[#allocation11 + $0xec] sm:$0xf]
        %v1748 = vld [vmem:[#allocation11 + $0xf0] sm:$0xf]
        %v1749 = vld [vmem:[#allocation11 + $0xf4] sm:$0xf]
        %v1750 = vld [vmem:[#allocation11 + $0xf8] sm:$0xf]
        %v1751 = vld [vmem:[#allocation11 + $0xfc] sm:$0xf]
        %v1752 = vld [vmem:[#allocation11 + $0x100] sm:$0xf]
        %v1753 = vld [vmem:[#allocation11 + $0x104] sm:$0xf]
        %v1754 = vld [vmem:[#allocation11 + $0x108] sm:$0xf]
        %v1755 = vld [vmem:[#allocation11 + $0x10c] sm:$0xf]
        %v1756 = vld [vmem:[#allocation11 + $0x110] sm:$0xf]
        %v1757 = vld [vmem:[#allocation11 + $0x114] sm:$0xf]
        %v1758 = vld [vmem:[#allocation11 + $0x118] sm:$0xf]
        %v1759 = vld [vmem:[#allocation11 + $0x11c] sm:$0xf]
        %v1760 = vld [vmem:[%s5] sm:$0x1]
        %v1762 = vlaneseq
        %v1763 = vshrl.u32 %v1762, 7
        %v1764 = vsub.s32 0, %v1763
        %v1765 = vrot.slane %v1760, %v1764
        %v1839 = vunpack.c.l.b16 %v1688
        %v1840 = vunpack.c.l.b16 %v1689
        %v1841 = vunpack.c.l.b16 %v1690
        %v1842 = vunpack.c.l.b16 %v1691
        %v1843 = vunpack.c.l.b16 %v1692
        %v1844 = vunpack.c.l.b16 %v1693
        %v1845 = vunpack.c.l.b16 %v1694
        %v1846 = vunpack.c.l.b16 %v1695
        %v1847 = vunpack.c.l.b16 %v1696
        %v1848 = vunpack.c.l.b16 %v1697
        %v1849 = vunpack.c.l.b16 %v1698
        %v1850 = vunpack.c.l.b16 %v1699
        %v1851 = vunpack.c.l.b16 %v1700
        %v1852 = vunpack.c.l.b16 %v1701
        %v1853 = vunpack.c.l.b16 %v1702
        %v1854 = vunpack.c.l.b16 %v1703
        %v1855 = vunpack.c.l.b16 %v1704
        %v1856 = vunpack.c.l.b16 %v1705
        %v1857 = vunpack.c.l.b16 %v1706
        %v1858 = vunpack.c.l.b16 %v1707
        %v1859 = vunpack.c.l.b16 %v1708
        %v1860 = vunpack.c.l.b16 %v1709
        %v1861 = vunpack.c.l.b16 %v1710
        %v1862 = vunpack.c.l.b16 %v1711
        %v1863 = vunpack.c.l.b16 %v1712
        %v1864 = vunpack.c.l.b16 %v1713
        %v1865 = vunpack.c.l.b16 %v1714
        %v1866 = vunpack.c.l.b16 %v1715
        %v1867 = vunpack.c.l.b16 %v1716
        %v1868 = vunpack.c.l.b16 %v1717
        %v1869 = vunpack.c.l.b16 %v1718
        %v1870 = vunpack.c.l.b16 %v1719
        %v1871 = vunpack.c.l.b16 %v1720
        %v1872 = vunpack.c.l.b16 %v1721
        %v1873 = vunpack.c.l.b16 %v1722
        %v1874 = vunpack.c.l.b16 %v1723
        %v1875 = vunpack.c.l.b16 %v1724
        %v1876 = vunpack.c.l.b16 %v1725
        %v1877 = vunpack.c.l.b16 %v1726
        %v1878 = vunpack.c.l.b16 %v1727
        %v1879 = vunpack.c.l.b16 %v1728
        %v1880 = vunpack.c.l.b16 %v1729
        %v1881 = vunpack.c.l.b16 %v1730
        %v1882 = vunpack.c.l.b16 %v1731
        %v1883 = vunpack.c.l.b16 %v1732
        %v1884 = vunpack.c.l.b16 %v1733
        %v1885 = vunpack.c.l.b16 %v1734
        %v1886 = vunpack.c.l.b16 %v1735
        %v1887 = vunpack.c.l.b16 %v1736
        %v1888 = vunpack.c.l.b16 %v1737
        %v1889 = vunpack.c.l.b16 %v1738
        %v1890 = vunpack.c.l.b16 %v1739
        %v1891 = vunpack.c.l.b16 %v1740
        %v1892 = vunpack.c.l.b16 %v1741
        %v1893 = vunpack.c.l.b16 %v1742
        %v1894 = vunpack.c.l.b16 %v1743
        %v1895 = vunpack.c.l.b16 %v1744
        %v1896 = vunpack.c.l.b16 %v1745
        %v1897 = vunpack.c.l.b16 %v1746
        %v1898 = vunpack.c.l.b16 %v1747
        %v1899 = vunpack.c.l.b16 %v1748
        %v1900 = vunpack.c.l.b16 %v1749
        %v1901 = vunpack.c.l.b16 %v1750
        %v1902 = vunpack.c.l.b16 %v1751
        %v1903 = vunpack.c.l.b16 %v1752
        %v1904 = vunpack.c.l.b16 %v1753
        %v1905 = vunpack.c.l.b16 %v1754
        %v1906 = vunpack.c.l.b16 %v1755
        %v1907 = vunpack.c.l.b16 %v1756
        %v1908 = vunpack.c.l.b16 %v1757
        %v1909 = vunpack.c.l.b16 %v1758
        %v1910 = vunpack.c.l.b16 %v1759
        %v1911 = vpack.c.b16 %v1840, %v1839
        %v1912 = vpack.c.b16 %v1842, %v1841
        %v1913 = vpack.c.b16 %v1844, %v1843
        %v1914 = vpack.c.b16 %v1846, %v1845
        %v1915 = vpack.c.b16 %v1848, %v1847
        %v1916 = vpack.c.b16 %v1850, %v1849
        %v1917 = vpack.c.b16 %v1852, %v1851
        %v1918 = vpack.c.b16 %v1854, %v1853
        %v1919 = vpack.c.b16 %v1856, %v1855
        %v1920 = vpack.c.b16 %v1858, %v1857
        %v1921 = vpack.c.b16 %v1860, %v1859
        %v1922 = vpack.c.b16 %v1862, %v1861
        %v1923 = vpack.c.b16 %v1864, %v1863
        %v1924 = vpack.c.b16 %v1866, %v1865
        %v1925 = vpack.c.b16 %v1868, %v1867
        %v1926 = vpack.c.b16 %v1870, %v1869
        %v1927 = vpack.c.b16 %v1872, %v1871
        %v1928 = vpack.c.b16 %v1874, %v1873
        %v1929 = vpack.c.b16 %v1876, %v1875
        %v1930 = vpack.c.b16 %v1878, %v1877
        %v1931 = vpack.c.b16 %v1880, %v1879
        %v1932 = vpack.c.b16 %v1882, %v1881
        %v1933 = vpack.c.b16 %v1884, %v1883
        %v1934 = vpack.c.b16 %v1886, %v1885
        %v1935 = vpack.c.b16 %v1888, %v1887
        %v1936 = vpack.c.b16 %v1890, %v1889
        %v1937 = vpack.c.b16 %v1892, %v1891
        %v1938 = vpack.c.b16 %v1894, %v1893
        %v1939 = vpack.c.b16 %v1896, %v1895
        %v1940 = vpack.c.b16 %v1898, %v1897
        %v1941 = vpack.c.b16 %v1900, %v1899
        %v1942 = vpack.c.b16 %v1902, %v1901
        %v1943 = vpack.c.b16 %v1904, %v1903
        %v1944 = vpack.c.b16 %v1906, %v1905
        %v1945 = vpack.c.b16 %v1908, %v1907
        %v1946 = vpack.c.b16 %v1910, %v1909
        %v1984 = vsel %vm821, %v1612, 0
        %v1987 = vsel %vm821, %v1617, 0
        %v1990 = vsel %vm821, %v1622, 0
        %v1993 = vsel %vm821, %v1627, 0
        %v1996 = vsel %vm821, %v1632, 0
        %v1999 = vsel %vm821, %v1637, 0
        %v2002 = vsel %vm821, %v1642, 0
        %v2005 = vsel %vm821, %v1647, 0
        %v2008 = vsel %vm821, %v1652, 0
        %v2011 = vsel %vm821, %v1657, 0
        %v2014 = vsel %vm821, %v1662, 0
        %v2017 = vsel %vm821, %v1667, 0
        %v2020 = vsel %vm821, %v1672, 0
        %v2023 = vsel %vm821, %v1677, 0
        %v2026 = vsel %vm821, %v1682, 0
        %v2029 = vsel %vm821, %v1687, 0
        %2031 = vmatprep.subr.bf16.mxu0 0
        %2032 = vmatpush1.bf16.msra.mxu0 %v1911
        %2033 = vmatprep.subr.bf16.mxu0 0
        %2034 = vmatpush1.bf16.msra.mxu0 %v1912
        %2035 = vmatprep.subr.bf16.mxu0 0
        %2036 = vmatpush1.bf16.msra.mxu0 %v1913
        %2037 = vmatprep.subr.bf16.mxu0 0
        %2038 = vmatpush1.bf16.msra.mxu0 %v1914
        %2039 = vmatprep.subr.bf16.mxu0 0
        %2040 = vmatpush1.bf16.msra.mxu0 %v1915
        %2041 = vmatprep.subr.bf16.mxu0 0
        %2042 = vmatpush1.bf16.msra.mxu0 %v1916
        %2043 = vmatprep.subr.bf16.mxu0 0
        %2044 = vmatpush1.bf16.msra.mxu0 %v1917
        %2045 = vmatprep.subr.bf16.mxu0 0
        %2046 = vmatpush1.bf16.msra.mxu0 %v1918
        %2047 = vmatprep.subr.bf16.mxu0 0
        %2048 = vmatpush1.bf16.msra.mxu0 %v1919
        %2049 = vmatprep.subr.bf16.mxu0 0
        %2050 = vmatpush1.bf16.msra.mxu0 %v1920
        %2051 = vmatprep.subr.bf16.mxu0 0
        %2052 = vmatpush1.bf16.msra.mxu0 %v1921
        %2053 = vmatprep.subr.bf16.mxu0 0
        %2054 = vmatpush1.bf16.msra.mxu0 %v1922
        %2055 = vmatprep.subr.bf16.mxu0 0
        %2056 = vmatpush1.bf16.msra.mxu0 %v1923
        %2057 = vmatprep.subr.bf16.mxu0 0
        %2058 = vmatpush1.bf16.msra.mxu0 %v1924
        %2059 = vmatprep.subr.bf16.mxu0 0
        %2060 = vmatpush1.bf16.msra.mxu0 %v1925
        %2061 = vmatprep.subr.bf16.mxu0 0
        %2062 = vmatpush1.bf16.msra.mxu0 %v1926
        %2063 = vmatprep.mubr.bf16.mxu0 %v1609
        %2064 = vmatmul.mubr.bf16.gmra.mrb[0].mxu0 %v1608
        %v2065 = vpop.f32.mrb[0].mxu0
        %v2066 = vadd.f32 %v1765, %v2065
        %v2067 = vpop.f32.mrb[0].mxu0
        %v2068 = vpop.f32.mrb[0].mxu0
        %v2069 = vadd.f32 %v1765, %v2068
        %v2070 = vpop.f32.mrb[0].mxu0
        %2071 = vmatprep.mubr.bf16.mxu0 %v1614
        %2072 = vmatmul.mubr.bf16.gmra.mrb[0].mxu0 %v1613
        %v2073 = vpop.f32.mrb[0].mxu0
        %v2074 = vadd.f32 %v1765, %v2073
        %v2075 = vpop.f32.mrb[0].mxu0
        %v2076 = vpop.f32.mrb[0].mxu0
        %v2077 = vadd.f32 %v1765, %v2076
        %v2078 = vpop.f32.mrb[0].mxu0
        %2079 = vmatprep.mubr.bf16.mxu0 %v1619
        %2080 = vmatmul.mubr.bf16.gmra.mrb[0].mxu0 %v1618
        %v2081 = vpop.f32.mrb[0].mxu0
        %v2082 = vadd.f32 %v1765, %v2081
        %v2083 = vpop.f32.mrb[0].mxu0
        %v2084 = vpop.f32.mrb[0].mxu0
        %v2085 = vadd.f32 %v1765, %v2084
        %v2086 = vpop.f32.mrb[0].mxu0
        %2087 = vmatprep.mubr.bf16.mxu0 %v1624
        %2088 = vmatmul.mubr.bf16.gmra.mrb[0].mxu0 %v1623
        %v2089 = vpop.f32.mrb[0].mxu0
        %v2090 = vadd.f32 %v1765, %v2089
        %v2091 = vpop.f32.mrb[0].mxu0
        %v2092 = vpop.f32.mrb[0].mxu0
        %v2093 = vadd.f32 %v1765, %v2092
        %v2094 = vpop.f32.mrb[0].mxu0
        %2095 = vmatprep.mubr.bf16.mxu0 %v1629
        %2096 = vmatmul.mubr.bf16.gmra.mrb[0].mxu0 %v1628
        %v2097 = vpop.f32.mrb[0].mxu0
        %v2098 = vadd.f32 %v1765, %v2097
        %v2099 = vpop.f32.mrb[0].mxu0
        %v2100 = vpop.f32.mrb[0].mxu0
        %v2101 = vadd.f32 %v1765, %v2100
        %v2102 = vpop.f32.mrb[0].mxu0
        %2103 = vmatprep.mubr.bf16.mxu0 %v1634
        %2104 = vmatmul.mubr.bf16.gmra.mrb[0].mxu0 %v1633
        %v2105 = vpop.f32.mrb[0].mxu0
        %v2106 = vadd.f32 %v1765, %v2105
        %v2107 = vpop.f32.mrb[0].mxu0
        %v2108 = vpop.f32.mrb[0].mxu0
        %v2109 = vadd.f32 %v1765, %v2108
        %v2110 = vpop.f32.mrb[0].mxu0
        %2111 = vmatprep.mubr.bf16.mxu0 %v1639
        %2112 = vmatmul.mubr.bf16.gmra.mrb[0].mxu0 %v1638
        %v2113 = vpop.f32.mrb[0].mxu0
        %v2114 = vadd.f32 %v1765, %v2113
        %v2115 = vpop.f32.mrb[0].mxu0
        %v2116 = vpop.f32.mrb[0].mxu0
        %v2117 = vadd.f32 %v1765, %v2116
        %v2118 = vpop.f32.mrb[0].mxu0
        %2119 = vmatprep.mubr.bf16.mxu0 %v1644
        %2120 = vmatmul.mubr.bf16.gmra.mrb[0].mxu0 %v1643
        %v2121 = vpop.f32.mrb[0].mxu0
        %v2122 = vadd.f32 %v1765, %v2121
        %v2123 = vpop.f32.mrb[0].mxu0
        %v2124 = vpop.f32.mrb[0].mxu0
        %v2125 = vadd.f32 %v1765, %v2124
        %v2126 = vpop.f32.mrb[0].mxu0
        %2127 = vmatprep.mubr.bf16.mxu0 %v1649
        %2128 = vmatmul.mubr.bf16.gmra.mrb[0].mxu0 %v1648
        %v2129 = vpop.f32.mrb[0].mxu0
        %v2130 = vadd.f32 %v1765, %v2129
        %v2131 = vpop.f32.mrb[0].mxu0
        %v2132 = vpop.f32.mrb[0].mxu0
        %v2133 = vadd.f32 %v1765, %v2132
        %v2134 = vpop.f32.mrb[0].mxu0
        %2135 = vmatprep.mubr.bf16.mxu0 %v1654
        %2136 = vmatmul.mubr.bf16.gmra.mrb[0].mxu0 %v1653
        %v2137 = vpop.f32.mrb[0].mxu0
        %v2138 = vadd.f32 %v1765, %v2137
        %v2139 = vpop.f32.mrb[0].mxu0
        %v2140 = vpop.f32.mrb[0].mxu0
        %v2141 = vadd.f32 %v1765, %v2140
        %v2142 = vpop.f32.mrb[0].mxu0
        %2143 = vmatprep.mubr.bf16.mxu0 %v1659
        %2144 = vmatmul.mubr.bf16.gmra.mrb[0].mxu0 %v1658
        %v2145 = vpop.f32.mrb[0].mxu0
        %v2146 = vadd.f32 %v1765, %v2145
        %v2147 = vpop.f32.mrb[0].mxu0
        %v2148 = vpop.f32.mrb[0].mxu0
        %v2149 = vadd.f32 %v1765, %v2148
        %v2150 = vpop.f32.mrb[0].mxu0
        %2151 = vmatprep.mubr.bf16.mxu0 %v1664
        %2152 = vmatmul.mubr.bf16.gmra.mrb[0].mxu0 %v1663
        %v2153 = vpop.f32.mrb[0].mxu0
        %v2154 = vadd.f32 %v1765, %v2153
        %v2155 = vpop.f32.mrb[0].mxu0
        %v2156 = vpop.f32.mrb[0].mxu0
        %v2157 = vadd.f32 %v1765, %v2156
        %v2158 = vpop.f32.mrb[0].mxu0
        %2159 = vmatprep.mubr.bf16.mxu0 %v1669
        %2160 = vmatmul.mubr.bf16.gmra.mrb[0].mxu0 %v1668
        %v2161 = vpop.f32.mrb[0].mxu0
        %v2162 = vadd.f32 %v1765, %v2161
        %v2163 = vpop.f32.mrb[0].mxu0
        %v2164 = vpop.f32.mrb[0].mxu0
        %v2165 = vadd.f32 %v1765, %v2164
        %v2166 = vpop.f32.mrb[0].mxu0
        %2167 = vmatprep.mubr.bf16.mxu0 %v1674
        %2168 = vmatmul.mubr.bf16.gmra.mrb[0].mxu0 %v1673
        %v2169 = vpop.f32.mrb[0].mxu0
        %v2170 = vadd.f32 %v1765, %v2169
        %v2171 = vpop.f32.mrb[0].mxu0
        %v2172 = vpop.f32.mrb[0].mxu0
        %v2173 = vadd.f32 %v1765, %v2172
        %v2174 = vpop.f32.mrb[0].mxu0
        %2175 = vmatprep.mubr.bf16.mxu0 %v1679
        %2176 = vmatmul.mubr.bf16.gmra.mrb[0].mxu0 %v1678
        %v2177 = vpop.f32.mrb[0].mxu0
        %v2178 = vadd.f32 %v1765, %v2177
        %v2179 = vpop.f32.mrb[0].mxu0
        %v2180 = vpop.f32.mrb[0].mxu0
        %v2181 = vadd.f32 %v1765, %v2180
        %v2182 = vpop.f32.mrb[0].mxu0
        %2183 = vmatprep.mubr.bf16.mxu0 %v1684
        %2184 = vmatmul.mubr.bf16.gmra.mrb[0].mxu0 %v1683
        %v2185 = vpop.f32.mrb[0].mxu0
        %v2186 = vadd.f32 %v1765, %v2185
        %v2187 = vpop.f32.mrb[0].mxu0
        %v2188 = vpop.f32.mrb[0].mxu0
        %v2189 = vadd.f32 %v1765, %v2188
        %v2190 = vpop.f32.mrb[0].mxu0
        %2191 = vdwg.mxu0
        %2192 = vmatprep.subr.bf16.mxu0 0
        %2193 = vmatpush1.bf16.msra.mxu0 %v1927
        %2194 = vmatprep.subr.bf16.mxu0 0
        %2195 = vmatpush1.bf16.msra.mxu0 %v1928
        %2196 = vmatprep.subr.bf16.mxu0 0
        %2197 = vmatpush1.bf16.msra.mxu0 %v1929
        %2198 = vmatprep.subr.bf16.mxu0 0
        %2199 = vmatpush1.bf16.msra.mxu0 %v1930
        %2200 = vmatprep.subr.bf16.mxu0 0
        %2201 = vmatpush1.bf16.msra.mxu0 %v1931
        %2202 = vmatprep.subr.bf16.mxu0 0
        %2203 = vmatpush1.bf16.msra.mxu0 %v1932
        %2204 = vmatprep.subr.bf16.mxu0 0
        %2205 = vmatpush1.bf16.msra.mxu0 %v1933
        %2206 = vmatprep.subr.bf16.mxu0 0
        %2207 = vmatpush1.bf16.msra.mxu0 %v1934
        %2208 = vmatprep.subr.bf16.mxu0 0
        %2209 = vmatpush1.bf16.msra.mxu0 %v1935
        %2210 = vmatprep.subr.bf16.mxu0 0
        %2211 = vmatpush1.bf16.msra.mxu0 %v1936
        %2212 = vmatprep.subr.bf16.mxu0 0
        %2213 = vmatpush1.bf16.msra.mxu0 %v1937
        %2214 = vmatprep.subr.bf16.mxu0 0
        %2215 = vmatpush1.bf16.msra.mxu0 %v1938
        %2216 = vmatprep.subr.bf16.mxu0 0
        %2217 = vmatpush1.bf16.msra.mxu0 %v1939
        %2218 = vmatprep.subr.bf16.mxu0 0
        %2219 = vmatpush1.bf16.msra.mxu0 %v1940
        %2220 = vmatprep.subr.bf16.mxu0 0
        %2221 = vmatpush1.bf16.msra.mxu0 %v1941
        %2222 = vmatprep.subr.bf16.mxu0 0
        %2223 = vmatpush1.bf16.msra.mxu0 %v1942
        %2224 = vmatprep.mubr.bf16.mxu0 %v1611
        %2225 = vmatmul.mubr.bf16.gmra.mrb[0].mxu0 %v1610
        %v2226 = vpop.f32.mrb[0].mxu0
        %v2227 = vadd.f32 %v2066, %v2226
        %v2228 = vpop.f32.mrb[0].mxu0
        %v2229 = vpop.f32.mrb[0].mxu0
        %v2230 = vadd.f32 %v2069, %v2229
        %v2231 = vpop.f32.mrb[0].mxu0
        %2232 = vmatprep.mubr.bf16.mxu0 %v1616
        %2233 = vmatmul.mubr.bf16.gmra.mrb[0].mxu0 %v1615
        %v2234 = vpop.f32.mrb[0].mxu0
        %v2235 = vadd.f32 %v2074, %v2234
        %v2236 = vpop.f32.mrb[0].mxu0
        %v2237 = vpop.f32.mrb[0].mxu0
        %v2238 = vadd.f32 %v2077, %v2237
        %v2239 = vpop.f32.mrb[0].mxu0
        %2240 = vmatprep.mubr.bf16.mxu0 %v1621
        %2241 = vmatmul.mubr.bf16.gmra.mrb[0].mxu0 %v1620
        %v2242 = vpop.f32.mrb[0].mxu0
        %v2243 = vadd.f32 %v2082, %v2242
        %v2244 = vpop.f32.mrb[0].mxu0
        %v2245 = vpop.f32.mrb[0].mxu0
        %v2246 = vadd.f32 %v2085, %v2245
        %v2247 = vpop.f32.mrb[0].mxu0
        %2248 = vmatprep.mubr.bf16.mxu0 %v1626
        %2249 = vmatmul.mubr.bf16.gmra.mrb[0].mxu0 %v1625
        %v2250 = vpop.f32.mrb[0].mxu0
        %v2251 = vadd.f32 %v2090, %v2250
        %v2252 = vpop.f32.mrb[0].mxu0
        %v2253 = vpop.f32.mrb[0].mxu0
        %v2254 = vadd.f32 %v2093, %v2253
        %v2255 = vpop.f32.mrb[0].mxu0
        %2256 = vmatprep.mubr.bf16.mxu0 %v1631
        %2257 = vmatmul.mubr.bf16.gmra.mrb[0].mxu0 %v1630
        %v2258 = vpop.f32.mrb[0].mxu0
        %v2259 = vadd.f32 %v2098, %v2258
        %v2260 = vpop.f32.mrb[0].mxu0
        %v2261 = vpop.f32.mrb[0].mxu0
        %v2262 = vadd.f32 %v2101, %v2261
        %v2263 = vpop.f32.mrb[0].mxu0
        %2264 = vmatprep.mubr.bf16.mxu0 %v1636
        %2265 = vmatmul.mubr.bf16.gmra.mrb[0].mxu0 %v1635
        %v2266 = vpop.f32.mrb[0].mxu0
        %v2267 = vadd.f32 %v2106, %v2266
        %v2268 = vpop.f32.mrb[0].mxu0
        %v2269 = vpop.f32.mrb[0].mxu0
        %v2270 = vadd.f32 %v2109, %v2269
        %v2271 = vpop.f32.mrb[0].mxu0
        %2272 = vmatprep.mubr.bf16.mxu0 %v1641
        %2273 = vmatmul.mubr.bf16.gmra.mrb[0].mxu0 %v1640
        %v2274 = vpop.f32.mrb[0].mxu0
        %v2275 = vadd.f32 %v2114, %v2274
        %v2276 = vpop.f32.mrb[0].mxu0
        %v2277 = vpop.f32.mrb[0].mxu0
        %v2278 = vadd.f32 %v2117, %v2277
        %v2279 = vpop.f32.mrb[0].mxu0
        %2280 = vmatprep.mubr.bf16.mxu0 %v1646
        %2281 = vmatmul.mubr.bf16.gmra.mrb[0].mxu0 %v1645
        %v2282 = vpop.f32.mrb[0].mxu0
        %v2283 = vadd.f32 %v2122, %v2282
        %v2284 = vpop.f32.mrb[0].mxu0
        %v2285 = vpop.f32.mrb[0].mxu0
        %v2286 = vadd.f32 %v2125, %v2285
        %v2287 = vpop.f32.mrb[0].mxu0
        %2288 = vmatprep.mubr.bf16.mxu0 %v1651
        %2289 = vmatmul.mubr.bf16.gmra.mrb[0].mxu0 %v1650
        %v2290 = vpop.f32.mrb[0].mxu0
        %v2291 = vadd.f32 %v2130, %v2290
        %v2292 = vpop.f32.mrb[0].mxu0
        %v2293 = vpop.f32.mrb[0].mxu0
        %v2294 = vadd.f32 %v2133, %v2293
        %v2295 = vpop.f32.mrb[0].mxu0
        %2296 = vmatprep.mubr.bf16.mxu0 %v1656
        %2297 = vmatmul.mubr.bf16.gmra.mrb[0].mxu0 %v1655
        %v2298 = vpop.f32.mrb[0].mxu0
        %v2299 = vadd.f32 %v2138, %v2298
        %v2300 = vpop.f32.mrb[0].mxu0
        %v2301 = vpop.f32.mrb[0].mxu0
        %v2302 = vadd.f32 %v2141, %v2301
        %v2303 = vpop.f32.mrb[0].mxu0
        %2304 = vmatprep.mubr.bf16.mxu0 %v1661
        %2305 = vmatmul.mubr.bf16.gmra.mrb[0].mxu0 %v1660
        %v2306 = vpop.f32.mrb[0].mxu0
        %v2307 = vadd.f32 %v2146, %v2306
        %v2308 = vpop.f32.mrb[0].mxu0
        %v2309 = vpop.f32.mrb[0].mxu0
        %v2310 = vadd.f32 %v2149, %v2309
        %v2311 = vpop.f32.mrb[0].mxu0
        %2312 = vmatprep.mubr.bf16.mxu0 %v1666
        %2313 = vmatmul.mubr.bf16.gmra.mrb[0].mxu0 %v1665
        %v2314 = vpop.f32.mrb[0].mxu0
        %v2315 = vadd.f32 %v2154, %v2314
        %v2316 = vpop.f32.mrb[0].mxu0
        %v2317 = vpop.f32.mrb[0].mxu0
        %v2318 = vadd.f32 %v2157, %v2317
        %v2319 = vpop.f32.mrb[0].mxu0
        %2320 = vmatprep.mubr.bf16.mxu0 %v1671
        %2321 = vmatmul.mubr.bf16.gmra.mrb[0].mxu0 %v1670
        %v2322 = vpop.f32.mrb[0].mxu0
        %v2323 = vadd.f32 %v2162, %v2322
        %v2324 = vpop.f32.mrb[0].mxu0
        %v2325 = vpop.f32.mrb[0].mxu0
        %v2326 = vadd.f32 %v2165, %v2325
        %v2327 = vpop.f32.mrb[0].mxu0
        %2328 = vmatprep.mubr.bf16.mxu0 %v1676
        %2329 = vmatmul.mubr.bf16.gmra.mrb[0].mxu0 %v1675
        %v2330 = vpop.f32.mrb[0].mxu0
        %v2331 = vadd.f32 %v2170, %v2330
        %v2332 = vpop.f32.mrb[0].mxu0
        %v2333 = vpop.f32.mrb[0].mxu0
        %v2334 = vadd.f32 %v2173, %v2333
        %v2335 = vpop.f32.mrb[0].mxu0
        %2336 = vmatprep.mubr.bf16.mxu0 %v1681
        %2337 = vmatmul.mubr.bf16.gmra.mrb[0].mxu0 %v1680
        %v2338 = vpop.f32.mrb[0].mxu0
        %v2339 = vadd.f32 %v2178, %v2338
        %v2340 = vpop.f32.mrb[0].mxu0
        %v2341 = vpop.f32.mrb[0].mxu0
        %v2342 = vadd.f32 %v2181, %v2341
        %v2343 = vpop.f32.mrb[0].mxu0
        %2344 = vmatprep.mubr.bf16.mxu0 %v1686
        %2345 = vmatmul.mubr.bf16.gmra.mrb[0].mxu0 %v1685
        %v2346 = vpop.f32.mrb[0].mxu0
        %v2347 = vadd.f32 %v2186, %v2346
        %v2348 = vpop.f32.mrb[0].mxu0
        %v2349 = vpop.f32.mrb[0].mxu0
        %v2350 = vadd.f32 %v2189, %v2349
        %v2351 = vpop.f32.mrb[0].mxu0
        %2352 = vdwg.mxu0
        %2353 = vmatprep.subr.bf16.mxu0 0
        %2354 = vmatpush1.bf16.msra.mxu0 %v1943
        %2355 = vmatprep.subr.bf16.mxu0 0
        %2356 = vmatpush1.bf16.msra.mxu0 %v1944
        %2357 = vmatprep.subr.bf16.mxu0 0
        %2358 = vmatpush1.bf16.msra.mxu0 %v1945
        %2359 = vmatprep.subr.bf16.mxu0 0
        %2360 = vmatpush1.bf16.msra.mxu0 %v1946
        %2361 = vmatprep.subr.bf16.mxu0 0
        %2362 = vmatpush1.bf16.msra.mxu0 0
        %2363 = vmatprep.subr.bf16.mxu0 0
        %2364 = vmatpush1.bf16.msra.mxu0 0
        %2365 = vmatprep.subr.bf16.mxu0 0
        %2366 = vmatpush1.bf16.msra.mxu0 0
        %2367 = vmatprep.subr.bf16.mxu0 0
        %2368 = vmatpush1.bf16.msra.mxu0 0
        %2369 = vmatprep.subr.bf16.mxu0 0
        %2370 = vmatpush1.bf16.msra.mxu0 0
        %2371 = vmatprep.subr.bf16.mxu0 0
        %2372 = vmatpush1.bf16.msra.mxu0 0
        %2373 = vmatprep.subr.bf16.mxu0 0
        %2374 = vmatpush1.bf16.msra.mxu0 0
        %2375 = vmatprep.subr.bf16.mxu0 0
        %2376 = vmatpush1.bf16.msra.mxu0 0
        %2377 = vmatprep.subr.bf16.mxu0 0
        %2378 = vmatpush1.bf16.msra.mxu0 0
        %2379 = vmatprep.subr.bf16.mxu0 0
        %2380 = vmatpush1.bf16.msra.mxu0 0
        %2381 = vmatprep.subr.bf16.mxu0 0
        %2382 = vmatpush1.bf16.msra.mxu0 0
        %2383 = vmatprep.subr.bf16.mxu0 0
        %2384 = vmatpush1.bf16.msra.mxu0 0
        %2385 = vmatprep.mubr.bf16.mxu0 0
        %2386 = vmatmul.mubr.bf16.gmra.mrb[0].mxu0 %v1984
        %v2387 = vpop.f32.mrb[0].mxu0
        %v2388 = vadd.f32 %v2227, %v2387
        %v2389 = vpop.f32.mrb[0].mxu0
        %v2390 = vpop.f32.mrb[0].mxu0
        %v2391 = vadd.f32 %v2230, %v2390
        %v2392 = vpop.f32.mrb[0].mxu0
        %2393 = vmatprep.mubr.bf16.mxu0 0
        %2394 = vmatmul.mubr.bf16.gmra.mrb[0].mxu0 %v1987
        %v2395 = vpop.f32.mrb[0].mxu0
        %v2396 = vadd.f32 %v2235, %v2395
        %v2397 = vpop.f32.mrb[0].mxu0
        %v2398 = vpop.f32.mrb[0].mxu0
        %v2399 = vadd.f32 %v2238, %v2398
        %v2400 = vpop.f32.mrb[0].mxu0
        %2401 = vmatprep.mubr.bf16.mxu0 0
        %2402 = vmatmul.mubr.bf16.gmra.mrb[0].mxu0 %v1990
        %v2403 = vpop.f32.mrb[0].mxu0
        %v2404 = vadd.f32 %v2243, %v2403
        %v2405 = vpop.f32.mrb[0].mxu0
        %v2406 = vpop.f32.mrb[0].mxu0
        %v2407 = vadd.f32 %v2246, %v2406
        %v2408 = vpop.f32.mrb[0].mxu0
        %2409 = vmatprep.mubr.bf16.mxu0 0
        %2410 = vmatmul.mubr.bf16.gmra.mrb[0].mxu0 %v1993
        %v2411 = vpop.f32.mrb[0].mxu0
        %v2412 = vadd.f32 %v2251, %v2411
        %v2413 = vpop.f32.mrb[0].mxu0
        %v2414 = vpop.f32.mrb[0].mxu0
        %v2415 = vadd.f32 %v2254, %v2414
        %v2416 = vpop.f32.mrb[0].mxu0
        %2417 = vmatprep.mubr.bf16.mxu0 0
        %2418 = vmatmul.mubr.bf16.gmra.mrb[0].mxu0 %v1996
        %v2419 = vpop.f32.mrb[0].mxu0
        %v2420 = vadd.f32 %v2259, %v2419
        %v2421 = vpop.f32.mrb[0].mxu0
        %v2422 = vpop.f32.mrb[0].mxu0
        %v2423 = vadd.f32 %v2262, %v2422
        %v2424 = vpop.f32.mrb[0].mxu0
        %2425 = vmatprep.mubr.bf16.mxu0 0
        %2426 = vmatmul.mubr.bf16.gmra.mrb[0].mxu0 %v1999
        %v2427 = vpop.f32.mrb[0].mxu0
        %v2428 = vadd.f32 %v2267, %v2427
        %v2429 = vpop.f32.mrb[0].mxu0
        %v2430 = vpop.f32.mrb[0].mxu0
        %v2431 = vadd.f32 %v2270, %v2430
        %v2432 = vpop.f32.mrb[0].mxu0
        %2433 = vmatprep.mubr.bf16.mxu0 0
        %2434 = vmatmul.mubr.bf16.gmra.mrb[0].mxu0 %v2002
        %v2435 = vpop.f32.mrb[0].mxu0
        %v2436 = vadd.f32 %v2275, %v2435
        %v2437 = vpop.f32.mrb[0].mxu0
        %v2438 = vpop.f32.mrb[0].mxu0
        %v2439 = vadd.f32 %v2278, %v2438
        %v2440 = vpop.f32.mrb[0].mxu0
        %2441 = vmatprep.mubr.bf16.mxu0 0
        %2442 = vmatmul.mubr.bf16.gmra.mrb[0].mxu0 %v2005
        %v2443 = vpop.f32.mrb[0].mxu0
        %v2444 = vadd.f32 %v2283, %v2443
        %v2445 = vpop.f32.mrb[0].mxu0
        %v2446 = vpop.f32.mrb[0].mxu0
        %v2447 = vadd.f32 %v2286, %v2446
        %v2448 = vpop.f32.mrb[0].mxu0
        %2449 = vmatprep.mubr.bf16.mxu0 0
        %2450 = vmatmul.mubr.bf16.gmra.mrb[0].mxu0 %v2008
        %v2451 = vpop.f32.mrb[0].mxu0
        %v2452 = vadd.f32 %v2291, %v2451
        %v2453 = vpop.f32.mrb[0].mxu0
        %v2454 = vpop.f32.mrb[0].mxu0
        %v2455 = vadd.f32 %v2294, %v2454
        %v2456 = vpop.f32.mrb[0].mxu0
        %2457 = vmatprep.mubr.bf16.mxu0 0
        %2458 = vmatmul.mubr.bf16.gmra.mrb[0].mxu0 %v2011
        %v2459 = vpop.f32.mrb[0].mxu0
        %v2460 = vadd.f32 %v2299, %v2459
        %v2461 = vpop.f32.mrb[0].mxu0
        %v2462 = vpop.f32.mrb[0].mxu0
        %v2463 = vadd.f32 %v2302, %v2462
        %v2464 = vpop.f32.mrb[0].mxu0
        %2465 = vmatprep.mubr.bf16.mxu0 0
        %2466 = vmatmul.mubr.bf16.gmra.mrb[0].mxu0 %v2014
        %v2467 = vpop.f32.mrb[0].mxu0
        %v2468 = vadd.f32 %v2307, %v2467
        %v2469 = vpop.f32.mrb[0].mxu0
        %v2470 = vpop.f32.mrb[0].mxu0
        %v2471 = vadd.f32 %v2310, %v2470
        %v2472 = vpop.f32.mrb[0].mxu0
        %2473 = vmatprep.mubr.bf16.mxu0 0
        %2474 = vmatmul.mubr.bf16.gmra.mrb[0].mxu0 %v2017
        %v2475 = vpop.f32.mrb[0].mxu0
        %v2476 = vadd.f32 %v2315, %v2475
        %v2477 = vpop.f32.mrb[0].mxu0
        %v2478 = vpop.f32.mrb[0].mxu0
        %v2479 = vadd.f32 %v2318, %v2478
        %v2480 = vpop.f32.mrb[0].mxu0
        %2481 = vmatprep.mubr.bf16.mxu0 0
        %2482 = vmatmul.mubr.bf16.gmra.mrb[0].mxu0 %v2020
        %v2483 = vpop.f32.mrb[0].mxu0
        %v2484 = vadd.f32 %v2323, %v2483
        %v2485 = vpop.f32.mrb[0].mxu0
        %v2486 = vpop.f32.mrb[0].mxu0
        %v2487 = vadd.f32 %v2326, %v2486
        %v2488 = vpop.f32.mrb[0].mxu0
        %2489 = vmatprep.mubr.bf16.mxu0 0
        %2490 = vmatmul.mubr.bf16.gmra.mrb[0].mxu0 %v2023
        %v2491 = vpop.f32.mrb[0].mxu0
        %v2492 = vadd.f32 %v2331, %v2491
        %v2493 = vpop.f32.mrb[0].mxu0
        %v2494 = vpop.f32.mrb[0].mxu0
        %v2495 = vadd.f32 %v2334, %v2494
        %v2496 = vpop.f32.mrb[0].mxu0
        %2497 = vmatprep.mubr.bf16.mxu0 0
        %2498 = vmatmul.mubr.bf16.gmra.mrb[0].mxu0 %v2026
        %v2499 = vpop.f32.mrb[0].mxu0
        %v2500 = vadd.f32 %v2339, %v2499
        %v2501 = vpop.f32.mrb[0].mxu0
        %v2502 = vpop.f32.mrb[0].mxu0
        %v2503 = vadd.f32 %v2342, %v2502
        %v2504 = vpop.f32.mrb[0].mxu0
        %2505 = vmatprep.mubr.bf16.mxu0 0
        %2506 = vmatmul.mubr.bf16.gmra.mrb[0].mxu0 %v2029
        %v2507 = vpop.f32.mrb[0].mxu0
        %v2508 = vadd.f32 %v2347, %v2507
        %v2509 = vpop.f32.mrb[0].mxu0
        %v2510 = vpop.f32.mrb[0].mxu0
        %v2511 = vadd.f32 %v2350, %v2510
        %v2512 = vpop.f32.mrb[0].mxu0
        %2513 = vdwg.mxu0
        %v2514 = vtanh.pop %v2388
        %v2515 = vtanh.pop %v2391
        %v2516 = vtanh.pop %v2396
        %v2517 = vtanh.pop %v2399
        %v2518 = vtanh.pop %v2404
        %v2519 = vtanh.pop %v2407
        %v2520 = vtanh.pop %v2412
        %v2521 = vtanh.pop %v2415
        %v2522 = vtanh.pop %v2420
        %v2523 = vtanh.pop %v2423
        %v2524 = vtanh.pop %v2428
        %v2525 = vtanh.pop %v2431
        %v2526 = vtanh.pop %v2436
        %v2527 = vtanh.pop %v2439
        %v2528 = vtanh.pop %v2444
        %v2529 = vtanh.pop %v2447
        %v2530 = vtanh.pop %v2452
        %v2531 = vtanh.pop %v2455
        %v2532 = vtanh.pop %v2460
        %v2533 = vtanh.pop %v2463
        %v2534 = vtanh.pop %v2468
        %v2535 = vtanh.pop %v2471
        %v2536 = vtanh.pop %v2476
        %v2537 = vtanh.pop %v2479
        %v2538 = vtanh.pop %v2484
        %v2539 = vtanh.pop %v2487
        %v2540 = vtanh.pop %v2492
        %v2541 = vtanh.pop %v2495
        %v2542 = vtanh.pop %v2500
        %v2543 = vtanh.pop %v2503
        %v2544 = vtanh.pop %v2508
        %v2545 = vtanh.pop %v2511
        %v2546 = vxor.u32 %v2388, 2147483648
        %v2547 = vxor.u32 %v2391, 2147483648
        %v2548 = vxor.u32 %v2396, 2147483648
        %v2549 = vxor.u32 %v2399, 2147483648
        %v2550 = vxor.u32 %v2404, 2147483648
        %v2551 = vxor.u32 %v2407, 2147483648
        %v2552 = vxor.u32 %v2412, 2147483648
        %v2553 = vxor.u32 %v2415, 2147483648
        %v2554 = vxor.u32 %v2420, 2147483648
        %v2555 = vxor.u32 %v2423, 2147483648
        %v2556 = vxor.u32 %v2428, 2147483648
        %v2557 = vxor.u32 %v2431, 2147483648
        %v2558 = vxor.u32 %v2436, 2147483648
        %v2559 = vxor.u32 %v2439, 2147483648
        %v2560 = vxor.u32 %v2444, 2147483648
        %v2561 = vxor.u32 %v2447, 2147483648
        %v2562 = vxor.u32 %v2452, 2147483648
        %v2563 = vxor.u32 %v2455, 2147483648
        %v2564 = vxor.u32 %v2460, 2147483648
        %v2565 = vxor.u32 %v2463, 2147483648
        %v2566 = vxor.u32 %v2468, 2147483648
        %v2567 = vxor.u32 %v2471, 2147483648
        %v2568 = vxor.u32 %v2476, 2147483648
        %v2569 = vxor.u32 %v2479, 2147483648
        %v2570 = vxor.u32 %v2484, 2147483648
        %v2571 = vxor.u32 %v2487, 2147483648
        %v2572 = vxor.u32 %v2492, 2147483648
        %v2573 = vxor.u32 %v2495, 2147483648
        %v2574 = vxor.u32 %v2500, 2147483648
        %v2575 = vxor.u32 %v2503, 2147483648
        %v2576 = vxor.u32 %v2508, 2147483648
        %v2577 = vxor.u32 %v2511, 2147483648
        %v2578 = vmul.f32 %v2546, 1.442695
        %v2579 = vpow.pop %v2578
        %v2580 = vmul.f32 %v2547, 1.442695
        %v2581 = vpow.pop %v2580
        %v2582 = vmul.f32 %v2548, 1.442695
        %v2583 = vpow.pop %v2582
        %v2584 = vmul.f32 %v2549, 1.442695
        %v2585 = vpow.pop %v2584
        %v2586 = vmul.f32 %v2550, 1.442695
        %v2587 = vpow.pop %v2586
        %v2588 = vmul.f32 %v2551, 1.442695
        %v2589 = vpow.pop %v2588
        %v2590 = vmul.f32 %v2552, 1.442695
        %v2591 = vpow.pop %v2590
        %v2592 = vmul.f32 %v2553, 1.442695
        %v2593 = vpow.pop %v2592
        %v2594 = vmul.f32 %v2554, 1.442695
        %v2595 = vpow.pop %v2594
        %v2596 = vmul.f32 %v2555, 1.442695
        %v2597 = vpow.pop %v2596
        %v2598 = vmul.f32 %v2556, 1.442695
        %v2599 = vpow.pop %v2598
        %v2600 = vmul.f32 %v2557, 1.442695
        %v2601 = vpow.pop %v2600
        %v2602 = vmul.f32 %v2558, 1.442695
        %v2603 = vpow.pop %v2602
        %v2604 = vmul.f32 %v2559, 1.442695
        %v2605 = vpow.pop %v2604
        %v2606 = vmul.f32 %v2560, 1.442695
        %v2607 = vpow.pop %v2606
        %v2608 = vmul.f32 %v2561, 1.442695
        %v2609 = vpow.pop %v2608
        %v2610 = vmul.f32 %v2562, 1.442695
        %v2611 = vpow.pop %v2610
        %v2612 = vmul.f32 %v2563, 1.442695
        %v2613 = vpow.pop %v2612
        %v2614 = vmul.f32 %v2564, 1.442695
        %v2615 = vpow.pop %v2614
        %v2616 = vmul.f32 %v2565, 1.442695
        %v2617 = vpow.pop %v2616
        %v2618 = vmul.f32 %v2566, 1.442695
        %v2619 = vpow.pop %v2618
        %v2620 = vmul.f32 %v2567, 1.442695
        %v2621 = vpow.pop %v2620
        %v2622 = vmul.f32 %v2568, 1.442695
        %v2623 = vpow.pop %v2622
        %v2624 = vmul.f32 %v2569, 1.442695
        %v2625 = vpow.pop %v2624
        %v2626 = vmul.f32 %v2570, 1.442695
        %v2627 = vpow.pop %v2626
        %v2628 = vmul.f32 %v2571, 1.442695
        %v2629 = vpow.pop %v2628
        %v2630 = vmul.f32 %v2572, 1.442695
        %v2631 = vpow.pop %v2630
        %v2632 = vmul.f32 %v2573, 1.442695
        %v2633 = vpow.pop %v2632
        %v2634 = vmul.f32 %v2574, 1.442695
        %v2635 = vpow.pop %v2634
        %v2636 = vmul.f32 %v2575, 1.442695
        %v2637 = vpow.pop %v2636
        %v2638 = vmul.f32 %v2576, 1.442695
        %v2639 = vpow.pop %v2638
        %v2640 = vmul.f32 %v2577, 1.442695
        %v2641 = vpow.pop %v2640
        %v2642 = vadd.f32 %v2579, 1.0
        %v2643 = vadd.f32 %v2581, 1.0
        %v2644 = vadd.f32 %v2583, 1.0
        %v2645 = vadd.f32 %v2585, 1.0
        %v2646 = vadd.f32 %v2587, 1.0
        %v2647 = vadd.f32 %v2589, 1.0
        %v2648 = vadd.f32 %v2591, 1.0
        %v2649 = vadd.f32 %v2593, 1.0
        %v2650 = vadd.f32 %v2595, 1.0
        %v2651 = vadd.f32 %v2597, 1.0
        %v2652 = vadd.f32 %v2599, 1.0
        %v2653 = vadd.f32 %v2601, 1.0
        %v2654 = vadd.f32 %v2603, 1.0
        %v2655 = vadd.f32 %v2605, 1.0
        %v2656 = vadd.f32 %v2607, 1.0
        %v2657 = vadd.f32 %v2609, 1.0
        %v2658 = vadd.f32 %v2611, 1.0
        %v2659 = vadd.f32 %v2613, 1.0
        %v2660 = vadd.f32 %v2615, 1.0
        %v2661 = vadd.f32 %v2617, 1.0
        %v2662 = vadd.f32 %v2619, 1.0
        %v2663 = vadd.f32 %v2621, 1.0
        %v2664 = vadd.f32 %v2623, 1.0
        %v2665 = vadd.f32 %v2625, 1.0
        %v2666 = vadd.f32 %v2627, 1.0
        %v2667 = vadd.f32 %v2629, 1.0
        %v2668 = vadd.f32 %v2631, 1.0
        %v2669 = vadd.f32 %v2633, 1.0
        %v2670 = vadd.f32 %v2635, 1.0
        %v2671 = vadd.f32 %v2637, 1.0
        %v2672 = vadd.f32 %v2639, 1.0
        %v2673 = vadd.f32 %v2641, 1.0
        %v2674 = vrcp.pop %v2642
        %v2675 = vmul.f32 1.0, %v2674
        %v2676 = vrcp.pop %v2643
        %v2677 = vmul.f32 1.0, %v2676
        %v2678 = vrcp.pop %v2644
        %v2679 = vmul.f32 1.0, %v2678
        %v2680 = vrcp.pop %v2645
        %v2681 = vmul.f32 1.0, %v2680
        %v2682 = vrcp.pop %v2646
        %v2683 = vmul.f32 1.0, %v2682
        %v2684 = vrcp.pop %v2647
        %v2685 = vmul.f32 1.0, %v2684
        %v2686 = vrcp.pop %v2648
        %v2687 = vmul.f32 1.0, %v2686
        %v2688 = vrcp.pop %v2649
        %v2689 = vmul.f32 1.0, %v2688
        %v2690 = vrcp.pop %v2650
        %v2691 = vmul.f32 1.0, %v2690
        %v2692 = vrcp.pop %v2651
        %v2693 = vmul.f32 1.0, %v2692
        %v2694 = vrcp.pop %v2652
        %v2695 = vmul.f32 1.0, %v2694
        %v2696 = vrcp.pop %v2653
        %v2697 = vmul.f32 1.0, %v2696
        %v2698 = vrcp.pop %v2654
        %v2699 = vmul.f32 1.0, %v2698
        %v2700 = vrcp.pop %v2655
        %v2701 = vmul.f32 1.0, %v2700
        %v2702 = vrcp.pop %v2656
        %v2703 = vmul.f32 1.0, %v2702
        %v2704 = vrcp.pop %v2657
        %v2705 = vmul.f32 1.0, %v2704
        %v2706 = vrcp.pop %v2658
        %v2707 = vmul.f32 1.0, %v2706
        %v2708 = vrcp.pop %v2659
        %v2709 = vmul.f32 1.0, %v2708
        %v2710 = vrcp.pop %v2660
        %v2711 = vmul.f32 1.0, %v2710
        %v2712 = vrcp.pop %v2661
        %v2713 = vmul.f32 1.0, %v2712
        %v2714 = vrcp.pop %v2662
        %v2715 = vmul.f32 1.0, %v2714
        %v2716 = vrcp.pop %v2663
        %v2717 = vmul.f32 1.0, %v2716
        %v2718 = vrcp.pop %v2664
        %v2719 = vmul.f32 1.0, %v2718
        %v2720 = vrcp.pop %v2665
        %v2721 = vmul.f32 1.0, %v2720
        %v2722 = vrcp.pop %v2666
        %v2723 = vmul.f32 1.0, %v2722
        %v2724 = vrcp.pop %v2667
        %v2725 = vmul.f32 1.0, %v2724
        %v2726 = vrcp.pop %v2668
        %v2727 = vmul.f32 1.0, %v2726
        %v2728 = vrcp.pop %v2669
        %v2729 = vmul.f32 1.0, %v2728
        %v2730 = vrcp.pop %v2670
        %v2731 = vmul.f32 1.0, %v2730
        %v2732 = vrcp.pop %v2671
        %v2733 = vmul.f32 1.0, %v2732
        %v2734 = vrcp.pop %v2672
        %v2735 = vmul.f32 1.0, %v2734
        %v2736 = vrcp.pop %v2673
        %v2737 = vmul.f32 1.0, %v2736
        %v2738 = vld [vmem:[#allocation4] sm:$0xff]
        %v2739 = vld [vmem:[#allocation4 + $0x8] sm:$0xff]
        %v2740 = vld [vmem:[#allocation4 + $0x10] sm:$0xff]
        %v2741 = vld [vmem:[#allocation4 + $0x18] sm:$0xff]
        %v2742 = vld [vmem:[#allocation4 + $0x20] sm:$0xff]
        %v2743 = vld [vmem:[#allocation4 + $0x28] sm:$0xff]
        %v2744 = vld [vmem:[#allocation4 + $0x30] sm:$0xff]
        %v2745 = vld [vmem:[#allocation4 + $0x38] sm:$0xff]
        %v2746 = vld [vmem:[#allocation4 + $0x40] sm:$0xff]
        %v2747 = vld [vmem:[#allocation4 + $0x48] sm:$0xff]
        %v2748 = vld [vmem:[#allocation4 + $0x50] sm:$0xff]
        %v2749 = vld [vmem:[#allocation4 + $0x58] sm:$0xff]
        %v2750 = vld [vmem:[#allocation4 + $0x60] sm:$0xff]
        %v2751 = vld [vmem:[#allocation4 + $0x68] sm:$0xff]
        %v2752 = vld [vmem:[#allocation4 + $0x70] sm:$0xff]
        %v2753 = vld [vmem:[#allocation4 + $0x78] sm:$0xff]
        %v2754 = vld [vmem:[#allocation4 + $0x80] sm:$0xff]
        %v2755 = vld [vmem:[#allocation4 + $0x88] sm:$0xff]
        %v2756 = vld [vmem:[#allocation4 + $0x90] sm:$0xff]
        %v2757 = vld [vmem:[#allocation4 + $0x98] sm:$0xff]
        %v2758 = vld [vmem:[#allocation4 + $0xa0] sm:$0xff]
        %v2759 = vld [vmem:[#allocation4 + $0xa8] sm:$0xff]
        %v2760 = vld [vmem:[#allocation4 + $0xb0] sm:$0xff]
        %v2761 = vld [vmem:[#allocation4 + $0xb8] sm:$0xff]
        %v2762 = vld [vmem:[#allocation4 + $0xc0] sm:$0xff]
        %v2763 = vld [vmem:[#allocation4 + $0xc8] sm:$0xff]
        %v2764 = vld [vmem:[#allocation4 + $0xd0] sm:$0xff]
        %v2765 = vld [vmem:[#allocation4 + $0xd8] sm:$0xff]
        %v2766 = vld [vmem:[#allocation4 + $0xe0] sm:$0xff]
        %v2767 = vld [vmem:[#allocation4 + $0xe8] sm:$0xff]
        %v2768 = vld [vmem:[#allocation4 + $0xf0] sm:$0xff]
        %v2769 = vld [vmem:[#allocation4 + $0xf8] sm:$0xff]
        %2802 = vrot.lane.b32.xlu0 %v2738, 64
        %v2803 = vpop.permute.xlu0 %2802
        %2804 = vrot.lane.b32.xlu0 %v2739, 64
        %v2805 = vpop.permute.xlu0 %2804
        %2806 = vrot.lane.b32.xlu0 %v2740, 64
        %v2807 = vpop.permute.xlu0 %2806
        %2808 = vrot.lane.b32.xlu0 %v2741, 64
        %v2809 = vpop.permute.xlu0 %2808
        %2810 = vrot.lane.b32.xlu0 %v2742, 64
        %v2811 = vpop.permute.xlu0 %2810
        %2812 = vrot.lane.b32.xlu0 %v2743, 64
        %v2813 = vpop.permute.xlu0 %2812
        %2814 = vrot.lane.b32.xlu0 %v2744, 64
        %v2815 = vpop.permute.xlu0 %2814
        %2816 = vrot.lane.b32.xlu0 %v2745, 64
        %v2817 = vpop.permute.xlu0 %2816
        %2818 = vrot.lane.b32.xlu0 %v2746, 64
        %v2819 = vpop.permute.xlu0 %2818
        %2820 = vrot.lane.b32.xlu0 %v2747, 64
        %v2821 = vpop.permute.xlu0 %2820
        %2822 = vrot.lane.b32.xlu0 %v2748, 64
        %v2823 = vpop.permute.xlu0 %2822
        %2824 = vrot.lane.b32.xlu0 %v2749, 64
        %v2825 = vpop.permute.xlu0 %2824
        %2826 = vrot.lane.b32.xlu0 %v2750, 64
        %v2827 = vpop.permute.xlu0 %2826
        %2828 = vrot.lane.b32.xlu0 %v2751, 64
        %v2829 = vpop.permute.xlu0 %2828
        %2830 = vrot.lane.b32.xlu0 %v2752, 64
        %v2831 = vpop.permute.xlu0 %2830
        %2832 = vrot.lane.b32.xlu0 %v2753, 64
        %v2833 = vpop.permute.xlu0 %2832
        %2834 = vrot.lane.b32.xlu0 %v2754, 64
        %v2835 = vpop.permute.xlu0 %2834
        %2836 = vrot.lane.b32.xlu0 %v2755, 64
        %v2837 = vpop.permute.xlu0 %2836
        %2838 = vrot.lane.b32.xlu0 %v2756, 64
        %v2839 = vpop.permute.xlu0 %2838
        %2840 = vrot.lane.b32.xlu0 %v2757, 64
        %v2841 = vpop.permute.xlu0 %2840
        %2842 = vrot.lane.b32.xlu0 %v2758, 64
        %v2843 = vpop.permute.xlu0 %2842
        %2844 = vrot.lane.b32.xlu0 %v2759, 64
        %v2845 = vpop.permute.xlu0 %2844
        %2846 = vrot.lane.b32.xlu0 %v2760, 64
        %v2847 = vpop.permute.xlu0 %2846
        %2848 = vrot.lane.b32.xlu0 %v2761, 64
        %v2849 = vpop.permute.xlu0 %2848
        %2850 = vrot.lane.b32.xlu0 %v2762, 64
        %v2851 = vpop.permute.xlu0 %2850
        %2852 = vrot.lane.b32.xlu0 %v2763, 64
        %v2853 = vpop.permute.xlu0 %2852
        %2854 = vrot.lane.b32.xlu0 %v2764, 64
        %v2855 = vpop.permute.xlu0 %2854
        %2856 = vrot.lane.b32.xlu0 %v2765, 64
        %v2857 = vpop.permute.xlu0 %2856
        %2858 = vrot.lane.b32.xlu0 %v2766, 64
        %v2859 = vpop.permute.xlu0 %2858
        %2860 = vrot.lane.b32.xlu0 %v2767, 64
        %v2861 = vpop.permute.xlu0 %2860
        %2862 = vrot.lane.b32.xlu0 %v2768, 64
        %v2863 = vpop.permute.xlu0 %2862
        %2864 = vrot.lane.b32.xlu0 %v2769, 64
        %v2865 = vpop.permute.xlu0 %2864
        %v2898 = vmul.f32 %v2675, %v2803
        %v2899 = vmul.f32 %v2677, %v2805
        %v2900 = vmul.f32 %v2679, %v2807
        %v2901 = vmul.f32 %v2681, %v2809
        %v2902 = vmul.f32 %v2683, %v2811
        %v2903 = vmul.f32 %v2685, %v2813
        %v2904 = vmul.f32 %v2687, %v2815
        %v2905 = vmul.f32 %v2689, %v2817
        %v2906 = vmul.f32 %v2691, %v2819
        %v2907 = vmul.f32 %v2693, %v2821
        %v2908 = vmul.f32 %v2695, %v2823
        %v2909 = vmul.f32 %v2697, %v2825
        %v2910 = vmul.f32 %v2699, %v2827
        %v2911 = vmul.f32 %v2701, %v2829
        %v2912 = vmul.f32 %v2703, %v2831
        %v2913 = vmul.f32 %v2705, %v2833
        %v2914 = vmul.f32 %v2707, %v2835
        %v2915 = vmul.f32 %v2709, %v2837
        %v2916 = vmul.f32 %v2711, %v2839
        %v2917 = vmul.f32 %v2713, %v2841
        %v2918 = vmul.f32 %v2715, %v2843
        %v2919 = vmul.f32 %v2717, %v2845
        %v2920 = vmul.f32 %v2719, %v2847
        %v2921 = vmul.f32 %v2721, %v2849
        %v2922 = vmul.f32 %v2723, %v2851
        %v2923 = vmul.f32 %v2725, %v2853
        %v2924 = vmul.f32 %v2727, %v2855
        %v2925 = vmul.f32 %v2729, %v2857
        %v2926 = vmul.f32 %v2731, %v2859
        %v2927 = vmul.f32 %v2733, %v2861
        %v2928 = vmul.f32 %v2735, %v2863
        %v2929 = vmul.f32 %v2737, %v2865
        %2962 = vrot.lane.b32.xlu0 %v2514, 32
        %v2963 = vpop.permute.xlu0 %2962
        %2964 = vrot.lane.b32.xlu0 %v2515, 32
        %v2965 = vpop.permute.xlu0 %2964
        %2966 = vrot.lane.b32.xlu0 %v2516, 32
        %v2967 = vpop.permute.xlu0 %2966
        %2968 = vrot.lane.b32.xlu0 %v2517, 32
        %v2969 = vpop.permute.xlu0 %2968
        %2970 = vrot.lane.b32.xlu0 %v2518, 32
        %v2971 = vpop.permute.xlu0 %2970
        %2972 = vrot.lane.b32.xlu0 %v2519, 32
        %v2973 = vpop.permute.xlu0 %2972
        %2974 = vrot.lane.b32.xlu0 %v2520, 32
        %v2975 = vpop.permute.xlu0 %2974
        %2976 = vrot.lane.b32.xlu0 %v2521, 32
        %v2977 = vpop.permute.xlu0 %2976
        %2978 = vrot.lane.b32.xlu0 %v2522, 32
        %v2979 = vpop.permute.xlu0 %2978
        %2980 = vrot.lane.b32.xlu0 %v2523, 32
        %v2981 = vpop.permute.xlu0 %2980
        %2982 = vrot.lane.b32.xlu0 %v2524, 32
        %v2983 = vpop.permute.xlu0 %2982
        %2984 = vrot.lane.b32.xlu0 %v2525, 32
        %v2985 = vpop.permute.xlu0 %2984
        %2986 = vrot.lane.b32.xlu0 %v2526, 32
        %v2987 = vpop.permute.xlu0 %2986
        %2988 = vrot.lane.b32.xlu0 %v2527, 32
        %v2989 = vpop.permute.xlu0 %2988
        %2990 = vrot.lane.b32.xlu0 %v2528, 32
        %v2991 = vpop.permute.xlu0 %2990
        %2992 = vrot.lane.b32.xlu0 %v2529, 32
        %v2993 = vpop.permute.xlu0 %2992
        %2994 = vrot.lane.b32.xlu0 %v2530, 32
        %v2995 = vpop.permute.xlu0 %2994
        %2996 = vrot.lane.b32.xlu0 %v2531, 32
        %v2997 = vpop.permute.xlu0 %2996
        %2998 = vrot.lane.b32.xlu0 %v2532, 32
        %v2999 = vpop.permute.xlu0 %2998
        %3000 = vrot.lane.b32.xlu0 %v2533, 32
        %v3001 = vpop.permute.xlu0 %3000
        %3002 = vrot.lane.b32.xlu0 %v2534, 32
        %v3003 = vpop.permute.xlu0 %3002
        %3004 = vrot.lane.b32.xlu0 %v2535, 32
        %v3005 = vpop.permute.xlu0 %3004
        %3006 = vrot.lane.b32.xlu0 %v2536, 32
        %v3007 = vpop.permute.xlu0 %3006
        %3008 = vrot.lane.b32.xlu0 %v2537, 32
        %v3009 = vpop.permute.xlu0 %3008
        %3010 = vrot.lane.b32.xlu0 %v2538, 32
        %v3011 = vpop.permute.xlu0 %3010
        %3012 = vrot.lane.b32.xlu0 %v2539, 32
        %v3013 = vpop.permute.xlu0 %3012
        %3014 = vrot.lane.b32.xlu0 %v2540, 32
        %v3015 = vpop.permute.xlu0 %3014
        %3016 = vrot.lane.b32.xlu0 %v2541, 32
        %v3017 = vpop.permute.xlu0 %3016
        %3018 = vrot.lane.b32.xlu0 %v2542, 32
        %v3019 = vpop.permute.xlu0 %3018
        %3020 = vrot.lane.b32.xlu0 %v2543, 32
        %v3021 = vpop.permute.xlu0 %3020
        %3022 = vrot.lane.b32.xlu0 %v2544, 32
        %v3023 = vpop.permute.xlu0 %3022
        %3024 = vrot.lane.b32.xlu0 %v2545, 32
        %v3025 = vpop.permute.xlu0 %3024
        %v3058 = vmul.f32 %v2675, %v2963
        %v3059 = vmul.f32 %v2677, %v2965
        %v3060 = vmul.f32 %v2679, %v2967
        %v3061 = vmul.f32 %v2681, %v2969
        %v3062 = vmul.f32 %v2683, %v2971
        %v3063 = vmul.f32 %v2685, %v2973
        %v3064 = vmul.f32 %v2687, %v2975
        %v3065 = vmul.f32 %v2689, %v2977
        %v3066 = vmul.f32 %v2691, %v2979
        %v3067 = vmul.f32 %v2693, %v2981
        %v3068 = vmul.f32 %v2695, %v2983
        %v3069 = vmul.f32 %v2697, %v2985
        %v3070 = vmul.f32 %v2699, %v2987
        %v3071 = vmul.f32 %v2701, %v2989
        %v3072 = vmul.f32 %v2703, %v2991
        %v3073 = vmul.f32 %v2705, %v2993
        %v3074 = vmul.f32 %v2707, %v2995
        %v3075 = vmul.f32 %v2709, %v2997
        %v3076 = vmul.f32 %v2711, %v2999
        %v3077 = vmul.f32 %v2713, %v3001
        %v3078 = vmul.f32 %v2715, %v3003
        %v3079 = vmul.f32 %v2717, %v3005
        %v3080 = vmul.f32 %v2719, %v3007
        %v3081 = vmul.f32 %v2721, %v3009
        %v3082 = vmul.f32 %v2723, %v3011
        %v3083 = vmul.f32 %v2725, %v3013
        %v3084 = vmul.f32 %v2727, %v3015
        %v3085 = vmul.f32 %v2729, %v3017
        %v3086 = vmul.f32 %v2731, %v3019
        %v3087 = vmul.f32 %v2733, %v3021
        %v3088 = vmul.f32 %v2735, %v3023
        %v3089 = vmul.f32 %v2737, %v3025
        %3122 = vrot.lane.b32.xlu0 %v3058, 32
        %v3123 = vpop.permute.xlu0 %3122
        %3124 = vrot.lane.b32.xlu0 %v3059, 32
        %v3125 = vpop.permute.xlu0 %3124
        %3126 = vrot.lane.b32.xlu0 %v3060, 32
        %v3127 = vpop.permute.xlu0 %3126
        %3128 = vrot.lane.b32.xlu0 %v3061, 32
        %v3129 = vpop.permute.xlu0 %3128
        %3130 = vrot.lane.b32.xlu0 %v3062, 32
        %v3131 = vpop.permute.xlu0 %3130
        %3132 = vrot.lane.b32.xlu0 %v3063, 32
        %v3133 = vpop.permute.xlu0 %3132
        %3134 = vrot.lane.b32.xlu0 %v3064, 32
        %v3135 = vpop.permute.xlu0 %3134
        %3136 = vrot.lane.b32.xlu0 %v3065, 32
        %v3137 = vpop.permute.xlu0 %3136
        %3138 = vrot.lane.b32.xlu0 %v3066, 32
        %v3139 = vpop.permute.xlu0 %3138
        %3140 = vrot.lane.b32.xlu0 %v3067, 32
        %v3141 = vpop.permute.xlu0 %3140
        %3142 = vrot.lane.b32.xlu0 %v3068, 32
        %v3143 = vpop.permute.xlu0 %3142
        %3144 = vrot.lane.b32.xlu0 %v3069, 32
        %v3145 = vpop.permute.xlu0 %3144
        %3146 = vrot.lane.b32.xlu0 %v3070, 32
        %v3147 = vpop.permute.xlu0 %3146
        %3148 = vrot.lane.b32.xlu0 %v3071, 32
        %v3149 = vpop.permute.xlu0 %3148
        %3150 = vrot.lane.b32.xlu0 %v3072, 32
        %v3151 = vpop.permute.xlu0 %3150
        %3152 = vrot.lane.b32.xlu0 %v3073, 32
        %v3153 = vpop.permute.xlu0 %3152
        %3154 = vrot.lane.b32.xlu0 %v3074, 32
        %v3155 = vpop.permute.xlu0 %3154
        %3156 = vrot.lane.b32.xlu0 %v3075, 32
        %v3157 = vpop.permute.xlu0 %3156
        %3158 = vrot.lane.b32.xlu0 %v3076, 32
        %v3159 = vpop.permute.xlu0 %3158
        %3160 = vrot.lane.b32.xlu0 %v3077, 32
        %v3161 = vpop.permute.xlu0 %3160
        %3162 = vrot.lane.b32.xlu0 %v3078, 32
        %v3163 = vpop.permute.xlu0 %3162
        %3164 = vrot.lane.b32.xlu0 %v3079, 32
        %v3165 = vpop.permute.xlu0 %3164
        %3166 = vrot.lane.b32.xlu0 %v3080, 32
        %v3167 = vpop.permute.xlu0 %3166
        %3168 = vrot.lane.b32.xlu0 %v3081, 32
        %v3169 = vpop.permute.xlu0 %3168
        %3170 = vrot.lane.b32.xlu0 %v3082, 32
        %v3171 = vpop.permute.xlu0 %3170
        %3172 = vrot.lane.b32.xlu0 %v3083, 32
        %v3173 = vpop.permute.xlu0 %3172
        %3174 = vrot.lane.b32.xlu0 %v3084, 32
        %v3175 = vpop.permute.xlu0 %3174
        %3176 = vrot.lane.b32.xlu0 %v3085, 32
        %v3177 = vpop.permute.xlu0 %3176
        %3178 = vrot.lane.b32.xlu0 %v3086, 32
        %v3179 = vpop.permute.xlu0 %3178
        %3180 = vrot.lane.b32.xlu0 %v3087, 32
        %v3181 = vpop.permute.xlu0 %3180
        %3182 = vrot.lane.b32.xlu0 %v3088, 32
        %v3183 = vpop.permute.xlu0 %3182
        %3184 = vrot.lane.b32.xlu0 %v3089, 32
        %v3185 = vpop.permute.xlu0 %3184
        %v3218 = vadd.f32 %v2898, %v3123
        %v3219 = vadd.f32 %v2899, %v3125
        %v3220 = vadd.f32 %v2900, %v3127
        %v3221 = vadd.f32 %v2901, %v3129
        %v3222 = vadd.f32 %v2902, %v3131
        %v3223 = vadd.f32 %v2903, %v3133
        %v3224 = vadd.f32 %v2904, %v3135
        %v3225 = vadd.f32 %v2905, %v3137
        %v3226 = vadd.f32 %v2906, %v3139
        %v3227 = vadd.f32 %v2907, %v3141
        %v3228 = vadd.f32 %v2908, %v3143
        %v3229 = vadd.f32 %v2909, %v3145
        %v3230 = vadd.f32 %v2910, %v3147
        %v3231 = vadd.f32 %v2911, %v3149
        %v3232 = vadd.f32 %v2912, %v3151
        %v3233 = vadd.f32 %v2913, %v3153
        %v3234 = vadd.f32 %v2914, %v3155
        %v3235 = vadd.f32 %v2915, %v3157
        %v3236 = vadd.f32 %v2916, %v3159
        %v3237 = vadd.f32 %v2917, %v3161
        %v3238 = vadd.f32 %v2918, %v3163
        %v3239 = vadd.f32 %v2919, %v3165
        %v3240 = vadd.f32 %v2920, %v3167
        %v3241 = vadd.f32 %v2921, %v3169
        %v3242 = vadd.f32 %v2922, %v3171
        %v3243 = vadd.f32 %v2923, %v3173
        %v3244 = vadd.f32 %v2924, %v3175
        %v3245 = vadd.f32 %v2925, %v3177
        %v3246 = vadd.f32 %v2926, %v3179
        %v3247 = vadd.f32 %v2927, %v3181
        %v3248 = vadd.f32 %v2928, %v3183
        %v3249 = vadd.f32 %v2929, %v3185
        %v3250 = vtanh.pop %v3218
        %v3251 = vtanh.pop %v3219
        %v3252 = vtanh.pop %v3220
        %v3253 = vtanh.pop %v3221
        %v3254 = vtanh.pop %v3222
        %v3255 = vtanh.pop %v3223
        %v3256 = vtanh.pop %v3224
        %v3257 = vtanh.pop %v3225
        %v3258 = vtanh.pop %v3226
        %v3259 = vtanh.pop %v3227
        %v3260 = vtanh.pop %v3228
        %v3261 = vtanh.pop %v3229
        %v3262 = vtanh.pop %v3230
        %v3263 = vtanh.pop %v3231
        %v3264 = vtanh.pop %v3232
        %v3265 = vtanh.pop %v3233
        %v3266 = vtanh.pop %v3234
        %v3267 = vtanh.pop %v3235
        %v3268 = vtanh.pop %v3236
        %v3269 = vtanh.pop %v3237
        %v3270 = vtanh.pop %v3238
        %v3271 = vtanh.pop %v3239
        %v3272 = vtanh.pop %v3240
        %v3273 = vtanh.pop %v3241
        %v3274 = vtanh.pop %v3242
        %v3275 = vtanh.pop %v3243
        %v3276 = vtanh.pop %v3244
        %v3277 = vtanh.pop %v3245
        %v3278 = vtanh.pop %v3246
        %v3279 = vtanh.pop %v3247
        %v3280 = vtanh.pop %v3248
        %v3281 = vtanh.pop %v3249
        %3314 = vrot.lane.b32.xlu0 %v3250, 32
        %v3315 = vpop.permute.xlu0 %3314
        %3316 = vrot.lane.b32.xlu0 %v3251, 32
        %v3317 = vpop.permute.xlu0 %3316
        %3318 = vrot.lane.b32.xlu0 %v3252, 32
        %v3319 = vpop.permute.xlu0 %3318
        %3320 = vrot.lane.b32.xlu0 %v3253, 32
        %v3321 = vpop.permute.xlu0 %3320
        %3322 = vrot.lane.b32.xlu0 %v3254, 32
        %v3323 = vpop.permute.xlu0 %3322
        %3324 = vrot.lane.b32.xlu0 %v3255, 32
        %v3325 = vpop.permute.xlu0 %3324
        %3326 = vrot.lane.b32.xlu0 %v3256, 32
        %v3327 = vpop.permute.xlu0 %3326
        %3328 = vrot.lane.b32.xlu0 %v3257, 32
        %v3329 = vpop.permute.xlu0 %3328
        %3330 = vrot.lane.b32.xlu0 %v3258, 32
        %v3331 = vpop.permute.xlu0 %3330
        %3332 = vrot.lane.b32.xlu0 %v3259, 32
        %v3333 = vpop.permute.xlu0 %3332
        %3334 = vrot.lane.b32.xlu0 %v3260, 32
        %v3335 = vpop.permute.xlu0 %3334
        %3336 = vrot.lane.b32.xlu0 %v3261, 32
        %v3337 = vpop.permute.xlu0 %3336
        %3338 = vrot.lane.b32.xlu0 %v3262, 32
        %v3339 = vpop.permute.xlu0 %3338
        %3340 = vrot.lane.b32.xlu0 %v3263, 32
        %v3341 = vpop.permute.xlu0 %3340
        %3342 = vrot.lane.b32.xlu0 %v3264, 32
        %v3343 = vpop.permute.xlu0 %3342
        %3344 = vrot.lane.b32.xlu0 %v3265, 32
        %v3345 = vpop.permute.xlu0 %3344
        %3346 = vrot.lane.b32.xlu0 %v3266, 32
        %v3347 = vpop.permute.xlu0 %3346
        %3348 = vrot.lane.b32.xlu0 %v3267, 32
        %v3349 = vpop.permute.xlu0 %3348
        %3350 = vrot.lane.b32.xlu0 %v3268, 32
        %v3351 = vpop.permute.xlu0 %3350
        %3352 = vrot.lane.b32.xlu0 %v3269, 32
        %v3353 = vpop.permute.xlu0 %3352
        %3354 = vrot.lane.b32.xlu0 %v3270, 32
        %v3355 = vpop.permute.xlu0 %3354
        %3356 = vrot.lane.b32.xlu0 %v3271, 32
        %v3357 = vpop.permute.xlu0 %3356
        %3358 = vrot.lane.b32.xlu0 %v3272, 32
        %v3359 = vpop.permute.xlu0 %3358
        %3360 = vrot.lane.b32.xlu0 %v3273, 32
        %v3361 = vpop.permute.xlu0 %3360
        %3362 = vrot.lane.b32.xlu0 %v3274, 32
        %v3363 = vpop.permute.xlu0 %3362
        %3364 = vrot.lane.b32.xlu0 %v3275, 32
        %v3365 = vpop.permute.xlu0 %3364
        %3366 = vrot.lane.b32.xlu0 %v3276, 32
        %v3367 = vpop.permute.xlu0 %3366
        %3368 = vrot.lane.b32.xlu0 %v3277, 32
        %v3369 = vpop.permute.xlu0 %3368
        %3370 = vrot.lane.b32.xlu0 %v3278, 32
        %v3371 = vpop.permute.xlu0 %3370
        %3372 = vrot.lane.b32.xlu0 %v3279, 32
        %v3373 = vpop.permute.xlu0 %3372
        %3374 = vrot.lane.b32.xlu0 %v3280, 32
        %v3375 = vpop.permute.xlu0 %3374
        %3376 = vrot.lane.b32.xlu0 %v3281, 32
        %v3377 = vpop.permute.xlu0 %3376
        %v3410 = vmul.f32 %v2675, %v3315
        %v3411 = vmul.f32 %v2677, %v3317
        %v3412 = vmul.f32 %v2679, %v3319
        %v3413 = vmul.f32 %v2681, %v3321
        %v3414 = vmul.f32 %v2683, %v3323
        %v3415 = vmul.f32 %v2685, %v3325
        %v3416 = vmul.f32 %v2687, %v3327
        %v3417 = vmul.f32 %v2689, %v3329
        %v3418 = vmul.f32 %v2691, %v3331
        %v3419 = vmul.f32 %v2693, %v3333
        %v3420 = vmul.f32 %v2695, %v3335
        %v3421 = vmul.f32 %v2697, %v3337
        %v3422 = vmul.f32 %v2699, %v3339
        %v3423 = vmul.f32 %v2701, %v3341
        %v3424 = vmul.f32 %v2703, %v3343
        %v3425 = vmul.f32 %v2705, %v3345
        %v3426 = vmul.f32 %v2707, %v3347
        %v3427 = vmul.f32 %v2709, %v3349
        %v3428 = vmul.f32 %v2711, %v3351
        %v3429 = vmul.f32 %v2713, %v3353
        %v3430 = vmul.f32 %v2715, %v3355
        %v3431 = vmul.f32 %v2717, %v3357
        %v3432 = vmul.f32 %v2719, %v3359
        %v3433 = vmul.f32 %v2721, %v3361
        %v3434 = vmul.f32 %v2723, %v3363
        %v3435 = vmul.f32 %v2725, %v3365
        %v3436 = vmul.f32 %v2727, %v3367
        %v3437 = vmul.f32 %v2729, %v3369
        %v3438 = vmul.f32 %v2731, %v3371
        %v3439 = vmul.f32 %v2733, %v3373
        %v3440 = vmul.f32 %v2735, %v3375
        %v3441 = vmul.f32 %v2737, %v3377
        %3474 = vrot.lane.b32.xlu0 %v3218, 64
        %v3475 = vpop.permute.xlu0 %3474
        %3476 = vrot.lane.b32.xlu0 %v3219, 64
        %v3477 = vpop.permute.xlu0 %3476
        %3478 = vrot.lane.b32.xlu0 %v3220, 64
        %v3479 = vpop.permute.xlu0 %3478
        %3480 = vrot.lane.b32.xlu0 %v3221, 64
        %v3481 = vpop.permute.xlu0 %3480
        %3482 = vrot.lane.b32.xlu0 %v3222, 64
        %v3483 = vpop.permute.xlu0 %3482
        %3484 = vrot.lane.b32.xlu0 %v3223, 64
        %v3485 = vpop.permute.xlu0 %3484
        %3486 = vrot.lane.b32.xlu0 %v3224, 64
        %v3487 = vpop.permute.xlu0 %3486
        %3488 = vrot.lane.b32.xlu0 %v3225, 64
        %v3489 = vpop.permute.xlu0 %3488
        %3490 = vrot.lane.b32.xlu0 %v3226, 64
        %v3491 = vpop.permute.xlu0 %3490
        %3492 = vrot.lane.b32.xlu0 %v3227, 64
        %v3493 = vpop.permute.xlu0 %3492
        %3494 = vrot.lane.b32.xlu0 %v3228, 64
        %v3495 = vpop.permute.xlu0 %3494
        %3496 = vrot.lane.b32.xlu0 %v3229, 64
        %v3497 = vpop.permute.xlu0 %3496
        %3498 = vrot.lane.b32.xlu0 %v3230, 64
        %v3499 = vpop.permute.xlu0 %3498
        %3500 = vrot.lane.b32.xlu0 %v3231, 64
        %v3501 = vpop.permute.xlu0 %3500
        %3502 = vrot.lane.b32.xlu0 %v3232, 64
        %v3503 = vpop.permute.xlu0 %3502
        %3504 = vrot.lane.b32.xlu0 %v3233, 64
        %v3505 = vpop.permute.xlu0 %3504
        %3506 = vrot.lane.b32.xlu0 %v3234, 64
        %v3507 = vpop.permute.xlu0 %3506
        %3508 = vrot.lane.b32.xlu0 %v3235, 64
        %v3509 = vpop.permute.xlu0 %3508
        %3510 = vrot.lane.b32.xlu0 %v3236, 64
        %v3511 = vpop.permute.xlu0 %3510
        %3512 = vrot.lane.b32.xlu0 %v3237, 64
        %v3513 = vpop.permute.xlu0 %3512
        %3514 = vrot.lane.b32.xlu0 %v3238, 64
        %v3515 = vpop.permute.xlu0 %3514
        %3516 = vrot.lane.b32.xlu0 %v3239, 64
        %v3517 = vpop.permute.xlu0 %3516
        %3518 = vrot.lane.b32.xlu0 %v3240, 64
        %v3519 = vpop.permute.xlu0 %3518
        %3520 = vrot.lane.b32.xlu0 %v3241, 64
        %v3521 = vpop.permute.xlu0 %3520
        %3522 = vrot.lane.b32.xlu0 %v3242, 64
        %v3523 = vpop.permute.xlu0 %3522
        %3524 = vrot.lane.b32.xlu0 %v3243, 64
        %v3525 = vpop.permute.xlu0 %3524
        %3526 = vrot.lane.b32.xlu0 %v3244, 64
        %v3527 = vpop.permute.xlu0 %3526
        %3528 = vrot.lane.b32.xlu0 %v3245, 64
        %v3529 = vpop.permute.xlu0 %3528
        %3530 = vrot.lane.b32.xlu0 %v3246, 64
        %v3531 = vpop.permute.xlu0 %3530
        %3532 = vrot.lane.b32.xlu0 %v3247, 64
        %v3533 = vpop.permute.xlu0 %3532
        %3534 = vrot.lane.b32.xlu0 %v3248, 64
        %v3535 = vpop.permute.xlu0 %3534
        %3536 = vrot.lane.b32.xlu0 %v3249, 64
        %v3537 = vpop.permute.xlu0 %3536
        %3570 = vst.msk [vmem:[#allocation4] sm:$0xff] %vm740, %v3475
        %3571 = vst.msk [vmem:[#allocation4 + $0x8] sm:$0xff] %vm740, %v3477
        %3572 = vst.msk [vmem:[#allocation4 + $0x10] sm:$0xff] %vm740, %v3479
        %3573 = vst.msk [vmem:[#allocation4 + $0x18] sm:$0xff] %vm740, %v3481
        %3574 = vst.msk [vmem:[#allocation4 + $0x20] sm:$0xff] %vm740, %v3483
        %3575 = vst.msk [vmem:[#allocation4 + $0x28] sm:$0xff] %vm740, %v3485
        %3576 = vst.msk [vmem:[#allocation4 + $0x30] sm:$0xff] %vm740, %v3487
        %3577 = vst.msk [vmem:[#allocation4 + $0x38] sm:$0xff] %vm740, %v3489
        %3578 = vst.msk [vmem:[#allocation4 + $0x40] sm:$0xff] %vm740, %v3491
        %3579 = vst.msk [vmem:[#allocation4 + $0x48] sm:$0xff] %vm740, %v3493
        %3580 = vst.msk [vmem:[#allocation4 + $0x50] sm:$0xff] %vm740, %v3495
        %3581 = vst.msk [vmem:[#allocation4 + $0x58] sm:$0xff] %vm740, %v3497
        %3582 = vst.msk [vmem:[#allocation4 + $0x60] sm:$0xff] %vm740, %v3499
        %3583 = vst.msk [vmem:[#allocation4 + $0x68] sm:$0xff] %vm740, %v3501
        %3584 = vst.msk [vmem:[#allocation4 + $0x70] sm:$0xff] %vm740, %v3503
        %3585 = vst.msk [vmem:[#allocation4 + $0x78] sm:$0xff] %vm740, %v3505
        %3586 = vst.msk [vmem:[#allocation4 + $0x80] sm:$0xff] %vm740, %v3507
        %3587 = vst.msk [vmem:[#allocation4 + $0x88] sm:$0xff] %vm740, %v3509
        %3588 = vst.msk [vmem:[#allocation4 + $0x90] sm:$0xff] %vm740, %v3511
        %3589 = vst.msk [vmem:[#allocation4 + $0x98] sm:$0xff] %vm740, %v3513
        %3590 = vst.msk [vmem:[#allocation4 + $0xa0] sm:$0xff] %vm740, %v3515
        %3591 = vst.msk [vmem:[#allocation4 + $0xa8] sm:$0xff] %vm740, %v3517
        %3592 = vst.msk [vmem:[#allocation4 + $0xb0] sm:$0xff] %vm740, %v3519
        %3593 = vst.msk [vmem:[#allocation4 + $0xb8] sm:$0xff] %vm740, %v3521
        %3594 = vst.msk [vmem:[#allocation4 + $0xc0] sm:$0xff] %vm740, %v3523
        %3595 = vst.msk [vmem:[#allocation4 + $0xc8] sm:$0xff] %vm740, %v3525
        %3596 = vst.msk [vmem:[#allocation4 + $0xd0] sm:$0xff] %vm740, %v3527
        %3597 = vst.msk [vmem:[#allocation4 + $0xd8] sm:$0xff] %vm740, %v3529
        %3598 = vst.msk [vmem:[#allocation4 + $0xe0] sm:$0xff] %vm740, %v3531
        %3599 = vst.msk [vmem:[#allocation4 + $0xe8] sm:$0xff] %vm740, %v3533
        %3600 = vst.msk [vmem:[#allocation4 + $0xf0] sm:$0xff] %vm740, %v3535
        %3601 = vst.msk [vmem:[#allocation4 + $0xf8] sm:$0xff] %vm740, %v3537
        %3634 = vrot.lane.b32.xlu0 %v3410, 64
        %v3635 = vpop.permute.xlu0 %3634
        %3636 = vrot.lane.b32.xlu0 %v3411, 64
        %v3637 = vpop.permute.xlu0 %3636
        %3638 = vrot.lane.b32.xlu0 %v3412, 64
        %v3639 = vpop.permute.xlu0 %3638
        %3640 = vrot.lane.b32.xlu0 %v3413, 64
        %v3641 = vpop.permute.xlu0 %3640
        %3642 = vrot.lane.b32.xlu0 %v3414, 64
        %v3643 = vpop.permute.xlu0 %3642
        %3644 = vrot.lane.b32.xlu0 %v3415, 64
        %v3645 = vpop.permute.xlu0 %3644
        %3646 = vrot.lane.b32.xlu0 %v3416, 64
        %v3647 = vpop.permute.xlu0 %3646
        %3648 = vrot.lane.b32.xlu0 %v3417, 64
        %v3649 = vpop.permute.xlu0 %3648
        %3650 = vrot.lane.b32.xlu0 %v3418, 64
        %v3651 = vpop.permute.xlu0 %3650
        %3652 = vrot.lane.b32.xlu0 %v3419, 64
        %v3653 = vpop.permute.xlu0 %3652
        %3654 = vrot.lane.b32.xlu0 %v3420, 64
        %v3655 = vpop.permute.xlu0 %3654
        %3656 = vrot.lane.b32.xlu0 %v3421, 64
        %v3657 = vpop.permute.xlu0 %3656
        %3658 = vrot.lane.b32.xlu0 %v3422, 64
        %v3659 = vpop.permute.xlu0 %3658
        %3660 = vrot.lane.b32.xlu0 %v3423, 64
        %v3661 = vpop.permute.xlu0 %3660
        %3662 = vrot.lane.b32.xlu0 %v3424, 64
        %v3663 = vpop.permute.xlu0 %3662
        %3664 = vrot.lane.b32.xlu0 %v3425, 64
        %v3665 = vpop.permute.xlu0 %3664
        %3666 = vrot.lane.b32.xlu0 %v3426, 64
        %v3667 = vpop.permute.xlu0 %3666
        %3668 = vrot.lane.b32.xlu0 %v3427, 64
        %v3669 = vpop.permute.xlu0 %3668
        %3670 = vrot.lane.b32.xlu0 %v3428, 64
        %v3671 = vpop.permute.xlu0 %3670
        %3672 = vrot.lane.b32.xlu0 %v3429, 64
        %v3673 = vpop.permute.xlu0 %3672
        %3674 = vrot.lane.b32.xlu0 %v3430, 64
        %v3675 = vpop.permute.xlu0 %3674
        %3676 = vrot.lane.b32.xlu0 %v3431, 64
        %v3677 = vpop.permute.xlu0 %3676
        %3678 = vrot.lane.b32.xlu0 %v3432, 64
        %v3679 = vpop.permute.xlu0 %3678
        %3680 = vrot.lane.b32.xlu0 %v3433, 64
        %v3681 = vpop.permute.xlu0 %3680
        %3682 = vrot.lane.b32.xlu0 %v3434, 64
        %v3683 = vpop.permute.xlu0 %3682
        %3684 = vrot.lane.b32.xlu0 %v3435, 64
        %v3685 = vpop.permute.xlu0 %3684
        %3686 = vrot.lane.b32.xlu0 %v3436, 64
        %v3687 = vpop.permute.xlu0 %3686
        %3688 = vrot.lane.b32.xlu0 %v3437, 64
        %v3689 = vpop.permute.xlu0 %3688
        %3690 = vrot.lane.b32.xlu0 %v3438, 64
        %v3691 = vpop.permute.xlu0 %3690
        %3692 = vrot.lane.b32.xlu0 %v3439, 64
        %v3693 = vpop.permute.xlu0 %3692
        %3694 = vrot.lane.b32.xlu0 %v3440, 64
        %v3695 = vpop.permute.xlu0 %3694
        %3696 = vrot.lane.b32.xlu0 %v3441, 64
        %v3697 = vpop.permute.xlu0 %3696
        %vm3730 = vcmask 523520
        %3731 = vst.msk [vmem:[%s739 + $0x1] sm:$0xff] %vm3730, %v3635
        %3732 = vst.msk [vmem:[%s739 + $0x9] sm:$0xff] %vm3730, %v3637
        %3733 = vst.msk [vmem:[%s739 + $0x19] sm:$0xff] %vm3730, %v3639
        %3734 = vst.msk [vmem:[%s739 + $0x21] sm:$0xff] %vm3730, %v3641
        %3735 = vst.msk [vmem:[%s739 + $0x31] sm:$0xff] %vm3730, %v3643
        %3736 = vst.msk [vmem:[%s739 + $0x39] sm:$0xff] %vm3730, %v3645
        %3737 = vst.msk [vmem:[%s739 + $0x49] sm:$0xff] %vm3730, %v3647
        %3738 = vst.msk [vmem:[%s739 + $0x51] sm:$0xff] %vm3730, %v3649
        %3739 = vst.msk [vmem:[%s739 + $0x61] sm:$0xff] %vm3730, %v3651
        %3740 = vst.msk [vmem:[%s739 + $0x69] sm:$0xff] %vm3730, %v3653
        %3741 = vst.msk [vmem:[%s739 + $0x79] sm:$0xff] %vm3730, %v3655
        %3742 = vst.msk [vmem:[%s739 + $0x81] sm:$0xff] %vm3730, %v3657
        %3743 = vst.msk [vmem:[%s739 + $0x91] sm:$0xff] %vm3730, %v3659
        %3744 = vst.msk [vmem:[%s739 + $0x99] sm:$0xff] %vm3730, %v3661
        %3745 = vst.msk [vmem:[%s739 + $0xa9] sm:$0xff] %vm3730, %v3663
        %3746 = vst.msk [vmem:[%s739 + $0xb1] sm:$0xff] %vm3730, %v3665
        %3747 = vst.msk [vmem:[%s739 + $0xc1] sm:$0xff] %vm3730, %v3667
        %3748 = vst.msk [vmem:[%s739 + $0xc9] sm:$0xff] %vm3730, %v3669
        %3749 = vst.msk [vmem:[%s739 + $0xd9] sm:$0xff] %vm3730, %v3671
        %3750 = vst.msk [vmem:[%s739 + $0xe1] sm:$0xff] %vm3730, %v3673
        %3751 = vst.msk [vmem:[%s739 + $0xf1] sm:$0xff] %vm3730, %v3675
        %3752 = vst.msk [vmem:[%s739 + $0xf9] sm:$0xff] %vm3730, %v3677
        %3753 = vst.msk [vmem:[%s739 + $0x109] sm:$0xff] %vm3730, %v3679
        %3754 = vst.msk [vmem:[%s739 + $0x111] sm:$0xff] %vm3730, %v3681
        %3755 = vst.msk [vmem:[%s739 + $0x121] sm:$0xff] %vm3730, %v3683
        %3756 = vst.msk [vmem:[%s739 + $0x129] sm:$0xff] %vm3730, %v3685
        %3757 = vst.msk [vmem:[%s739 + $0x139] sm:$0xff] %vm3730, %v3687
        %3758 = vst.msk [vmem:[%s739 + $0x141] sm:$0xff] %vm3730, %v3689
        %3759 = vst.msk [vmem:[%s739 + $0x151] sm:$0xff] %vm3730, %v3691
        %3760 = vst.msk [vmem:[%s739 + $0x159] sm:$0xff] %vm3730, %v3693
        %3761 = vst.msk [vmem:[%s739 + $0x169] sm:$0xff] %vm3730, %v3695
        %3762 = vst.msk [vmem:[%s739 + $0x171] sm:$0xff] %vm3730, %v3697
        %v3763 = vpack.c.bf16 %v3411, %v3410
        %v3764 = vpack.c.bf16 %v3413, %v3412
        %v3765 = vpack.c.bf16 %v3415, %v3414
        %v3766 = vpack.c.bf16 %v3417, %v3416
        %v3767 = vpack.c.bf16 %v3419, %v3418
        %v3768 = vpack.c.bf16 %v3421, %v3420
        %v3769 = vpack.c.bf16 %v3423, %v3422
        %v3770 = vpack.c.bf16 %v3425, %v3424
        %v3771 = vpack.c.bf16 %v3427, %v3426
        %v3772 = vpack.c.bf16 %v3429, %v3428
        %v3773 = vpack.c.bf16 %v3431, %v3430
        %v3774 = vpack.c.bf16 %v3433, %v3432
        %v3775 = vpack.c.bf16 %v3435, %v3434
        %v3776 = vpack.c.bf16 %v3437, %v3436
        %v3777 = vpack.c.bf16 %v3439, %v3438
        %v3778 = vpack.c.bf16 %v3441, %v3440
        %v3779 = vld [vmem:[%s6] sm:$0xf]
        %v3780 = vld [vmem:[%s6 + $0x4] sm:$0xf]
        %v3781 = vld [vmem:[%s6 + $0x8] sm:$0xf]
        %v3782 = vld [vmem:[%s6 + $0xc] sm:$0xf]
        %v3783 = vld [vmem:[%s7] sm:$0x1]
        %v3785 = vlaneseq
        %v3786 = vshrl.u32 %v3785, 7
        %v3787 = vsub.s32 0, %v3786
        %v3788 = vrot.slane %v3783, %v3787
        %3806 = vrot.lane.b32.xlu0 %v3763, 32
        %v3807 = vpop.permute.xlu0 %3806
        %3808 = vrot.lane.b32.xlu0 %v3764, 32
        %v3809 = vpop.permute.xlu0 %3808
        %3810 = vrot.lane.b32.xlu0 %v3765, 32
        %v3811 = vpop.permute.xlu0 %3810
        %3812 = vrot.lane.b32.xlu0 %v3766, 32
        %v3813 = vpop.permute.xlu0 %3812
        %3814 = vrot.lane.b32.xlu0 %v3767, 32
        %v3815 = vpop.permute.xlu0 %3814
        %3816 = vrot.lane.b32.xlu0 %v3768, 32
        %v3817 = vpop.permute.xlu0 %3816
        %3818 = vrot.lane.b32.xlu0 %v3769, 32
        %v3819 = vpop.permute.xlu0 %3818
        %3820 = vrot.lane.b32.xlu0 %v3770, 32
        %v3821 = vpop.permute.xlu0 %3820
        %3822 = vrot.lane.b32.xlu0 %v3771, 32
        %v3823 = vpop.permute.xlu0 %3822
        %3824 = vrot.lane.b32.xlu0 %v3772, 32
        %v3825 = vpop.permute.xlu0 %3824
        %3826 = vrot.lane.b32.xlu0 %v3773, 32
        %v3827 = vpop.permute.xlu0 %3826
        %3828 = vrot.lane.b32.xlu0 %v3774, 32
        %v3829 = vpop.permute.xlu0 %3828
        %3830 = vrot.lane.b32.xlu0 %v3775, 32
        %v3831 = vpop.permute.xlu0 %3830
        %3832 = vrot.lane.b32.xlu0 %v3776, 32
        %v3833 = vpop.permute.xlu0 %3832
        %3834 = vrot.lane.b32.xlu0 %v3777, 32
        %v3835 = vpop.permute.xlu0 %3834
        %3836 = vrot.lane.b32.xlu0 %v3778, 32
        %v3837 = vpop.permute.xlu0 %3836
        %v3842 = vunpack.c.l.b16 %v3779
        %v3843 = vunpack.c.l.b16 %v3780
        %v3844 = vunpack.c.l.b16 %v3781
        %v3845 = vunpack.c.l.b16 %v3782
        %v3846 = vpack.c.b16 %v3843, %v3842
        %v3847 = vpack.c.b16 %v3845, %v3844
        %v3851 = vsel %vm740, %v3807, 0
        %v3854 = vsel %vm740, %v3809, 0
        %v3857 = vsel %vm740, %v3811, 0
        %v3860 = vsel %vm740, %v3813, 0
        %v3863 = vsel %vm740, %v3815, 0
        %v3866 = vsel %vm740, %v3817, 0
        %v3869 = vsel %vm740, %v3819, 0
        %v3872 = vsel %vm740, %v3821, 0
        %v3875 = vsel %vm740, %v3823, 0
        %v3878 = vsel %vm740, %v3825, 0
        %v3881 = vsel %vm740, %v3827, 0
        %v3884 = vsel %vm740, %v3829, 0
        %v3887 = vsel %vm740, %v3831, 0
        %v3890 = vsel %vm740, %v3833, 0
        %v3893 = vsel %vm740, %v3835, 0
        %v3896 = vsel %vm740, %v3837, 0
        %3898 = vmatprep.subr.bf16.mxu0 0
        %3899 = vmatpush1.bf16.msra.mxu0 %v3846
        %3900 = vmatprep.subr.bf16.mxu0 0
        %3901 = vmatpush1.bf16.msra.mxu0 %v3847
        %3902 = vmatprep.subr.bf16.mxu0 0
        %3903 = vmatpush1.bf16.msra.mxu0 0
        %3904 = vmatprep.subr.bf16.mxu0 0
        %3905 = vmatpush1.bf16.msra.mxu0 0
        %3906 = vmatprep.subr.bf16.mxu0 0
        %3907 = vmatpush1.bf16.msra.mxu0 0
        %3908 = vmatprep.subr.bf16.mxu0 0
        %3909 = vmatpush1.bf16.msra.mxu0 0
        %3910 = vmatprep.subr.bf16.mxu0 0
        %3911 = vmatpush1.bf16.msra.mxu0 0
        %3912 = vmatprep.subr.bf16.mxu0 0
        %3913 = vmatpush1.bf16.msra.mxu0 0
        %3914 = vmatprep.subr.bf16.mxu0 0
        %3915 = vmatpush1.bf16.msra.mxu0 0
        %3916 = vmatprep.subr.bf16.mxu0 0
        %3917 = vmatpush1.bf16.msra.mxu0 0
        %3918 = vmatprep.subr.bf16.mxu0 0
        %3919 = vmatpush1.bf16.msra.mxu0 0
        %3920 = vmatprep.subr.bf16.mxu0 0
        %3921 = vmatpush1.bf16.msra.mxu0 0
        %3922 = vmatprep.subr.bf16.mxu0 0
        %3923 = vmatpush1.bf16.msra.mxu0 0
        %3924 = vmatprep.subr.bf16.mxu0 0
        %3925 = vmatpush1.bf16.msra.mxu0 0
        %3926 = vmatprep.subr.bf16.mxu0 0
        %3927 = vmatpush1.bf16.msra.mxu0 0
        %3928 = vmatprep.subr.bf16.mxu0 0
        %3929 = vmatpush1.bf16.msra.mxu0 0
        %3930 = vmatprep.mubr.bf16.mxu0 0
        %3931 = vmatmul.mubr.bf16.gmra.mrb[0].mxu0 %v3851
        %v3932 = vpop.f32.mrb[0].mxu0
        %v3933 = vadd.f32 %v3788, %v3932
        %v3934 = vpop.f32.mrb[0].mxu0
        %v3935 = vpop.f32.mrb[0].mxu0
        %v3936 = vadd.f32 %v3788, %v3935
        %v3937 = vpop.f32.mrb[0].mxu0
        %3938 = vmatprep.mubr.bf16.mxu0 0
        %3939 = vmatmul.mubr.bf16.gmra.mrb[0].mxu0 %v3854
        %v3940 = vpop.f32.mrb[0].mxu0
        %v3941 = vadd.f32 %v3788, %v3940
        %v3942 = vpop.f32.mrb[0].mxu0
        %v3943 = vpop.f32.mrb[0].mxu0
        %v3944 = vadd.f32 %v3788, %v3943
        %v3945 = vpop.f32.mrb[0].mxu0
        %3946 = vmatprep.mubr.bf16.mxu0 0
        %3947 = vmatmul.mubr.bf16.gmra.mrb[0].mxu0 %v3857
        %v3948 = vpop.f32.mrb[0].mxu0
        %v3949 = vadd.f32 %v3788, %v3948
        %v3950 = vpop.f32.mrb[0].mxu0
        %v3951 = vpop.f32.mrb[0].mxu0
        %v3952 = vadd.f32 %v3788, %v3951
        %v3953 = vpop.f32.mrb[0].mxu0
        %3954 = vmatprep.mubr.bf16.mxu0 0
        %3955 = vmatmul.mubr.bf16.gmra.mrb[0].mxu0 %v3860
        %v3956 = vpop.f32.mrb[0].mxu0
        %v3957 = vadd.f32 %v3788, %v3956
        %v3958 = vpop.f32.mrb[0].mxu0
        %v3959 = vpop.f32.mrb[0].mxu0
        %v3960 = vadd.f32 %v3788, %v3959
        %v3961 = vpop.f32.mrb[0].mxu0
        %3962 = vmatprep.mubr.bf16.mxu0 0
        %3963 = vmatmul.mubr.bf16.gmra.mrb[0].mxu0 %v3863
        %v3964 = vpop.f32.mrb[0].mxu0
        %v3965 = vadd.f32 %v3788, %v3964
        %v3966 = vpop.f32.mrb[0].mxu0
        %v3967 = vpop.f32.mrb[0].mxu0
        %v3968 = vadd.f32 %v3788, %v3967
        %v3969 = vpop.f32.mrb[0].mxu0
        %3970 = vmatprep.mubr.bf16.mxu0 0
        %3971 = vmatmul.mubr.bf16.gmra.mrb[0].mxu0 %v3866
        %v3972 = vpop.f32.mrb[0].mxu0
        %v3973 = vadd.f32 %v3788, %v3972
        %v3974 = vpop.f32.mrb[0].mxu0
        %v3975 = vpop.f32.mrb[0].mxu0
        %v3976 = vadd.f32 %v3788, %v3975
        %v3977 = vpop.f32.mrb[0].mxu0
        %3978 = vmatprep.mubr.bf16.mxu0 0
        %3979 = vmatmul.mubr.bf16.gmra.mrb[0].mxu0 %v3869
        %v3980 = vpop.f32.mrb[0].mxu0
        %v3981 = vadd.f32 %v3788, %v3980
        %v3982 = vpop.f32.mrb[0].mxu0
        %v3983 = vpop.f32.mrb[0].mxu0
        %v3984 = vadd.f32 %v3788, %v3983
        %v3985 = vpop.f32.mrb[0].mxu0
        %3986 = vmatprep.mubr.bf16.mxu0 0
        %3987 = vmatmul.mubr.bf16.gmra.mrb[0].mxu0 %v3872
        %v3988 = vpop.f32.mrb[0].mxu0
        %v3989 = vadd.f32 %v3788, %v3988
        %v3990 = vpop.f32.mrb[0].mxu0
        %v3991 = vpop.f32.mrb[0].mxu0
        %v3992 = vadd.f32 %v3788, %v3991
        %v3993 = vpop.f32.mrb[0].mxu0
        %3994 = vmatprep.mubr.bf16.mxu0 0
        %3995 = vmatmul.mubr.bf16.gmra.mrb[0].mxu0 %v3875
        %v3996 = vpop.f32.mrb[0].mxu0
        %v3997 = vadd.f32 %v3788, %v3996
        %v3998 = vpop.f32.mrb[0].mxu0
        %v3999 = vpop.f32.mrb[0].mxu0
        %v4000 = vadd.f32 %v3788, %v3999
        %v4001 = vpop.f32.mrb[0].mxu0
        %4002 = vmatprep.mubr.bf16.mxu0 0
        %4003 = vmatmul.mubr.bf16.gmra.mrb[0].mxu0 %v3878
        %v4004 = vpop.f32.mrb[0].mxu0
        %v4005 = vadd.f32 %v3788, %v4004
        %v4006 = vpop.f32.mrb[0].mxu0
        %v4007 = vpop.f32.mrb[0].mxu0
        %v4008 = vadd.f32 %v3788, %v4007
        %v4009 = vpop.f32.mrb[0].mxu0
        %4010 = vmatprep.mubr.bf16.mxu0 0
        %4011 = vmatmul.mubr.bf16.gmra.mrb[0].mxu0 %v3881
        %v4012 = vpop.f32.mrb[0].mxu0
        %v4013 = vadd.f32 %v3788, %v4012
        %v4014 = vpop.f32.mrb[0].mxu0
        %v4015 = vpop.f32.mrb[0].mxu0
        %v4016 = vadd.f32 %v3788, %v4015
        %v4017 = vpop.f32.mrb[0].mxu0
        %4018 = vmatprep.mubr.bf16.mxu0 0
        %4019 = vmatmul.mubr.bf16.gmra.mrb[0].mxu0 %v3884
        %v4020 = vpop.f32.mrb[0].mxu0
        %v4021 = vadd.f32 %v3788, %v4020
        %v4022 = vpop.f32.mrb[0].mxu0
        %v4023 = vpop.f32.mrb[0].mxu0
        %v4024 = vadd.f32 %v3788, %v4023
        %v4025 = vpop.f32.mrb[0].mxu0
        %4026 = vmatprep.mubr.bf16.mxu0 0
        %4027 = vmatmul.mubr.bf16.gmra.mrb[0].mxu0 %v3887
        %v4028 = vpop.f32.mrb[0].mxu0
        %v4029 = vadd.f32 %v3788, %v4028
        %v4030 = vpop.f32.mrb[0].mxu0
        %v4031 = vpop.f32.mrb[0].mxu0
        %v4032 = vadd.f32 %v3788, %v4031
        %v4033 = vpop.f32.mrb[0].mxu0
        %4034 = vmatprep.mubr.bf16.mxu0 0
        %4035 = vmatmul.mubr.bf16.gmra.mrb[0].mxu0 %v3890
        %v4036 = vpop.f32.mrb[0].mxu0
        %v4037 = vadd.f32 %v3788, %v4036
        %v4038 = vpop.f32.mrb[0].mxu0
        %v4039 = vpop.f32.mrb[0].mxu0
        %v4040 = vadd.f32 %v3788, %v4039
        %v4041 = vpop.f32.mrb[0].mxu0
        %4042 = vmatprep.mubr.bf16.mxu0 0
        %4043 = vmatmul.mubr.bf16.gmra.mrb[0].mxu0 %v3893
        %v4044 = vpop.f32.mrb[0].mxu0
        %v4045 = vadd.f32 %v3788, %v4044
        %v4046 = vpop.f32.mrb[0].mxu0
        %v4047 = vpop.f32.mrb[0].mxu0
        %v4048 = vadd.f32 %v3788, %v4047
        %v4049 = vpop.f32.mrb[0].mxu0
        %4050 = vmatprep.mubr.bf16.mxu0 0
        %4051 = vmatmul.mubr.bf16.gmra.mrb[0].mxu0 %v3896
        %v4052 = vpop.f32.mrb[0].mxu0
        %v4053 = vadd.f32 %v3788, %v4052
        %v4054 = vpop.f32.mrb[0].mxu0
        %v4055 = vpop.f32.mrb[0].mxu0
        %v4056 = vadd.f32 %v3788, %v4055
        %v4057 = vpop.f32.mrb[0].mxu0
        %4058 = vdwg.mxu0
        %4059 = vxpose.xlu0.b32.start [1/16] %v3933, 128
        %4060 = vxpose.xlu0.b32.cont [2/16] %v3936, 128
        %4061 = vxpose.xlu0.b32.cont [3/16] %v3941, 128
        %4062 = vxpose.xlu0.b32.cont [4/16] %v3944, 128
        %4063 = vxpose.xlu0.b32.cont [5/16] %v3949, 128
        %4064 = vxpose.xlu0.b32.cont [6/16] %v3952, 128
        %4065 = vxpose.xlu0.b32.cont [7/16] %v3957, 128
        %4066 = vxpose.xlu0.b32.cont [8/16] %v3960, 128
        %4067 = vxpose.xlu0.b32.cont [9/16] %v3965, 128
        %4068 = vxpose.xlu0.b32.cont [10/16] %v3968, 128
        %4069 = vxpose.xlu0.b32.cont [11/16] %v3973, 128
        %4070 = vxpose.xlu0.b32.cont [12/16] %v3976, 128
        %4071 = vxpose.xlu0.b32.cont [13/16] %v3981, 128
        %4072 = vxpose.xlu0.b32.cont [14/16] %v3984, 128
        %4073 = vxpose.xlu0.b32.cont [15/16] %v3989, 128
        %4074 = vxpose.xlu0.b32.end [16/16] %v3992, 128
        %v4075 = vpop.trf.xlu0
        %v4076 = vpop.trf.xlu0
        %v4077 = vpop.trf.xlu0
        %v4078 = vpop.trf.xlu0
        %v4079 = vpop.trf.xlu0
        %v4080 = vpop.trf.xlu0
        %v4081 = vpop.trf.xlu0
        %v4082 = vpop.trf.xlu0
        %v4083 = vpop.trf.xlu0
        %v4084 = vpop.trf.xlu0
        %v4085 = vpop.trf.xlu0
        %v4086 = vpop.trf.xlu0
        %v4087 = vpop.trf.xlu0
        %v4088 = vpop.trf.xlu0
        %v4089 = vpop.trf.xlu0
        %v4090 = vpop.trf.xlu0
        %4091 = vxpose.xlu0.b32.start [1/16] %v3997, 128
        %4092 = vxpose.xlu0.b32.cont [2/16] %v4000, 128
        %4093 = vxpose.xlu0.b32.cont [3/16] %v4005, 128
        %4094 = vxpose.xlu0.b32.cont [4/16] %v4008, 128
        %4095 = vxpose.xlu0.b32.cont [5/16] %v4013, 128
        %4096 = vxpose.xlu0.b32.cont [6/16] %v4016, 128
        %4097 = vxpose.xlu0.b32.cont [7/16] %v4021, 128
        %4098 = vxpose.xlu0.b32.cont [8/16] %v4024, 128
        %4099 = vxpose.xlu0.b32.cont [9/16] %v4029, 128
        %4100 = vxpose.xlu0.b32.cont [10/16] %v4032, 128
        %4101 = vxpose.xlu0.b32.cont [11/16] %v4037, 128
        %4102 = vxpose.xlu0.b32.cont [12/16] %v4040, 128
        %4103 = vxpose.xlu0.b32.cont [13/16] %v4045, 128
        %4104 = vxpose.xlu0.b32.cont [14/16] %v4048, 128
        %4105 = vxpose.xlu0.b32.cont [15/16] %v4053, 128
        %4106 = vxpose.xlu0.b32.end [16/16] %v4056, 128
        %v4107 = vpop.trf.xlu0
        %v4108 = vpop.trf.xlu0
        %v4109 = vpop.trf.xlu0
        %v4110 = vpop.trf.xlu0
        %v4111 = vpop.trf.xlu0
        %v4112 = vpop.trf.xlu0
        %v4113 = vpop.trf.xlu0
        %v4114 = vpop.trf.xlu0
        %v4115 = vpop.trf.xlu0
        %v4116 = vpop.trf.xlu0
        %v4117 = vpop.trf.xlu0
        %v4118 = vpop.trf.xlu0
        %v4119 = vpop.trf.xlu0
        %v4120 = vpop.trf.xlu0
        %v4121 = vpop.trf.xlu0
        %v4122 = vpop.trf.xlu0
        %v4125 = vcombine.low %v4075, %v4107
        %4127 = vst [vmem:[%s329] sm:$0xff] %v4125
        %4128 = vst [vmem:[#allocation5] sm:$0xff] %v4125
        %s4129 = sand.u32 %s203, 1
        %s4130 = scalar_lea.sflag [#allocation10], %s4129
        %s4131 = sand.u32 %s203, 1
        %s4132 = smul.addr %s4131, 8
        %s4133 = scalar_lea.vmem [#allocation13], %s4132
        // Predicated region
        $region61: #{tpu_custom_call.1} parent=47 // pred_check
          %p4134 = pneg %p213
        $region62: #{tpu_custom_call.1} parent=47 // pred_check_branch
          %4136 = sbr.rel (%p4134) target = $region64
        $region63: #{tpu_custom_call.1} parent=47 // pred_region
          %s4138 = ssub.s32 128, 128
          %4139 = vsyncadd %s4130, %s4138
          %s4140 = smul.addr %s32, 2
          %s4141 = smul.addr %s31, 16
          %s4142 = sadd.s32 %s4140, %s4141
          %s4143 = smul.addr %s4142, 64
          %s4144 = scalar_lea.hbm %s8, %s4143
          %s4146 = sshll.u32 %s4133, 4
          %s4147 = int_to_ptr.vmem [resolvable:$true] %s4146
          %4149 = dma.vmem_to_hbm [thread:$0]  %s4147, 128, %s4144, %s4130
        $region64: #{tpu_custom_call.1} parent=47 // pred_fallthru
          _
      $region48: #{tpu_custom_call.1} parent=5 // pred_fallthru
        _
      %p4150 = scmp.le.s32.totalorder 2, %s22
      // Predicated region
      $region65: #{tpu_custom_call.1} parent=5 // pred_check
        %p4151 = pneg %p4150
      $region66: #{tpu_custom_call.1} parent=5 // pred_check_branch
        %4153 = sbr.rel (%p4151) target = $region68
      $region67: #{tpu_custom_call.1} parent=5 // pred_region
        %s4154 = ssub.s32 %s22, 2
        // Predicated region
        $region69: #{tpu_custom_call.1} parent=67 // pred_check
          %p4155 = pneg %p219
        $region70: #{tpu_custom_call.1} parent=67 // pred_check_branch
          %4157 = sbr.rel (%p4155) target = $region72
        $region71: #{tpu_custom_call.1} parent=67 // pred_region
          %s4158 = sand.u32 %s204, 1
          %s4159 = scalar_lea.sflag [#allocation10], %s4158
          %s4160 = sand.u32 %s204, 1
          %s4161 = smul.addr %s4160, 8
          %s4162 = scalar_lea.vmem [#allocation13], %s4161
          %4163 = dma.done %s4159, 128
        $region72: #{tpu_custom_call.1} parent=67 // pred_fallthru
          _
      $region68: #{tpu_custom_call.1} parent=5 // pred_fallthru
        _
    $region6: #{tpu_custom_call.1} parent=1 // loop_footer
      %s26 = sadd.s32 1, %s22
    $region7: #{tpu_custom_call.1} parent=1 // loop_footer_branch
      %21 = sbr.rel target = $region3
    $region8: #{tpu_custom_call.1} parent=1 // loop_exit
      _
    %4164 = vsyncpa [#allocation9], 1
    %s4165 = scalar_lea.sflag [#allocation9], 1
    %4166 = vsyncpa %s4165, 1
    %4167 = vsyncpa [#allocation12], 1
    %4168 = vsyncpa [#allocation10], 1
    %s4169 = scalar_lea.sflag [#allocation10], 1
    %4170 = vsyncpa %s4169, 1

</llo_original>
